<compile_context>
chip_gen: v6e
topology: v6e:2x2x1
jax: 0.10.0
libtpu: 0.0.40
codegen_flags: <defaults>
</compile_context>

<pallas_src>
import functools

import jax
import jax.numpy as jnp
from jax import lax
from jax.experimental import pallas as pl
from jax.experimental.pallas import tpu as pltpu


def _layer_norm(x, g, b, eps=1e-5):
    m = jnp.mean(x, axis=-1, keepdims=True)
    v = jnp.mean((x - m) ** 2, axis=-1, keepdims=True)
    return (x - m) * lax.rsqrt(v + eps) * g + b


def _proj(x, w_ref, b_ref):
    # bf16 operands on the MXU, f32 accumulation, f32 bias add.
    return jnp.dot(x.astype(jnp.bfloat16), w_ref[...],
                   preferred_element_type=jnp.float32) + b_ref[...]


def hgakt_kernel(Bt, L, D, H,
                 x_ref, mask_ref,
                 wq_ref, bq_ref, wqi_ref, bqi_ref, wkv_ref, bkv_ref,
                 wo_ref, bo_ref,
                 g1_ref, be1_ref,
                 w0_ref, b0_ref, w1_ref, b1_ref,
                 g2_ref, be2_ref,
                 wout_ref, bout_ref,
                 o_ref):
    dh = D // H
    M = Bt * L

    x = x_ref[...]                            # (Bt, 2, L, D) bf16
    xvk = x[:, 0].reshape(M, D)               # embd_qa + pos
    xq = x[:, 1].reshape(M, D)                # embd_q

    # query path: linear[2] output kept (needed for the residual), then in-proj
    q_ex = _proj(xq, wq_ref, bq_ref)                          # (M, D)  f32
    q2 = _proj(q_ex, wqi_ref, bqi_ref).astype(jnp.bfloat16)   # (M, D)  (scale folded)
    # k/v path: pre-linears folded into the in-projection, one (M,D)@(D,2D) matmul
    kv = _proj(xvk, wkv_ref, bkv_ref).astype(jnp.bfloat16)    # (M, 2D)

    q3 = q2.reshape(Bt, L, D)
    kv3 = kv.reshape(Bt, L, 2 * D)
    neg_mask = mask_ref[...].astype(jnp.float32)[None]        # (1, L, L)

    # per-head scaled dot-product attention; softmax statistics in f32
    # TODO(synk): query-tile (flash-style) for long L; align dh to 128 to avoid
    #             lane-sliced activations here.
    heads = []
    for h in range(H):
        sl = slice(h * dh, (h + 1) * dh)
        qh = q3[:, :, sl]
        kh = kv3[:, :, sl]
        vh = kv3[:, :, D + h * dh:D + (h + 1) * dh]
        s = jnp.einsum('bqd,bkd->bqk', qh, kh,
                       preferred_element_type=jnp.float32) + neg_mask
        s = s - jnp.max(s, axis=-1, keepdims=True)
        p = jnp.exp(s)
        p = p * pl.reciprocal(jnp.sum(p, axis=-1, keepdims=True), approx=True)
        heads.append(jnp.einsum('bqk,bkd->bqd', p.astype(jnp.bfloat16), vh,
                                preferred_element_type=jnp.float32)
                     .astype(jnp.bfloat16))

    # fused out-projection: one (M, D) @ (D, D) instead of H skinny matmuls
    attn_cat = jnp.concatenate(heads, axis=-1).reshape(M, D)   # bf16
    attn_out = jnp.dot(attn_cat, wo_ref[...],
                       preferred_element_type=jnp.float32) + bo_ref[...]

    # residual + layernorm1
    x1 = _layer_norm(q_ex + attn_out, g1_ref[...], be1_ref[...])

    # FFN (dropout = identity in eval)
    f = jnp.maximum(_proj(x1, w0_ref, b0_ref), 0.0)
    f = _proj(f, w1_ref, b1_ref)

    # residual + layernorm2
    x2 = _layer_norm(f + x1, g2_ref[...], be2_ref[...])

    # lane-dense logits: (1, D) contracted with (M, D) -> (1, M) row per batch block
    logit = lax.dot_general(wout_ref[...], x2.astype(jnp.bfloat16),
                            (((1,), (1,)), ((), ())),
                            preferred_element_type=jnp.float32) + bout_ref[...]
    o_ref[...] = jax.nn.sigmoid(logit)                          # (1, M)


def init_params(key, q_num, seq_len, D):
    keys = jax.random.split(key, 24)

    def w(i, shape, s=0.1):
        return jax.random.normal(keys[i], shape, jnp.float32) * s

    return dict(
        embd_qa=w(0, (2 * q_num + 1, D)),
        embd_q=w(1, (q_num + 1, D)),
        embd_pos=w(2, (seq_len, D)),
        # nn.Linear x3 (weights stored pre-transposed as (in, out))
        wv=w(3, (D, D)), bv=w(4, (1, D)),
        wk=w(5, (D, D)), bk=w(6, (1, D)),
        wq=w(7, (D, D)), bq=w(8, (1, D)),
        # MultiheadAttention in_proj (split into q/k/v) + out_proj
        wqi=w(9, (D, D)), bqi=w(10, (1, D)),
        wki=w(11, (D, D)), bki=w(12, (1, D)),
        wvi=w(13, (D, D)), bvi=w(14, (1, D)),
        wo=w(15, (D, D)), bo=w(16, (1, D)),
        # layer norms
        g1=jnp.ones((1, D), jnp.float32), be1=jnp.zeros((1, D), jnp.float32),
        g2=jnp.ones((1, D), jnp.float32), be2=jnp.zeros((1, D), jnp.float32),
        # FFN
        w0=w(17, (D, D)), b0=w(18, (1, D)),
        w1=w(19, (D, D)), b1=w(20, (1, D)),
        # output head
        wout=w(21, (D, 1)), bout=w(22, (1, 1)),
    )


def _pick_batch_tile(B, L, max_rows=512):
    """Largest divisor of B with Bt*L <= max_rows (amortize grid-step overhead,
    fill MXU rows) while keeping per-step VMEM bounded."""
    bt = 1
    for cand in range(2, B + 1):
        if B % cand == 0 and cand * L <= max_rows:
            bt = cand
    return bt


def _vmem_limit_bytes(Bt, L, D, weight_bufs):
    """Derive the scoped-VMEM limit from the actual tile sizes (per-generation cap)."""
    M = Bt * L
    bf, f4 = 2, 4
    io = 2 * (Bt * 2 * L * D * bf) + 2 * (M * f4)                 # double-buffered I/O blocks
    weights = weight_bufs * ((7 * D * D + D) * bf + (16 * D + 2) * f4 + L * L * bf)
    inter = 12 * M * D * f4 + 3 * Bt * L * L * f4                 # rough live-intermediate bound
    need = int(1.5 * (io + weights + inter)) + (4 << 20)
    try:
        cap = pltpu.get_tpu_info().vmem_capacity_bytes            # 128 MiB v5e/v6e, 64 MiB v7x
    except Exception:
        cap = 64 << 20
    return min(max(need, 32 << 20), max(cap - (8 << 20), 32 << 20))


def hgakt_forward(params, interaction, question, answers, *, seq_len, embed_dim, heads):
    del answers  # unused by forward_original
    B, L = interaction.shape
    D, H = embed_dim, heads
    assert L == seq_len and D % H == 0
    scale = 1.0 / float(D // H) ** 0.5
    hi = lax.Precision.HIGHEST

    interaction = jnp.where(interaction < 0, jnp.zeros_like(interaction), interaction)
    question = jnp.where(question < 0, jnp.zeros_like(question), question)

    # embedding gathers stay in plain JAX glue; xvk/xq merged into one stacked input
    pos = params["embd_pos"][jnp.arange(seq_len)]                          # (L, D)
    x_vk = jnp.take(params["embd_qa"], interaction, axis=0) + pos[None]    # (B, L, D)
    x_q = jnp.take(params["embd_q"], question, axis=0)                     # (B, L, D)
    x = jnp.stack([x_vk, x_q], axis=1).astype(jnp.bfloat16)                # (B, 2, L, D)

    # fold linear[1]/linear[0] into the MHA k/v in-projections (f32 algebra, then bf16)
    wk_f = jnp.dot(params["wk"], params["wki"], precision=hi)
    bk_f = jnp.dot(params["bk"], params["wki"], precision=hi) + params["bki"]
    wv_f = jnp.dot(params["wv"], params["wvi"], precision=hi)
    bv_f = jnp.dot(params["bv"], params["wvi"], precision=hi) + params["bvi"]
    wkv = jnp.concatenate([wk_f, wv_f], axis=1)                            # (D, 2D)
    bkv = jnp.concatenate([bk_f, bv_f], axis=1)                            # (1, 2D)

    # hoisted additive causal mask (triu, k=1): key index > query index -> -1e9
    row = lax.broadcasted_iota(jnp.int32, (L, L), 0)
    col = lax.broadcasted_iota(jnp.int32, (L, L), 1)
    neg_mask = jnp.where(col > row, -1e9, 0.0).astype(jnp.bfloat16)        # (L, L)

    bf16 = lambda a: a.astype(jnp.bfloat16)
    f32 = lambda a: a.astype(jnp.float32)

    weight_args = [
        bf16(params["wq"]), f32(params["bq"]),
        # fold the 1/sqrt(head_dim) attention scale into the q in-projection
        bf16(params["wqi"] * scale), f32(params["bqi"] * scale),
        bf16(wkv), f32(bkv),
        bf16(params["wo"]), f32(params["bo"]),
        f32(params["g1"]), f32(params["be1"]),
        bf16(params["w0"]), f32(params["b0"]),
        bf16(params["w1"]), f32(params["b1"]),
        f32(params["g2"]), f32(params["be2"]),
        bf16(params["wout"].reshape(1, D)), f32(params["bout"]),
    ]

    Bt = _pick_batch_tile(B, L)
    nb = B // Bt
    M = Bt * L

    kernel = functools.partial(hgakt_kernel, Bt, L, D, H)
    act_spec = pl.BlockSpec((Bt, 2, L, D), lambda b: (b, 0, 0, 0))
    out_spec = pl.BlockSpec((None, 1, M), lambda b: (b, 0, 0))
    out_shape = jax.ShapeDtypeStruct((nb, 1, M), jnp.float32)

    out, last_err = None, None
    for single_buffer in (True, False):
        def const_spec(a, _sb=single_buffer):
            nd = a.ndim
            idx = lambda b, _n=nd: (0,) * _n
            if _sb:  # resident block: no need to double-buffer (halves weight VMEM)
                return pl.BlockSpec(a.shape, idx, pipeline_mode=pl.Buffered(1))
            return pl.BlockSpec(a.shape, idx)

        try:
            const_specs = [const_spec(neg_mask)] + [const_spec(a) for a in weight_args]
            out = pl.pallas_call(
                kernel,
                grid=(nb,),
                out_shape=out_shape,
                in_specs=[act_spec] + const_specs,
                out_specs=out_spec,
                compiler_params=pltpu.CompilerParams(
                    dimension_semantics=("parallel",),
                    vmem_limit_bytes=_vmem_limit_bytes(
                        Bt, L, D, 1 if single_buffer else 2)),
            )(x, neg_mask, *weight_args)
            jax.block_until_ready(out)
            break
        except Exception as e:  # fallback if Buffered(1) is unsupported by this JAX build
            last_err = e
            out = None
    if out is None:
        raise last_err

    out = out.reshape(B, L)      # sigmoid(...).sum(dim=-1) with last dim == 1
    return out[:, :-1]           # (B, L-1)


if __name__ == "__main__":
    B, L, D, H = 2, 8, 32, 4
    q_num = 10

    key = jax.random.PRNGKey(0)
    kp, ki, kq, ka = jax.random.split(key, 4)

    params = init_params(kp, q_num, L, D)
    interaction = jax.random.randint(ki, (B, L), -1, 2 * q_num + 1, dtype=jnp.int32)
    question = jax.random.randint(kq, (B, L), -1, q_num + 1, dtype=jnp.int32)
    answers = jax.random.randint(ka, (B, L), 0, 2, dtype=jnp.int32)

    out = hgakt_forward(params, interaction, question, answers,
                        seq_len=L, embed_dim=D, heads=H)
    jax.block_until_ready(out)
    assert out.shape == (B, L - 1)
    print("KERNEL_OK")
</pallas_src>

<mosaic_0001>
module attributes {stable_mosaic.version = 11 : i64} {
  func.func @hgakt_kernel(%arg0: i32, %arg1: memref<2x2x8x32xbf16, #tpu.memory_space<vmem>>, %arg2: memref<8x8xbf16, #tpu.memory_space<vmem>>, %arg3: memref<32x32xbf16, #tpu.memory_space<vmem>>, %arg4: memref<1x32xf32, #tpu.memory_space<vmem>>, %arg5: memref<32x32xbf16, #tpu.memory_space<vmem>>, %arg6: memref<1x32xf32, #tpu.memory_space<vmem>>, %arg7: memref<32x64xbf16, #tpu.memory_space<vmem>>, %arg8: memref<1x64xf32, #tpu.memory_space<vmem>>, %arg9: memref<32x32xbf16, #tpu.memory_space<vmem>>, %arg10: memref<1x32xf32, #tpu.memory_space<vmem>>, %arg11: memref<1x32xf32, #tpu.memory_space<vmem>>, %arg12: memref<1x32xf32, #tpu.memory_space<vmem>>, %arg13: memref<32x32xbf16, #tpu.memory_space<vmem>>, %arg14: memref<1x32xf32, #tpu.memory_space<vmem>>, %arg15: memref<32x32xbf16, #tpu.memory_space<vmem>>, %arg16: memref<1x32xf32, #tpu.memory_space<vmem>>, %arg17: memref<1x32xf32, #tpu.memory_space<vmem>>, %arg18: memref<1x32xf32, #tpu.memory_space<vmem>>, %arg19: memref<1x32xbf16, #tpu.memory_space<vmem>>, %arg20: memref<1x1xf32, #tpu.memory_space<vmem>>, %arg21: memref<1x1x16xf32, #tpu.memory_space<vmem>>) attributes {dimension_semantics = [#tpu.dimension_semantics<parallel>], iteration_bounds = array<i64: 1>, scalar_prefetch = 0 : i64, scratch_operands = 0 : i64, tpu.core_type = #tpu.core_type<tc>, window_params = [{transform_indices = @transform_0, window_bounds = array<i64: 2, 2, 8, 32>}, {pipeline_mode = #tpu.pipeline_mode<synchronous>, transform_indices = @transform_1, window_bounds = array<i64: 8, 8>}, {pipeline_mode = #tpu.pipeline_mode<synchronous>, transform_indices = @transform_2, window_bounds = array<i64: 32, 32>}, {pipeline_mode = #tpu.pipeline_mode<synchronous>, transform_indices = @transform_3, window_bounds = array<i64: 1, 32>}, {pipeline_mode = #tpu.pipeline_mode<synchronous>, transform_indices = @transform_4, window_bounds = array<i64: 32, 32>}, {pipeline_mode = #tpu.pipeline_mode<synchronous>, transform_indices = @transform_5, window_bounds = array<i64: 1, 32>}, {pipeline_mode = #tpu.pipeline_mode<synchronous>, transform_indices = @transform_6, window_bounds = array<i64: 32, 64>}, {pipeline_mode = #tpu.pipeline_mode<synchronous>, transform_indices = @transform_7, window_bounds = array<i64: 1, 64>}, {pipeline_mode = #tpu.pipeline_mode<synchronous>, transform_indices = @transform_8, window_bounds = array<i64: 32, 32>}, {pipeline_mode = #tpu.pipeline_mode<synchronous>, transform_indices = @transform_9, window_bounds = array<i64: 1, 32>}, {pipeline_mode = #tpu.pipeline_mode<synchronous>, transform_indices = @transform_10, window_bounds = array<i64: 1, 32>}, {pipeline_mode = #tpu.pipeline_mode<synchronous>, transform_indices = @transform_11, window_bounds = array<i64: 1, 32>}, {pipeline_mode = #tpu.pipeline_mode<synchronous>, transform_indices = @transform_12, window_bounds = array<i64: 32, 32>}, {pipeline_mode = #tpu.pipeline_mode<synchronous>, transform_indices = @transform_13, window_bounds = array<i64: 1, 32>}, {pipeline_mode = #tpu.pipeline_mode<synchronous>, transform_indices = @transform_14, window_bounds = array<i64: 32, 32>}, {pipeline_mode = #tpu.pipeline_mode<synchronous>, transform_indices = @transform_15, window_bounds = array<i64: 1, 32>}, {pipeline_mode = #tpu.pipeline_mode<synchronous>, transform_indices = @transform_16, window_bounds = array<i64: 1, 32>}, {pipeline_mode = #tpu.pipeline_mode<synchronous>, transform_indices = @transform_17, window_bounds = array<i64: 1, 32>}, {pipeline_mode = #tpu.pipeline_mode<synchronous>, transform_indices = @transform_18, window_bounds = array<i64: 1, 32>}, {pipeline_mode = #tpu.pipeline_mode<synchronous>, transform_indices = @transform_19, window_bounds = array<i64: 1, 1>}, {transform_indices = @transform_20, window_bounds = array<i64: 1, 1, 16>}]} {
    %c0 = arith.constant 0 : index
    %c0_0 = arith.constant 0 : index
    %c0_1 = arith.constant 0 : index
    %c0_2 = arith.constant 0 : index
    %0 = vector.load %arg1[%c0, %c0_0, %c0_1, %c0_2] : memref<2x2x8x32xbf16, #tpu.memory_space<vmem>>, vector<2x2x8x32xbf16>
    %1 = vector.extract_strided_slice %0 {offsets = [0, 0, 0, 0], sizes = [2, 1, 8, 32], strides = [1, 1, 1, 1]} : vector<2x2x8x32xbf16> to vector<2x1x8x32xbf16>
    %2 = vector.shape_cast %1 : vector<2x1x8x32xbf16> to vector<2x8x32xbf16>
    %3 = vector.shape_cast %2 : vector<2x8x32xbf16> to vector<16x32xbf16>
    %4 = vector.extract_strided_slice %0 {offsets = [0, 1, 0, 0], sizes = [2, 1, 8, 32], strides = [1, 1, 1, 1]} : vector<2x2x8x32xbf16> to vector<2x1x8x32xbf16>
    %5 = vector.shape_cast %4 : vector<2x1x8x32xbf16> to vector<2x8x32xbf16>
    %6 = vector.shape_cast %5 : vector<2x8x32xbf16> to vector<16x32xbf16>
    %c0_3 = arith.constant 0 : index
    %c0_4 = arith.constant 0 : index
    %7 = vector.load %arg3[%c0_3, %c0_4] : memref<32x32xbf16, #tpu.memory_space<vmem>>, vector<32x32xbf16>
    %cst = arith.constant dense<0.000000e+00> : vector<16x32xf32>
    %8 = tpu.matmul %6, %7, %cst {dimension_numbers = #tpu.dot_dimension_numbers<[1], [0], [0], [1], [0, 0, 1, 1], [], []>} : vector<16x32xbf16>, vector<32x32xbf16>, vector<16x32xf32> -> vector<16x32xf32>
    %c0_5 = arith.constant 0 : index
    %c0_6 = arith.constant 0 : index
    %9 = vector.load %arg4[%c0_5, %c0_6] : memref<1x32xf32, #tpu.memory_space<vmem>>, vector<1x32xf32>
    %10 = vector.broadcast %9 : vector<1x32xf32> to vector<16x32xf32>
    %11 = arith.addf %8, %10 : vector<16x32xf32>
    %12 = arith.truncf %11 : vector<16x32xf32> to vector<16x32xbf16>
    %c0_7 = arith.constant 0 : index
    %c0_8 = arith.constant 0 : index
    %13 = vector.load %arg5[%c0_7, %c0_8] : memref<32x32xbf16, #tpu.memory_space<vmem>>, vector<32x32xbf16>
    %cst_9 = arith.constant dense<0.000000e+00> : vector<16x32xf32>
    %14 = tpu.matmul %12, %13, %cst_9 {dimension_numbers = #tpu.dot_dimension_numbers<[1], [0], [0], [1], [0, 0, 1, 1], [], []>} : vector<16x32xbf16>, vector<32x32xbf16>, vector<16x32xf32> -> vector<16x32xf32>
    %c0_10 = arith.constant 0 : index
    %c0_11 = arith.constant 0 : index
    %15 = vector.load %arg6[%c0_10, %c0_11] : memref<1x32xf32, #tpu.memory_space<vmem>>, vector<1x32xf32>
    %16 = vector.broadcast %15 : vector<1x32xf32> to vector<16x32xf32>
    %17 = arith.addf %14, %16 : vector<16x32xf32>
    %18 = arith.truncf %17 : vector<16x32xf32> to vector<16x32xbf16>
    %c0_12 = arith.constant 0 : index
    %c0_13 = arith.constant 0 : index
    %19 = vector.load %arg7[%c0_12, %c0_13] : memref<32x64xbf16, #tpu.memory_space<vmem>>, vector<32x64xbf16>
    %cst_14 = arith.constant dense<0.000000e+00> : vector<16x64xf32>
    %20 = tpu.matmul %3, %19, %cst_14 {dimension_numbers = #tpu.dot_dimension_numbers<[1], [0], [0], [1], [0, 0, 1, 1], [], []>} : vector<16x32xbf16>, vector<32x64xbf16>, vector<16x64xf32> -> vector<16x64xf32>
    %c0_15 = arith.constant 0 : index
    %c0_16 = arith.constant 0 : index
    %21 = vector.load %arg8[%c0_15, %c0_16] : memref<1x64xf32, #tpu.memory_space<vmem>>, vector<1x64xf32>
    %22 = vector.broadcast %21 : vector<1x64xf32> to vector<16x64xf32>
    %23 = arith.addf %20, %22 : vector<16x64xf32>
    %24 = arith.truncf %23 : vector<16x64xf32> to vector<16x64xbf16>
    %25 = vector.shape_cast %18 : vector<16x32xbf16> to vector<2x8x32xbf16>
    %26 = vector.shape_cast %24 : vector<16x64xbf16> to vector<2x8x64xbf16>
    %c0_17 = arith.constant 0 : index
    %c0_18 = arith.constant 0 : index
    %27 = vector.load %arg2[%c0_17, %c0_18] : memref<8x8xbf16, #tpu.memory_space<vmem>>, vector<8x8xbf16>
    %28 = arith.extf %27 : vector<8x8xbf16> to vector<8x8xf32>
    %29 = vector.shape_cast %28 : vector<8x8xf32> to vector<1x8x8xf32>
    %30 = vector.extract_strided_slice %25 {offsets = [0, 0, 0], sizes = [2, 8, 8], strides = [1, 1, 1]} : vector<2x8x32xbf16> to vector<2x8x8xbf16>
    %31 = vector.extract_strided_slice %26 {offsets = [0, 0, 0], sizes = [2, 8, 8], strides = [1, 1, 1]} : vector<2x8x64xbf16> to vector<2x8x8xbf16>
    %32 = vector.extract_strided_slice %26 {offsets = [0, 0, 32], sizes = [2, 8, 8], strides = [1, 1, 1]} : vector<2x8x64xbf16> to vector<2x8x8xbf16>
    "tpu.trace_start"() <{level = 10 : i32, message = "bqd,bkd->bqk"}> : () -> ()
    %cst_19 = arith.constant dense<0.000000e+00> : vector<2x8x8xf32>
    %33 = tpu.matmul %30, %31, %cst_19 {dimension_numbers = #tpu.dot_dimension_numbers<[2], [2], [1], [1], [0, 0, 0, 1, 1, 1], [0], [0]>} : vector<2x8x8xbf16>, vector<2x8x8xbf16>, vector<2x8x8xf32> -> vector<2x8x8xf32>
    "tpu.trace_stop"() : () -> ()
    %34 = vector.broadcast %29 : vector<1x8x8xf32> to vector<2x8x8xf32>
    %35 = arith.addf %33, %34 : vector<2x8x8xf32>
    %cst_20 = arith.constant dense<0xFF800000> : vector<2x8xf32>
    %36 = vector.multi_reduction <maximumf>, %35, %cst_20 [2] : vector<2x8x8xf32> to vector<2x8xf32>
    %37 = vector.shape_cast %36 : vector<2x8xf32> to vector<2x8x1xf32>
    %38 = vector.broadcast %37 : vector<2x8x1xf32> to vector<2x8x8xf32>
    %39 = arith.subf %35, %38 : vector<2x8x8xf32>
    %40 = math.exp %39 : vector<2x8x8xf32>
    %cst_21 = arith.constant dense<0.000000e+00> : vector<2x8xf32>
    %41 = vector.multi_reduction <add>, %40, %cst_21 [2] : vector<2x8x8xf32> to vector<2x8xf32>
    %42 = vector.shape_cast %41 : vector<2x8xf32> to vector<2x8x1xf32>
    %43 = tpu.reciprocal %42 {approx = true} : vector<2x8x1xf32> -> vector<2x8x1xf32>
    %44 = vector.broadcast %43 : vector<2x8x1xf32> to vector<2x8x8xf32>
    %45 = arith.mulf %40, %44 : vector<2x8x8xf32>
    %46 = arith.truncf %45 : vector<2x8x8xf32> to vector<2x8x8xbf16>
    "tpu.trace_start"() <{level = 10 : i32, message = "bqk,bkd->bqd"}> : () -> ()
    %cst_22 = arith.constant dense<0.000000e+00> : vector<2x8x8xf32>
    %47 = tpu.matmul %46, %32, %cst_22 {dimension_numbers = #tpu.dot_dimension_numbers<[2], [1], [1], [2], [0, 0, 0, 1, 1, 2], [0], [0]>} : vector<2x8x8xbf16>, vector<2x8x8xbf16>, vector<2x8x8xf32> -> vector<2x8x8xf32>
    "tpu.trace_stop"() : () -> ()
    %48 = arith.truncf %47 : vector<2x8x8xf32> to vector<2x8x8xbf16>
    %49 = vector.extract_strided_slice %25 {offsets = [0, 0, 8], sizes = [2, 8, 8], strides = [1, 1, 1]} : vector<2x8x32xbf16> to vector<2x8x8xbf16>
    %50 = vector.extract_strided_slice %26 {offsets = [0, 0, 8], sizes = [2, 8, 8], strides = [1, 1, 1]} : vector<2x8x64xbf16> to vector<2x8x8xbf16>
    %51 = vector.extract_strided_slice %26 {offsets = [0, 0, 40], sizes = [2, 8, 8], strides = [1, 1, 1]} : vector<2x8x64xbf16> to vector<2x8x8xbf16>
    "tpu.trace_start"() <{level = 10 : i32, message = "bqd,bkd->bqk"}> : () -> ()
    %cst_23 = arith.constant dense<0.000000e+00> : vector<2x8x8xf32>
    %52 = tpu.matmul %49, %50, %cst_23 {dimension_numbers = #tpu.dot_dimension_numbers<[2], [2], [1], [1], [0, 0, 0, 1, 1, 1], [0], [0]>} : vector<2x8x8xbf16>, vector<2x8x8xbf16>, vector<2x8x8xf32> -> vector<2x8x8xf32>
    "tpu.trace_stop"() : () -> ()
    %53 = vector.broadcast %29 : vector<1x8x8xf32> to vector<2x8x8xf32>
    %54 = arith.addf %52, %53 : vector<2x8x8xf32>
    %cst_24 = arith.constant dense<0xFF800000> : vector<2x8xf32>
    %55 = vector.multi_reduction <maximumf>, %54, %cst_24 [2] : vector<2x8x8xf32> to vector<2x8xf32>
    %56 = vector.shape_cast %55 : vector<2x8xf32> to vector<2x8x1xf32>
    %57 = vector.broadcast %56 : vector<2x8x1xf32> to vector<2x8x8xf32>
    %58 = arith.subf %54, %57 : vector<2x8x8xf32>
    %59 = math.exp %58 : vector<2x8x8xf32>
    %cst_25 = arith.constant dense<0.000000e+00> : vector<2x8xf32>
    %60 = vector.multi_reduction <add>, %59, %cst_25 [2] : vector<2x8x8xf32> to vector<2x8xf32>
    %61 = vector.shape_cast %60 : vector<2x8xf32> to vector<2x8x1xf32>
    %62 = tpu.reciprocal %61 {approx = true} : vector<2x8x1xf32> -> vector<2x8x1xf32>
    %63 = vector.broadcast %62 : vector<2x8x1xf32> to vector<2x8x8xf32>
    %64 = arith.mulf %59, %63 : vector<2x8x8xf32>
    %65 = arith.truncf %64 : vector<2x8x8xf32> to vector<2x8x8xbf16>
    "tpu.trace_start"() <{level = 10 : i32, message = "bqk,bkd->bqd"}> : () -> ()
    %cst_26 = arith.constant dense<0.000000e+00> : vector<2x8x8xf32>
    %66 = tpu.matmul %65, %51, %cst_26 {dimension_numbers = #tpu.dot_dimension_numbers<[2], [1], [1], [2], [0, 0, 0, 1, 1, 2], [0], [0]>} : vector<2x8x8xbf16>, vector<2x8x8xbf16>, vector<2x8x8xf32> -> vector<2x8x8xf32>
    "tpu.trace_stop"() : () -> ()
    %67 = arith.truncf %66 : vector<2x8x8xf32> to vector<2x8x8xbf16>
    %68 = vector.extract_strided_slice %25 {offsets = [0, 0, 16], sizes = [2, 8, 8], strides = [1, 1, 1]} : vector<2x8x32xbf16> to vector<2x8x8xbf16>
    %69 = vector.extract_strided_slice %26 {offsets = [0, 0, 16], sizes = [2, 8, 8], strides = [1, 1, 1]} : vector<2x8x64xbf16> to vector<2x8x8xbf16>
    %70 = vector.extract_strided_slice %26 {offsets = [0, 0, 48], sizes = [2, 8, 8], strides = [1, 1, 1]} : vector<2x8x64xbf16> to vector<2x8x8xbf16>
    "tpu.trace_start"() <{level = 10 : i32, message = "bqd,bkd->bqk"}> : () -> ()
    %cst_27 = arith.constant dense<0.000000e+00> : vector<2x8x8xf32>
    %71 = tpu.matmul %68, %69, %cst_27 {dimension_numbers = #tpu.dot_dimension_numbers<[2], [2], [1], [1], [0, 0, 0, 1, 1, 1], [0], [0]>} : vector<2x8x8xbf16>, vector<2x8x8xbf16>, vector<2x8x8xf32> -> vector<2x8x8xf32>
    "tpu.trace_stop"() : () -> ()
    %72 = vector.broadcast %29 : vector<1x8x8xf32> to vector<2x8x8xf32>
    %73 = arith.addf %71, %72 : vector<2x8x8xf32>
    %cst_28 = arith.constant dense<0xFF800000> : vector<2x8xf32>
    %74 = vector.multi_reduction <maximumf>, %73, %cst_28 [2] : vector<2x8x8xf32> to vector<2x8xf32>
    %75 = vector.shape_cast %74 : vector<2x8xf32> to vector<2x8x1xf32>
    %76 = vector.broadcast %75 : vector<2x8x1xf32> to vector<2x8x8xf32>
    %77 = arith.subf %73, %76 : vector<2x8x8xf32>
    %78 = math.exp %77 : vector<2x8x8xf32>
    %cst_29 = arith.constant dense<0.000000e+00> : vector<2x8xf32>
    %79 = vector.multi_reduction <add>, %78, %cst_29 [2] : vector<2x8x8xf32> to vector<2x8xf32>
    %80 = vector.shape_cast %79 : vector<2x8xf32> to vector<2x8x1xf32>
    %81 = tpu.reciprocal %80 {approx = true} : vector<2x8x1xf32> -> vector<2x8x1xf32>
    %82 = vector.broadcast %81 : vector<2x8x1xf32> to vector<2x8x8xf32>
    %83 = arith.mulf %78, %82 : vector<2x8x8xf32>
    %84 = arith.truncf %83 : vector<2x8x8xf32> to vector<2x8x8xbf16>
    "tpu.trace_start"() <{level = 10 : i32, message = "bqk,bkd->bqd"}> : () -> ()
    %cst_30 = arith.constant dense<0.000000e+00> : vector<2x8x8xf32>
    %85 = tpu.matmul %84, %70, %cst_30 {dimension_numbers = #tpu.dot_dimension_numbers<[2], [1], [1], [2], [0, 0, 0, 1, 1, 2], [0], [0]>} : vector<2x8x8xbf16>, vector<2x8x8xbf16>, vector<2x8x8xf32> -> vector<2x8x8xf32>
    "tpu.trace_stop"() : () -> ()
    %86 = arith.truncf %85 : vector<2x8x8xf32> to vector<2x8x8xbf16>
    %87 = vector.extract_strided_slice %25 {offsets = [0, 0, 24], sizes = [2, 8, 8], strides = [1, 1, 1]} : vector<2x8x32xbf16> to vector<2x8x8xbf16>
    %88 = vector.extract_strided_slice %26 {offsets = [0, 0, 24], sizes = [2, 8, 8], strides = [1, 1, 1]} : vector<2x8x64xbf16> to vector<2x8x8xbf16>
    %89 = vector.extract_strided_slice %26 {offsets = [0, 0, 56], sizes = [2, 8, 8], strides = [1, 1, 1]} : vector<2x8x64xbf16> to vector<2x8x8xbf16>
    "tpu.trace_start"() <{level = 10 : i32, message = "bqd,bkd->bqk"}> : () -> ()
    %cst_31 = arith.constant dense<0.000000e+00> : vector<2x8x8xf32>
    %90 = tpu.matmul %87, %88, %cst_31 {dimension_numbers = #tpu.dot_dimension_numbers<[2], [2], [1], [1], [0, 0, 0, 1, 1, 1], [0], [0]>} : vector<2x8x8xbf16>, vector<2x8x8xbf16>, vector<2x8x8xf32> -> vector<2x8x8xf32>
    "tpu.trace_stop"() : () -> ()
    %91 = vector.broadcast %29 : vector<1x8x8xf32> to vector<2x8x8xf32>
    %92 = arith.addf %90, %91 : vector<2x8x8xf32>
    %cst_32 = arith.constant dense<0xFF800000> : vector<2x8xf32>
    %93 = vector.multi_reduction <maximumf>, %92, %cst_32 [2] : vector<2x8x8xf32> to vector<2x8xf32>
    %94 = vector.shape_cast %93 : vector<2x8xf32> to vector<2x8x1xf32>
    %95 = vector.broadcast %94 : vector<2x8x1xf32> to vector<2x8x8xf32>
    %96 = arith.subf %92, %95 : vector<2x8x8xf32>
    %97 = math.exp %96 : vector<2x8x8xf32>
    %cst_33 = arith.constant dense<0.000000e+00> : vector<2x8xf32>
    %98 = vector.multi_reduction <add>, %97, %cst_33 [2] : vector<2x8x8xf32> to vector<2x8xf32>
    %99 = vector.shape_cast %98 : vector<2x8xf32> to vector<2x8x1xf32>
    %100 = tpu.reciprocal %99 {approx = true} : vector<2x8x1xf32> -> vector<2x8x1xf32>
    %101 = vector.broadcast %100 : vector<2x8x1xf32> to vector<2x8x8xf32>
    %102 = arith.mulf %97, %101 : vector<2x8x8xf32>
    %103 = arith.truncf %102 : vector<2x8x8xf32> to vector<2x8x8xbf16>
    "tpu.trace_start"() <{level = 10 : i32, message = "bqk,bkd->bqd"}> : () -> ()
    %cst_34 = arith.constant dense<0.000000e+00> : vector<2x8x8xf32>
    %104 = tpu.matmul %103, %89, %cst_34 {dimension_numbers = #tpu.dot_dimension_numbers<[2], [1], [1], [2], [0, 0, 0, 1, 1, 2], [0], [0]>} : vector<2x8x8xbf16>, vector<2x8x8xbf16>, vector<2x8x8xf32> -> vector<2x8x8xf32>
    "tpu.trace_stop"() : () -> ()
    %105 = arith.truncf %104 : vector<2x8x8xf32> to vector<2x8x8xbf16>
    %106 = tpu.concatenate %48, %67, %86, %105 in 2 : vector<2x8x8xbf16>, vector<2x8x8xbf16>, vector<2x8x8xbf16>, vector<2x8x8xbf16> -> vector<2x8x32xbf16>
    %107 = vector.shape_cast %106 : vector<2x8x32xbf16> to vector<16x32xbf16>
    %c0_35 = arith.constant 0 : index
    %c0_36 = arith.constant 0 : index
    %108 = vector.load %arg9[%c0_35, %c0_36] : memref<32x32xbf16, #tpu.memory_space<vmem>>, vector<32x32xbf16>
    %cst_37 = arith.constant dense<0.000000e+00> : vector<16x32xf32>
    %109 = tpu.matmul %107, %108, %cst_37 {dimension_numbers = #tpu.dot_dimension_numbers<[1], [0], [0], [1], [0, 0, 1, 1], [], []>} : vector<16x32xbf16>, vector<32x32xbf16>, vector<16x32xf32> -> vector<16x32xf32>
    %c0_38 = arith.constant 0 : index
    %c0_39 = arith.constant 0 : index
    %110 = vector.load %arg10[%c0_38, %c0_39] : memref<1x32xf32, #tpu.memory_space<vmem>>, vector<1x32xf32>
    %111 = vector.broadcast %110 : vector<1x32xf32> to vector<16x32xf32>
    %112 = arith.addf %109, %111 : vector<16x32xf32>
    %113 = arith.addf %11, %112 : vector<16x32xf32>
    %c0_40 = arith.constant 0 : index
    %c0_41 = arith.constant 0 : index
    %114 = vector.load %arg11[%c0_40, %c0_41] : memref<1x32xf32, #tpu.memory_space<vmem>>, vector<1x32xf32>
    %c0_42 = arith.constant 0 : index
    %c0_43 = arith.constant 0 : index
    %115 = vector.load %arg12[%c0_42, %c0_43] : memref<1x32xf32, #tpu.memory_space<vmem>>, vector<1x32xf32>
    %cst_44 = arith.constant dense<0.000000e+00> : vector<16xf32>
    %116 = vector.multi_reduction <add>, %113, %cst_44 [1] : vector<16x32xf32> to vector<16xf32>
    %117 = vector.shape_cast %116 : vector<16xf32> to vector<16x1xf32>
    %cst_45 = arith.constant 3.200000e+01 : f32
    %118 = vector.broadcast %cst_45 : f32 to vector<16x1xf32>
    %119 = arith.divf %117, %118 : vector<16x1xf32>
    %120 = vector.broadcast %119 : vector<16x1xf32> to vector<16x32xf32>
    %121 = arith.subf %113, %120 : vector<16x32xf32>
    %122 = arith.mulf %121, %121 : vector<16x32xf32>
    %cst_46 = arith.constant dense<0.000000e+00> : vector<16xf32>
    %123 = vector.multi_reduction <add>, %122, %cst_46 [1] : vector<16x32xf32> to vector<16xf32>
    %124 = vector.shape_cast %123 : vector<16xf32> to vector<16x1xf32>
    %cst_47 = arith.constant 3.200000e+01 : f32
    %125 = vector.broadcast %cst_47 : f32 to vector<16x1xf32>
    %126 = arith.divf %124, %125 : vector<16x1xf32>
    %127 = vector.broadcast %119 : vector<16x1xf32> to vector<16x32xf32>
    %128 = arith.subf %113, %127 : vector<16x32xf32>
    %cst_48 = arith.constant 9.99999974E-6 : f32
    %129 = vector.broadcast %cst_48 : f32 to vector<16x1xf32>
    %130 = arith.addf %126, %129 : vector<16x1xf32>
    %131 = math.rsqrt %130 : vector<16x1xf32>
    %132 = vector.broadcast %131 : vector<16x1xf32> to vector<16x32xf32>
    %133 = arith.mulf %128, %132 : vector<16x32xf32>
    %134 = vector.broadcast %114 : vector<1x32xf32> to vector<16x32xf32>
    %135 = arith.mulf %133, %134 : vector<16x32xf32>
    %136 = vector.broadcast %115 : vector<1x32xf32> to vector<16x32xf32>
    %137 = arith.addf %135, %136 : vector<16x32xf32>
    %138 = arith.truncf %137 : vector<16x32xf32> to vector<16x32xbf16>
    %c0_49 = arith.constant 0 : index
    %c0_50 = arith.constant 0 : index
    %139 = vector.load %arg13[%c0_49, %c0_50] : memref<32x32xbf16, #tpu.memory_space<vmem>>, vector<32x32xbf16>
    %cst_51 = arith.constant dense<0.000000e+00> : vector<16x32xf32>
    %140 = tpu.matmul %138, %139, %cst_51 {dimension_numbers = #tpu.dot_dimension_numbers<[1], [0], [0], [1], [0, 0, 1, 1], [], []>} : vector<16x32xbf16>, vector<32x32xbf16>, vector<16x32xf32> -> vector<16x32xf32>
    %c0_52 = arith.constant 0 : index
    %c0_53 = arith.constant 0 : index
    %141 = vector.load %arg14[%c0_52, %c0_53] : memref<1x32xf32, #tpu.memory_space<vmem>>, vector<1x32xf32>
    %142 = vector.broadcast %141 : vector<1x32xf32> to vector<16x32xf32>
    %143 = arith.addf %140, %142 : vector<16x32xf32>
    %cst_54 = arith.constant 0.000000e+00 : f32
    %144 = vector.broadcast %cst_54 : f32 to vector<16x32xf32>
    %145 = arith.maximumf %143, %144 : vector<16x32xf32>
    %146 = arith.truncf %145 : vector<16x32xf32> to vector<16x32xbf16>
    %c0_55 = arith.constant 0 : index
    %c0_56 = arith.constant 0 : index
    %147 = vector.load %arg15[%c0_55, %c0_56] : memref<32x32xbf16, #tpu.memory_space<vmem>>, vector<32x32xbf16>
    %cst_57 = arith.constant dense<0.000000e+00> : vector<16x32xf32>
    %148 = tpu.matmul %146, %147, %cst_57 {dimension_numbers = #tpu.dot_dimension_numbers<[1], [0], [0], [1], [0, 0, 1, 1], [], []>} : vector<16x32xbf16>, vector<32x32xbf16>, vector<16x32xf32> -> vector<16x32xf32>
    %c0_58 = arith.constant 0 : index
    %c0_59 = arith.constant 0 : index
    %149 = vector.load %arg16[%c0_58, %c0_59] : memref<1x32xf32, #tpu.memory_space<vmem>>, vector<1x32xf32>
    %150 = vector.broadcast %149 : vector<1x32xf32> to vector<16x32xf32>
    %151 = arith.addf %148, %150 : vector<16x32xf32>
    %152 = arith.addf %151, %137 : vector<16x32xf32>
    %c0_60 = arith.constant 0 : index
    %c0_61 = arith.constant 0 : index
    %153 = vector.load %arg17[%c0_60, %c0_61] : memref<1x32xf32, #tpu.memory_space<vmem>>, vector<1x32xf32>
    %c0_62 = arith.constant 0 : index
    %c0_63 = arith.constant 0 : index
    %154 = vector.load %arg18[%c0_62, %c0_63] : memref<1x32xf32, #tpu.memory_space<vmem>>, vector<1x32xf32>
    %cst_64 = arith.constant dense<0.000000e+00> : vector<16xf32>
    %155 = vector.multi_reduction <add>, %152, %cst_64 [1] : vector<16x32xf32> to vector<16xf32>
    %156 = vector.shape_cast %155 : vector<16xf32> to vector<16x1xf32>
    %cst_65 = arith.constant 3.200000e+01 : f32
    %157 = vector.broadcast %cst_65 : f32 to vector<16x1xf32>
    %158 = arith.divf %156, %157 : vector<16x1xf32>
    %159 = vector.broadcast %158 : vector<16x1xf32> to vector<16x32xf32>
    %160 = arith.subf %152, %159 : vector<16x32xf32>
    %161 = arith.mulf %160, %160 : vector<16x32xf32>
    %cst_66 = arith.constant dense<0.000000e+00> : vector<16xf32>
    %162 = vector.multi_reduction <add>, %161, %cst_66 [1] : vector<16x32xf32> to vector<16xf32>
    %163 = vector.shape_cast %162 : vector<16xf32> to vector<16x1xf32>
    %cst_67 = arith.constant 3.200000e+01 : f32
    %164 = vector.broadcast %cst_67 : f32 to vector<16x1xf32>
    %165 = arith.divf %163, %164 : vector<16x1xf32>
    %166 = vector.broadcast %158 : vector<16x1xf32> to vector<16x32xf32>
    %167 = arith.subf %152, %166 : vector<16x32xf32>
    %cst_68 = arith.constant 9.99999974E-6 : f32
    %168 = vector.broadcast %cst_68 : f32 to vector<16x1xf32>
    %169 = arith.addf %165, %168 : vector<16x1xf32>
    %170 = math.rsqrt %169 : vector<16x1xf32>
    %171 = vector.broadcast %170 : vector<16x1xf32> to vector<16x32xf32>
    %172 = arith.mulf %167, %171 : vector<16x32xf32>
    %173 = vector.broadcast %153 : vector<1x32xf32> to vector<16x32xf32>
    %174 = arith.mulf %172, %173 : vector<16x32xf32>
    %175 = vector.broadcast %154 : vector<1x32xf32> to vector<16x32xf32>
    %176 = arith.addf %174, %175 : vector<16x32xf32>
    %c0_69 = arith.constant 0 : index
    %c0_70 = arith.constant 0 : index
    %177 = vector.load %arg19[%c0_69, %c0_70] : memref<1x32xbf16, #tpu.memory_space<vmem>>, vector<1x32xbf16>
    %178 = arith.truncf %176 : vector<16x32xf32> to vector<16x32xbf16>
    %cst_71 = arith.constant dense<0.000000e+00> : vector<1x16xf32>
    %179 = tpu.matmul %177, %178, %cst_71 {dimension_numbers = #tpu.dot_dimension_numbers<[1], [1], [0], [0], [0, 0, 1, 0], [], []>} : vector<1x32xbf16>, vector<16x32xbf16>, vector<1x16xf32> -> vector<1x16xf32>
    %c0_72 = arith.constant 0 : index
    %c0_73 = arith.constant 0 : index
    %180 = vector.load %arg20[%c0_72, %c0_73] : memref<1x1xf32, #tpu.memory_space<vmem>>, vector<1x1xf32>
    %181 = vector.broadcast %180 : vector<1x1xf32> to vector<1x16xf32>
    %182 = arith.addf %179, %181 : vector<1x16xf32>
    %183 = arith.negf %182 : vector<1x16xf32>
    %184 = math.exp %183 : vector<1x16xf32>
    %cst_74 = arith.constant 1.000000e+00 : f32
    %185 = vector.broadcast %cst_74 : f32 to vector<1x16xf32>
    %186 = arith.addf %185, %184 : vector<1x16xf32>
    %187 = arith.divf %185, %186 : vector<1x16xf32>
    %c0_75 = arith.constant 0 : index
    %c0_76 = arith.constant 0 : index
    %c0_77 = arith.constant 0 : index
    %188 = vector.load %arg21[%c0_75, %c0_76, %c0_77] : memref<1x1x16xf32, #tpu.memory_space<vmem>>, vector<1x1x16xf32>
    %189 = vector.shape_cast %188 : vector<1x1x16xf32> to vector<1x16xf32>
    %190 = vector.shape_cast %187 : vector<1x16xf32> to vector<1x1x16xf32>
    tpu.vector_store %arg21[%c0_75, %c0_76, %c0_77], %190 {strides = array<i32>} : memref<1x1x16xf32, #tpu.memory_space<vmem>>, vector<1x1x16xf32>,
    return
  }
  func.func @transform_0(%arg0: i32) -> (i32, i32, i32, i32) {
    %c0_i32 = arith.constant 0 : i32
    %c0_i32_0 = arith.constant 0 : i32
    %c0_i32_1 = arith.constant 0 : i32
    %c0_i32_2 = arith.constant 0 : i32
    return %arg0, %c0_i32, %c0_i32_0, %c0_i32_1 : i32, i32, i32, i32
  }
  func.func @transform_1(%arg0: i32) -> (i32, i32) {
    %c0_i32 = arith.constant 0 : i32
    %c0_i32_0 = arith.constant 0 : i32
    %c0_i32_1 = arith.constant 0 : i32
    return %c0_i32, %c0_i32_0 : i32, i32
  }
  func.func @transform_2(%arg0: i32) -> (i32, i32) {
    %c0_i32 = arith.constant 0 : i32
    %c0_i32_0 = arith.constant 0 : i32
    %c0_i32_1 = arith.constant 0 : i32
    return %c0_i32, %c0_i32_0 : i32, i32
  }
  func.func @transform_3(%arg0: i32) -> (i32, i32) {
    %c0_i32 = arith.constant 0 : i32
    %c0_i32_0 = arith.constant 0 : i32
    %c0_i32_1 = arith.constant 0 : i32
    return %c0_i32, %c0_i32_0 : i32, i32
  }
  func.func @transform_4(%arg0: i32) -> (i32, i32) {
    %c0_i32 = arith.constant 0 : i32
    %c0_i32_0 = arith.constant 0 : i32
    %c0_i32_1 = arith.constant 0 : i32
    return %c0_i32, %c0_i32_0 : i32, i32
  }
  func.func @transform_5(%arg0: i32) -> (i32, i32) {
    %c0_i32 = arith.constant 0 : i32
    %c0_i32_0 = arith.constant 0 : i32
    %c0_i32_1 = arith.constant 0 : i32
    return %c0_i32, %c0_i32_0 : i32, i32
  }
  func.func @transform_6(%arg0: i32) -> (i32, i32) {
    %c0_i32 = arith.constant 0 : i32
    %c0_i32_0 = arith.constant 0 : i32
    %c0_i32_1 = arith.constant 0 : i32
    return %c0_i32, %c0_i32_0 : i32, i32
  }
  func.func @transform_7(%arg0: i32) -> (i32, i32) {
    %c0_i32 = arith.constant 0 : i32
    %c0_i32_0 = arith.constant 0 : i32
    %c0_i32_1 = arith.constant 0 : i32
    return %c0_i32, %c0_i32_0 : i32, i32
  }
  func.func @transform_8(%arg0: i32) -> (i32, i32) {
    %c0_i32 = arith.constant 0 : i32
    %c0_i32_0 = arith.constant 0 : i32
    %c0_i32_1 = arith.constant 0 : i32
    return %c0_i32, %c0_i32_0 : i32, i32
  }
  func.func @transform_9(%arg0: i32) -> (i32, i32) {
    %c0_i32 = arith.constant 0 : i32
    %c0_i32_0 = arith.constant 0 : i32
    %c0_i32_1 = arith.constant 0 : i32
    return %c0_i32, %c0_i32_0 : i32, i32
  }
  func.func @transform_10(%arg0: i32) -> (i32, i32) {
    %c0_i32 = arith.constant 0 : i32
    %c0_i32_0 = arith.constant 0 : i32
    %c0_i32_1 = arith.constant 0 : i32
    return %c0_i32, %c0_i32_0 : i32, i32
  }
  func.func @transform_11(%arg0: i32) -> (i32, i32) {
    %c0_i32 = arith.constant 0 : i32
    %c0_i32_0 = arith.constant 0 : i32
    %c0_i32_1 = arith.constant 0 : i32
    return %c0_i32, %c0_i32_0 : i32, i32
  }
  func.func @transform_12(%arg0: i32) -> (i32, i32) {
    %c0_i32 = arith.constant 0 : i32
    %c0_i32_0 = arith.constant 0 : i32
    %c0_i32_1 = arith.constant 0 : i32
    return %c0_i32, %c0_i32_0 : i32, i32
  }
  func.func @transform_13(%arg0: i32) -> (i32, i32) {
    %c0_i32 = arith.constant 0 : i32
    %c0_i32_0 = arith.constant 0 : i32
    %c0_i32_1 = arith.constant 0 : i32
    return %c0_i32, %c0_i32_0 : i32, i32
  }
  func.func @transform_14(%arg0: i32) -> (i32, i32) {
    %c0_i32 = arith.constant 0 : i32
    %c0_i32_0 = arith.constant 0 : i32
    %c0_i32_1 = arith.constant 0 : i32
    return %c0_i32, %c0_i32_0 : i32, i32
  }
  func.func @transform_15(%arg0: i32) -> (i32, i32) {
    %c0_i32 = arith.constant 0 : i32
    %c0_i32_0 = arith.constant 0 : i32
    %c0_i32_1 = arith.constant 0 : i32
    return %c0_i32, %c0_i32_0 : i32, i32
  }
  func.func @transform_16(%arg0: i32) -> (i32, i32) {
    %c0_i32 = arith.constant 0 : i32
    %c0_i32_0 = arith.constant 0 : i32
    %c0_i32_1 = arith.constant 0 : i32
    return %c0_i32, %c0_i32_0 : i32, i32
  }
  func.func @transform_17(%arg0: i32) -> (i32, i32) {
    %c0_i32 = arith.constant 0 : i32
    %c0_i32_0 = arith.constant 0 : i32
    %c0_i32_1 = arith.constant 0 : i32
    return %c0_i32, %c0_i32_0 : i32, i32
  }
  func.func @transform_18(%arg0: i32) -> (i32, i32) {
    %c0_i32 = arith.constant 0 : i32
    %c0_i32_0 = arith.constant 0 : i32
    %c0_i32_1 = arith.constant 0 : i32
    return %c0_i32, %c0_i32_0 : i32, i32
  }
  func.func @transform_19(%arg0: i32) -> (i32, i32) {
    %c0_i32 = arith.constant 0 : i32
    %c0_i32_0 = arith.constant 0 : i32
    %c0_i32_1 = arith.constant 0 : i32
    return %c0_i32, %c0_i32_0 : i32, i32
  }
  func.func @transform_20(%arg0: i32) -> (i32, i32, i32) {
    %c0_i32 = arith.constant 0 : i32
    %c0_i32_0 = arith.constant 0 : i32
    %c0_i32_1 = arith.constant 0 : i32
    return %arg0, %c0_i32, %c0_i32_0 : i32, i32, i32
  }
}

module attributes {stable_mosaic.version = 11 : i64} {
  func.func @hgakt_kernel(%arg0: i32, %arg1: memref<2x2x8x32xbf16, #tpu.memory_space<vmem>>, %arg2: memref<8x8xbf16, #tpu.memory_space<vmem>>, %arg3: memref<32x32xbf16, #tpu.memory_space<vmem>>, %arg4: memref<1x32xf32, #tpu.memory_space<vmem>>, %arg5: memref<32x32xbf16, #tpu.memory_space<vmem>>, %arg6: memref<1x32xf32, #tpu.memory_space<vmem>>, %arg7: memref<32x64xbf16, #tpu.memory_space<vmem>>, %arg8: memref<1x64xf32, #tpu.memory_space<vmem>>, %arg9: memref<32x32xbf16, #tpu.memory_space<vmem>>, %arg10: memref<1x32xf32, #tpu.memory_space<vmem>>, %arg11: memref<1x32xf32, #tpu.memory_space<vmem>>, %arg12: memref<1x32xf32, #tpu.memory_space<vmem>>, %arg13: memref<32x32xbf16, #tpu.memory_space<vmem>>, %arg14: memref<1x32xf32, #tpu.memory_space<vmem>>, %arg15: memref<32x32xbf16, #tpu.memory_space<vmem>>, %arg16: memref<1x32xf32, #tpu.memory_space<vmem>>, %arg17: memref<1x32xf32, #tpu.memory_space<vmem>>, %arg18: memref<1x32xf32, #tpu.memory_space<vmem>>, %arg19: memref<1x32xbf16, #tpu.memory_space<vmem>>, %arg20: memref<1x1xf32, #tpu.memory_space<vmem>>, %arg21: memref<1x1x16xf32, #tpu.memory_space<vmem>>) attributes {dimension_semantics = [#tpu.dimension_semantics<parallel>], iteration_bounds = array<i64: 1>, scalar_prefetch = 0 : i64, scratch_operands = 0 : i64, tpu.core_type = #tpu.core_type<tc>, window_params = [{transform_indices = @transform_0, window_bounds = array<i64: 2, 2, 8, 32>}, {pipeline_mode = #tpu.pipeline_mode<synchronous>, transform_indices = @transform_1, window_bounds = array<i64: 8, 8>}, {pipeline_mode = #tpu.pipeline_mode<synchronous>, transform_indices = @transform_2, window_bounds = array<i64: 32, 32>}, {pipeline_mode = #tpu.pipeline_mode<synchronous>, transform_indices = @transform_3, window_bounds = array<i64: 1, 32>}, {pipeline_mode = #tpu.pipeline_mode<synchronous>, transform_indices = @transform_4, window_bounds = array<i64: 32, 32>}, {pipeline_mode = #tpu.pipeline_mode<synchronous>, transform_indices = @transform_5, window_bounds = array<i64: 1, 32>}, {pipeline_mode = #tpu.pipeline_mode<synchronous>, transform_indices = @transform_6, window_bounds = array<i64: 32, 64>}, {pipeline_mode = #tpu.pipeline_mode<synchronous>, transform_indices = @transform_7, window_bounds = array<i64: 1, 64>}, {pipeline_mode = #tpu.pipeline_mode<synchronous>, transform_indices = @transform_8, window_bounds = array<i64: 32, 32>}, {pipeline_mode = #tpu.pipeline_mode<synchronous>, transform_indices = @transform_9, window_bounds = array<i64: 1, 32>}, {pipeline_mode = #tpu.pipeline_mode<synchronous>, transform_indices = @transform_10, window_bounds = array<i64: 1, 32>}, {pipeline_mode = #tpu.pipeline_mode<synchronous>, transform_indices = @transform_11, window_bounds = array<i64: 1, 32>}, {pipeline_mode = #tpu.pipeline_mode<synchronous>, transform_indices = @transform_12, window_bounds = array<i64: 32, 32>}, {pipeline_mode = #tpu.pipeline_mode<synchronous>, transform_indices = @transform_13, window_bounds = array<i64: 1, 32>}, {pipeline_mode = #tpu.pipeline_mode<synchronous>, transform_indices = @transform_14, window_bounds = array<i64: 32, 32>}, {pipeline_mode = #tpu.pipeline_mode<synchronous>, transform_indices = @transform_15, window_bounds = array<i64: 1, 32>}, {pipeline_mode = #tpu.pipeline_mode<synchronous>, transform_indices = @transform_16, window_bounds = array<i64: 1, 32>}, {pipeline_mode = #tpu.pipeline_mode<synchronous>, transform_indices = @transform_17, window_bounds = array<i64: 1, 32>}, {pipeline_mode = #tpu.pipeline_mode<synchronous>, transform_indices = @transform_18, window_bounds = array<i64: 1, 32>}, {pipeline_mode = #tpu.pipeline_mode<synchronous>, transform_indices = @transform_19, window_bounds = array<i64: 1, 1>}, {transform_indices = @transform_20, window_bounds = array<i64: 1, 1, 16>}]} {
    %c0 = arith.constant 0 : index
    %c0_0 = arith.constant 0 : index
    %c0_1 = arith.constant 0 : index
    %c0_2 = arith.constant 0 : index
    %0 = vector.load %arg1[%c0, %c0_0, %c0_1, %c0_2] : memref<2x2x8x32xbf16, #tpu.memory_space<vmem>>, vector<2x2x8x32xbf16>
    %1 = vector.extract_strided_slice %0 {offsets = [0, 0, 0, 0], sizes = [2, 1, 8, 32], strides = [1, 1, 1, 1]} : vector<2x2x8x32xbf16> to vector<2x1x8x32xbf16>
    %2 = vector.shape_cast %1 : vector<2x1x8x32xbf16> to vector<2x8x32xbf16>
    %3 = vector.shape_cast %2 : vector<2x8x32xbf16> to vector<16x32xbf16>
    %4 = vector.extract_strided_slice %0 {offsets = [0, 1, 0, 0], sizes = [2, 1, 8, 32], strides = [1, 1, 1, 1]} : vector<2x2x8x32xbf16> to vector<2x1x8x32xbf16>
    %5 = vector.shape_cast %4 : vector<2x1x8x32xbf16> to vector<2x8x32xbf16>
    %6 = vector.shape_cast %5 : vector<2x8x32xbf16> to vector<16x32xbf16>
    %c0_3 = arith.constant 0 : index
    %c0_4 = arith.constant 0 : index
    %7 = vector.load %arg3[%c0_3, %c0_4] : memref<32x32xbf16, #tpu.memory_space<vmem>>, vector<32x32xbf16>
    %cst = arith.constant dense<0.000000e+00> : vector<16x32xf32>
    %8 = tpu.matmul %6, %7, %cst {dimension_numbers = #tpu.dot_dimension_numbers<[1], [0], [0], [1], [0, 0, 1, 1], [], []>} : vector<16x32xbf16>, vector<32x32xbf16>, vector<16x32xf32> -> vector<16x32xf32>
    %c0_5 = arith.constant 0 : index
    %c0_6 = arith.constant 0 : index
    %9 = vector.load %arg4[%c0_5, %c0_6] : memref<1x32xf32, #tpu.memory_space<vmem>>, vector<1x32xf32>
    %10 = vector.broadcast %9 : vector<1x32xf32> to vector<16x32xf32>
    %11 = arith.addf %8, %10 : vector<16x32xf32>
    %12 = arith.truncf %11 : vector<16x32xf32> to vector<16x32xbf16>
    %c0_7 = arith.constant 0 : index
    %c0_8 = arith.constant 0 : index
    %13 = vector.load %arg5[%c0_7, %c0_8] : memref<32x32xbf16, #tpu.memory_space<vmem>>, vector<32x32xbf16>
    %cst_9 = arith.constant dense<0.000000e+00> : vector<16x32xf32>
    %14 = tpu.matmul %12, %13, %cst_9 {dimension_numbers = #tpu.dot_dimension_numbers<[1], [0], [0], [1], [0, 0, 1, 1], [], []>} : vector<16x32xbf16>, vector<32x32xbf16>, vector<16x32xf32> -> vector<16x32xf32>
    %c0_10 = arith.constant 0 : index
    %c0_11 = arith.constant 0 : index
    %15 = vector.load %arg6[%c0_10, %c0_11] : memref<1x32xf32, #tpu.memory_space<vmem>>, vector<1x32xf32>
    %16 = vector.broadcast %15 : vector<1x32xf32> to vector<16x32xf32>
    %17 = arith.addf %14, %16 : vector<16x32xf32>
    %18 = arith.truncf %17 : vector<16x32xf32> to vector<16x32xbf16>
    %c0_12 = arith.constant 0 : index
    %c0_13 = arith.constant 0 : index
    %19 = vector.load %arg7[%c0_12, %c0_13] : memref<32x64xbf16, #tpu.memory_space<vmem>>, vector<32x64xbf16>
    %cst_14 = arith.constant dense<0.000000e+00> : vector<16x64xf32>
    %20 = tpu.matmul %3, %19, %cst_14 {dimension_numbers = #tpu.dot_dimension_numbers<[1], [0], [0], [1], [0, 0, 1, 1], [], []>} : vector<16x32xbf16>, vector<32x64xbf16>, vector<16x64xf32> -> vector<16x64xf32>
    %c0_15 = arith.constant 0 : index
    %c0_16 = arith.constant 0 : index
    %21 = vector.load %arg8[%c0_15, %c0_16] : memref<1x64xf32, #tpu.memory_space<vmem>>, vector<1x64xf32>
    %22 = vector.broadcast %21 : vector<1x64xf32> to vector<16x64xf32>
    %23 = arith.addf %20, %22 : vector<16x64xf32>
    %24 = arith.truncf %23 : vector<16x64xf32> to vector<16x64xbf16>
    %25 = vector.shape_cast %18 : vector<16x32xbf16> to vector<2x8x32xbf16>
    %26 = vector.shape_cast %24 : vector<16x64xbf16> to vector<2x8x64xbf16>
    %c0_17 = arith.constant 0 : index
    %c0_18 = arith.constant 0 : index
    %27 = vector.load %arg2[%c0_17, %c0_18] : memref<8x8xbf16, #tpu.memory_space<vmem>>, vector<8x8xbf16>
    %28 = arith.extf %27 : vector<8x8xbf16> to vector<8x8xf32>
    %29 = vector.shape_cast %28 : vector<8x8xf32> to vector<1x8x8xf32>
    %30 = vector.extract_strided_slice %25 {offsets = [0, 0, 0], sizes = [2, 8, 8], strides = [1, 1, 1]} : vector<2x8x32xbf16> to vector<2x8x8xbf16>
    %31 = vector.extract_strided_slice %26 {offsets = [0, 0, 0], sizes = [2, 8, 8], strides = [1, 1, 1]} : vector<2x8x64xbf16> to vector<2x8x8xbf16>
    %32 = vector.extract_strided_slice %26 {offsets = [0, 0, 32], sizes = [2, 8, 8], strides = [1, 1, 1]} : vector<2x8x64xbf16> to vector<2x8x8xbf16>
    "tpu.trace_start"() <{level = 10 : i32, message = "bqd,bkd->bqk"}> : () -> ()
    %cst_19 = arith.constant dense<0.000000e+00> : vector<2x8x8xf32>
    %33 = tpu.matmul %30, %31, %cst_19 {dimension_numbers = #tpu.dot_dimension_numbers<[2], [2], [1], [1], [0, 0, 0, 1, 1, 1], [0], [0]>} : vector<2x8x8xbf16>, vector<2x8x8xbf16>, vector<2x8x8xf32> -> vector<2x8x8xf32>
    "tpu.trace_stop"() : () -> ()
    %34 = vector.broadcast %29 : vector<1x8x8xf32> to vector<2x8x8xf32>
    %35 = arith.addf %33, %34 : vector<2x8x8xf32>
    %cst_20 = arith.constant dense<0xFF800000> : vector<2x8xf32>
    %36 = vector.multi_reduction <maximumf>, %35, %cst_20 [2] : vector<2x8x8xf32> to vector<2x8xf32>
    %37 = vector.shape_cast %36 : vector<2x8xf32> to vector<2x8x1xf32>
    %38 = vector.broadcast %37 : vector<2x8x1xf32> to vector<2x8x8xf32>
    %39 = arith.subf %35, %38 : vector<2x8x8xf32>
    %40 = math.exp %39 : vector<2x8x8xf32>
    %cst_21 = arith.constant dense<0.000000e+00> : vector<2x8xf32>
    %41 = vector.multi_reduction <add>, %40, %cst_21 [2] : vector<2x8x8xf32> to vector<2x8xf32>
    %42 = vector.shape_cast %41 : vector<2x8xf32> to vector<2x8x1xf32>
    %43 = tpu.reciprocal %42 {approx = true} : vector<2x8x1xf32> -> vector<2x8x1xf32>
    %44 = vector.broadcast %43 : vector<2x8x1xf32> to vector<2x8x8xf32>
    %45 = arith.mulf %40, %44 : vector<2x8x8xf32>
    %46 = arith.truncf %45 : vector<2x8x8xf32> to vector<2x8x8xbf16>
    "tpu.trace_start"() <{level = 10 : i32, message = "bqk,bkd->bqd"}> : () -> ()
    %cst_22 = arith.constant dense<0.000000e+00> : vector<2x8x8xf32>
    %47 = tpu.matmul %46, %32, %cst_22 {dimension_numbers = #tpu.dot_dimension_numbers<[2], [1], [1], [2], [0, 0, 0, 1, 1, 2], [0], [0]>} : vector<2x8x8xbf16>, vector<2x8x8xbf16>, vector<2x8x8xf32> -> vector<2x8x8xf32>
    "tpu.trace_stop"() : () -> ()
    %48 = arith.truncf %47 : vector<2x8x8xf32> to vector<2x8x8xbf16>
    %49 = vector.extract_strided_slice %25 {offsets = [0, 0, 8], sizes = [2, 8, 8], strides = [1, 1, 1]} : vector<2x8x32xbf16> to vector<2x8x8xbf16>
    %50 = vector.extract_strided_slice %26 {offsets = [0, 0, 8], sizes = [2, 8, 8], strides = [1, 1, 1]} : vector<2x8x64xbf16> to vector<2x8x8xbf16>
    %51 = vector.extract_strided_slice %26 {offsets = [0, 0, 40], sizes = [2, 8, 8], strides = [1, 1, 1]} : vector<2x8x64xbf16> to vector<2x8x8xbf16>
    "tpu.trace_start"() <{level = 10 : i32, message = "bqd,bkd->bqk"}> : () -> ()
    %cst_23 = arith.constant dense<0.000000e+00> : vector<2x8x8xf32>
    %52 = tpu.matmul %49, %50, %cst_23 {dimension_numbers = #tpu.dot_dimension_numbers<[2], [2], [1], [1], [0, 0, 0, 1, 1, 1], [0], [0]>} : vector<2x8x8xbf16>, vector<2x8x8xbf16>, vector<2x8x8xf32> -> vector<2x8x8xf32>
    "tpu.trace_stop"() : () -> ()
    %53 = vector.broadcast %29 : vector<1x8x8xf32> to vector<2x8x8xf32>
    %54 = arith.addf %52, %53 : vector<2x8x8xf32>
    %cst_24 = arith.constant dense<0xFF800000> : vector<2x8xf32>
    %55 = vector.multi_reduction <maximumf>, %54, %cst_24 [2] : vector<2x8x8xf32> to vector<2x8xf32>
    %56 = vector.shape_cast %55 : vector<2x8xf32> to vector<2x8x1xf32>
    %57 = vector.broadcast %56 : vector<2x8x1xf32> to vector<2x8x8xf32>
    %58 = arith.subf %54, %57 : vector<2x8x8xf32>
    %59 = math.exp %58 : vector<2x8x8xf32>
    %cst_25 = arith.constant dense<0.000000e+00> : vector<2x8xf32>
    %60 = vector.multi_reduction <add>, %59, %cst_25 [2] : vector<2x8x8xf32> to vector<2x8xf32>
    %61 = vector.shape_cast %60 : vector<2x8xf32> to vector<2x8x1xf32>
    %62 = tpu.reciprocal %61 {approx = true} : vector<2x8x1xf32> -> vector<2x8x1xf32>
    %63 = vector.broadcast %62 : vector<2x8x1xf32> to vector<2x8x8xf32>
    %64 = arith.mulf %59, %63 : vector<2x8x8xf32>
    %65 = arith.truncf %64 : vector<2x8x8xf32> to vector<2x8x8xbf16>
    "tpu.trace_start"() <{level = 10 : i32, message = "bqk,bkd->bqd"}> : () -> ()
    %cst_26 = arith.constant dense<0.000000e+00> : vector<2x8x8xf32>
    %66 = tpu.matmul %65, %51, %cst_26 {dimension_numbers = #tpu.dot_dimension_numbers<[2], [1], [1], [2], [0, 0, 0, 1, 1, 2], [0], [0]>} : vector<2x8x8xbf16>, vector<2x8x8xbf16>, vector<2x8x8xf32> -> vector<2x8x8xf32>
    "tpu.trace_stop"() : () -> ()
    %67 = arith.truncf %66 : vector<2x8x8xf32> to vector<2x8x8xbf16>
    %68 = vector.extract_strided_slice %25 {offsets = [0, 0, 16], sizes = [2, 8, 8], strides = [1, 1, 1]} : vector<2x8x32xbf16> to vector<2x8x8xbf16>
    %69 = vector.extract_strided_slice %26 {offsets = [0, 0, 16], sizes = [2, 8, 8], strides = [1, 1, 1]} : vector<2x8x64xbf16> to vector<2x8x8xbf16>
    %70 = vector.extract_strided_slice %26 {offsets = [0, 0, 48], sizes = [2, 8, 8], strides = [1, 1, 1]} : vector<2x8x64xbf16> to vector<2x8x8xbf16>
    "tpu.trace_start"() <{level = 10 : i32, message = "bqd,bkd->bqk"}> : () -> ()
    %cst_27 = arith.constant dense<0.000000e+00> : vector<2x8x8xf32>
    %71 = tpu.matmul %68, %69, %cst_27 {dimension_numbers = #tpu.dot_dimension_numbers<[2], [2], [1], [1], [0, 0, 0, 1, 1, 1], [0], [0]>} : vector<2x8x8xbf16>, vector<2x8x8xbf16>, vector<2x8x8xf32> -> vector<2x8x8xf32>
    "tpu.trace_stop"() : () -> ()
    %72 = vector.broadcast %29 : vector<1x8x8xf32> to vector<2x8x8xf32>
    %73 = arith.addf %71, %72 : vector<2x8x8xf32>
    %cst_28 = arith.constant dense<0xFF800000> : vector<2x8xf32>
    %74 = vector.multi_reduction <maximumf>, %73, %cst_28 [2] : vector<2x8x8xf32> to vector<2x8xf32>
    %75 = vector.shape_cast %74 : vector<2x8xf32> to vector<2x8x1xf32>
    %76 = vector.broadcast %75 : vector<2x8x1xf32> to vector<2x8x8xf32>
    %77 = arith.subf %73, %76 : vector<2x8x8xf32>
    %78 = math.exp %77 : vector<2x8x8xf32>
    %cst_29 = arith.constant dense<0.000000e+00> : vector<2x8xf32>
    %79 = vector.multi_reduction <add>, %78, %cst_29 [2] : vector<2x8x8xf32> to vector<2x8xf32>
    %80 = vector.shape_cast %79 : vector<2x8xf32> to vector<2x8x1xf32>
    %81 = tpu.reciprocal %80 {approx = true} : vector<2x8x1xf32> -> vector<2x8x1xf32>
    %82 = vector.broadcast %81 : vector<2x8x1xf32> to vector<2x8x8xf32>
    %83 = arith.mulf %78, %82 : vector<2x8x8xf32>
    %84 = arith.truncf %83 : vector<2x8x8xf32> to vector<2x8x8xbf16>
    "tpu.trace_start"() <{level = 10 : i32, message = "bqk,bkd->bqd"}> : () -> ()
    %cst_30 = arith.constant dense<0.000000e+00> : vector<2x8x8xf32>
    %85 = tpu.matmul %84, %70, %cst_30 {dimension_numbers = #tpu.dot_dimension_numbers<[2], [1], [1], [2], [0, 0, 0, 1, 1, 2], [0], [0]>} : vector<2x8x8xbf16>, vector<2x8x8xbf16>, vector<2x8x8xf32> -> vector<2x8x8xf32>
    "tpu.trace_stop"() : () -> ()
    %86 = arith.truncf %85 : vector<2x8x8xf32> to vector<2x8x8xbf16>
    %87 = vector.extract_strided_slice %25 {offsets = [0, 0, 24], sizes = [2, 8, 8], strides = [1, 1, 1]} : vector<2x8x32xbf16> to vector<2x8x8xbf16>
    %88 = vector.extract_strided_slice %26 {offsets = [0, 0, 24], sizes = [2, 8, 8], strides = [1, 1, 1]} : vector<2x8x64xbf16> to vector<2x8x8xbf16>
    %89 = vector.extract_strided_slice %26 {offsets = [0, 0, 56], sizes = [2, 8, 8], strides = [1, 1, 1]} : vector<2x8x64xbf16> to vector<2x8x8xbf16>
    "tpu.trace_start"() <{level = 10 : i32, message = "bqd,bkd->bqk"}> : () -> ()
    %cst_31 = arith.constant dense<0.000000e+00> : vector<2x8x8xf32>
    %90 = tpu.matmul %87, %88, %cst_31 {dimension_numbers = #tpu.dot_dimension_numbers<[2], [2], [1], [1], [0, 0, 0, 1, 1, 1], [0], [0]>} : vector<2x8x8xbf16>, vector<2x8x8xbf16>, vector<2x8x8xf32> -> vector<2x8x8xf32>
    "tpu.trace_stop"() : () -> ()
    %91 = vector.broadcast %29 : vector<1x8x8xf32> to vector<2x8x8xf32>
    %92 = arith.addf %90, %91 : vector<2x8x8xf32>
    %cst_32 = arith.constant dense<0xFF800000> : vector<2x8xf32>
    %93 = vector.multi_reduction <maximumf>, %92, %cst_32 [2] : vector<2x8x8xf32> to vector<2x8xf32>
    %94 = vector.shape_cast %93 : vector<2x8xf32> to vector<2x8x1xf32>
    %95 = vector.broadcast %94 : vector<2x8x1xf32> to vector<2x8x8xf32>
    %96 = arith.subf %92, %95 : vector<2x8x8xf32>
    %97 = math.exp %96 : vector<2x8x8xf32>
    %cst_33 = arith.constant dense<0.000000e+00> : vector<2x8xf32>
    %98 = vector.multi_reduction <add>, %97, %cst_33 [2] : vector<2x8x8xf32> to vector<2x8xf32>
    %99 = vector.shape_cast %98 : vector<2x8xf32> to vector<2x8x1xf32>
    %100 = tpu.reciprocal %99 {approx = true} : vector<2x8x1xf32> -> vector<2x8x1xf32>
    %101 = vector.broadcast %100 : vector<2x8x1xf32> to vector<2x8x8xf32>
    %102 = arith.mulf %97, %101 : vector<2x8x8xf32>
    %103 = arith.truncf %102 : vector<2x8x8xf32> to vector<2x8x8xbf16>
    "tpu.trace_start"() <{level = 10 : i32, message = "bqk,bkd->bqd"}> : () -> ()
    %cst_34 = arith.constant dense<0.000000e+00> : vector<2x8x8xf32>
    %104 = tpu.matmul %103, %89, %cst_34 {dimension_numbers = #tpu.dot_dimension_numbers<[2], [1], [1], [2], [0, 0, 0, 1, 1, 2], [0], [0]>} : vector<2x8x8xbf16>, vector<2x8x8xbf16>, vector<2x8x8xf32> -> vector<2x8x8xf32>
    "tpu.trace_stop"() : () -> ()
    %105 = arith.truncf %104 : vector<2x8x8xf32> to vector<2x8x8xbf16>
    %106 = tpu.concatenate %48, %67, %86, %105 in 2 : vector<2x8x8xbf16>, vector<2x8x8xbf16>, vector<2x8x8xbf16>, vector<2x8x8xbf16> -> vector<2x8x32xbf16>
    %107 = vector.shape_cast %106 : vector<2x8x32xbf16> to vector<16x32xbf16>
    %c0_35 = arith.constant 0 : index
    %c0_36 = arith.constant 0 : index
    %108 = vector.load %arg9[%c0_35, %c0_36] : memref<32x32xbf16, #tpu.memory_space<vmem>>, vector<32x32xbf16>
    %cst_37 = arith.constant dense<0.000000e+00> : vector<16x32xf32>
    %109 = tpu.matmul %107, %108, %cst_37 {dimension_numbers = #tpu.dot_dimension_numbers<[1], [0], [0], [1], [0, 0, 1, 1], [], []>} : vector<16x32xbf16>, vector<32x32xbf16>, vector<16x32xf32> -> vector<16x32xf32>
    %c0_38 = arith.constant 0 : index
    %c0_39 = arith.constant 0 : index
    %110 = vector.load %arg10[%c0_38, %c0_39] : memref<1x32xf32, #tpu.memory_space<vmem>>, vector<1x32xf32>
    %111 = vector.broadcast %110 : vector<1x32xf32> to vector<16x32xf32>
    %112 = arith.addf %109, %111 : vector<16x32xf32>
    %113 = arith.addf %11, %112 : vector<16x32xf32>
    %c0_40 = arith.constant 0 : index
    %c0_41 = arith.constant 0 : index
    %114 = vector.load %arg11[%c0_40, %c0_41] : memref<1x32xf32, #tpu.memory_space<vmem>>, vector<1x32xf32>
    %c0_42 = arith.constant 0 : index
    %c0_43 = arith.constant 0 : index
    %115 = vector.load %arg12[%c0_42, %c0_43] : memref<1x32xf32, #tpu.memory_space<vmem>>, vector<1x32xf32>
    %cst_44 = arith.constant dense<0.000000e+00> : vector<16xf32>
    %116 = vector.multi_reduction <add>, %113, %cst_44 [1] : vector<16x32xf32> to vector<16xf32>
    %117 = vector.shape_cast %116 : vector<16xf32> to vector<16x1xf32>
    %cst_45 = arith.constant 3.200000e+01 : f32
    %118 = vector.broadcast %cst_45 : f32 to vector<16x1xf32>
    %119 = arith.divf %117, %118 : vector<16x1xf32>
    %120 = vector.broadcast %119 : vector<16x1xf32> to vector<16x32xf32>
    %121 = arith.subf %113, %120 : vector<16x32xf32>
    %122 = arith.mulf %121, %121 : vector<16x32xf32>
    %cst_46 = arith.constant dense<0.000000e+00> : vector<16xf32>
    %123 = vector.multi_reduction <add>, %122, %cst_46 [1] : vector<16x32xf32> to vector<16xf32>
    %124 = vector.shape_cast %123 : vector<16xf32> to vector<16x1xf32>
    %cst_47 = arith.constant 3.200000e+01 : f32
    %125 = vector.broadcast %cst_47 : f32 to vector<16x1xf32>
    %126 = arith.divf %124, %125 : vector<16x1xf32>
    %127 = vector.broadcast %119 : vector<16x1xf32> to vector<16x32xf32>
    %128 = arith.subf %113, %127 : vector<16x32xf32>
    %cst_48 = arith.constant 9.99999974E-6 : f32
    %129 = vector.broadcast %cst_48 : f32 to vector<16x1xf32>
    %130 = arith.addf %126, %129 : vector<16x1xf32>
    %131 = math.rsqrt %130 : vector<16x1xf32>
    %132 = vector.broadcast %131 : vector<16x1xf32> to vector<16x32xf32>
    %133 = arith.mulf %128, %132 : vector<16x32xf32>
    %134 = vector.broadcast %114 : vector<1x32xf32> to vector<16x32xf32>
    %135 = arith.mulf %133, %134 : vector<16x32xf32>
    %136 = vector.broadcast %115 : vector<1x32xf32> to vector<16x32xf32>
    %137 = arith.addf %135, %136 : vector<16x32xf32>
    %138 = arith.truncf %137 : vector<16x32xf32> to vector<16x32xbf16>
    %c0_49 = arith.constant 0 : index
    %c0_50 = arith.constant 0 : index
    %139 = vector.load %arg13[%c0_49, %c0_50] : memref<32x32xbf16, #tpu.memory_space<vmem>>, vector<32x32xbf16>
    %cst_51 = arith.constant dense<0.000000e+00> : vector<16x32xf32>
    %140 = tpu.matmul %138, %139, %cst_51 {dimension_numbers = #tpu.dot_dimension_numbers<[1], [0], [0], [1], [0, 0, 1, 1], [], []>} : vector<16x32xbf16>, vector<32x32xbf16>, vector<16x32xf32> -> vector<16x32xf32>
    %c0_52 = arith.constant 0 : index
    %c0_53 = arith.constant 0 : index
    %141 = vector.load %arg14[%c0_52, %c0_53] : memref<1x32xf32, #tpu.memory_space<vmem>>, vector<1x32xf32>
    %142 = vector.broadcast %141 : vector<1x32xf32> to vector<16x32xf32>
    %143 = arith.addf %140, %142 : vector<16x32xf32>
    %cst_54 = arith.constant 0.000000e+00 : f32
    %144 = vector.broadcast %cst_54 : f32 to vector<16x32xf32>
    %145 = arith.maximumf %143, %144 : vector<16x32xf32>
    %146 = arith.truncf %145 : vector<16x32xf32> to vector<16x32xbf16>
    %c0_55 = arith.constant 0 : index
    %c0_56 = arith.constant 0 : index
    %147 = vector.load %arg15[%c0_55, %c0_56] : memref<32x32xbf16, #tpu.memory_space<vmem>>, vector<32x32xbf16>
    %cst_57 = arith.constant dense<0.000000e+00> : vector<16x32xf32>
    %148 = tpu.matmul %146, %147, %cst_57 {dimension_numbers = #tpu.dot_dimension_numbers<[1], [0], [0], [1], [0, 0, 1, 1], [], []>} : vector<16x32xbf16>, vector<32x32xbf16>, vector<16x32xf32> -> vector<16x32xf32>
    %c0_58 = arith.constant 0 : index
    %c0_59 = arith.constant 0 : index
    %149 = vector.load %arg16[%c0_58, %c0_59] : memref<1x32xf32, #tpu.memory_space<vmem>>, vector<1x32xf32>
    %150 = vector.broadcast %149 : vector<1x32xf32> to vector<16x32xf32>
    %151 = arith.addf %148, %150 : vector<16x32xf32>
    %152 = arith.addf %151, %137 : vector<16x32xf32>
    %c0_60 = arith.constant 0 : index
    %c0_61 = arith.constant 0 : index
    %153 = vector.load %arg17[%c0_60, %c0_61] : memref<1x32xf32, #tpu.memory_space<vmem>>, vector<1x32xf32>
    %c0_62 = arith.constant 0 : index
    %c0_63 = arith.constant 0 : index
    %154 = vector.load %arg18[%c0_62, %c0_63] : memref<1x32xf32, #tpu.memory_space<vmem>>, vector<1x32xf32>
    %cst_64 = arith.constant dense<0.000000e+00> : vector<16xf32>
    %155 = vector.multi_reduction <add>, %152, %cst_64 [1] : vector<16x32xf32> to vector<16xf32>
    %156 = vector.shape_cast %155 : vector<16xf32> to vector<16x1xf32>
    %cst_65 = arith.constant 3.200000e+01 : f32
    %157 = vector.broadcast %cst_65 : f32 to vector<16x1xf32>
    %158 = arith.divf %156, %157 : vector<16x1xf32>
    %159 = vector.broadcast %158 : vector<16x1xf32> to vector<16x32xf32>
    %160 = arith.subf %152, %159 : vector<16x32xf32>
    %161 = arith.mulf %160, %160 : vector<16x32xf32>
    %cst_66 = arith.constant dense<0.000000e+00> : vector<16xf32>
    %162 = vector.multi_reduction <add>, %161, %cst_66 [1] : vector<16x32xf32> to vector<16xf32>
    %163 = vector.shape_cast %162 : vector<16xf32> to vector<16x1xf32>
    %cst_67 = arith.constant 3.200000e+01 : f32
    %164 = vector.broadcast %cst_67 : f32 to vector<16x1xf32>
    %165 = arith.divf %163, %164 : vector<16x1xf32>
    %166 = vector.broadcast %158 : vector<16x1xf32> to vector<16x32xf32>
    %167 = arith.subf %152, %166 : vector<16x32xf32>
    %cst_68 = arith.constant 9.99999974E-6 : f32
    %168 = vector.broadcast %cst_68 : f32 to vector<16x1xf32>
    %169 = arith.addf %165, %168 : vector<16x1xf32>
    %170 = math.rsqrt %169 : vector<16x1xf32>
    %171 = vector.broadcast %170 : vector<16x1xf32> to vector<16x32xf32>
    %172 = arith.mulf %167, %171 : vector<16x32xf32>
    %173 = vector.broadcast %153 : vector<1x32xf32> to vector<16x32xf32>
    %174 = arith.mulf %172, %173 : vector<16x32xf32>
    %175 = vector.broadcast %154 : vector<1x32xf32> to vector<16x32xf32>
    %176 = arith.addf %174, %175 : vector<16x32xf32>
    %c0_69 = arith.constant 0 : index
    %c0_70 = arith.constant 0 : index
    %177 = vector.load %arg19[%c0_69, %c0_70] : memref<1x32xbf16, #tpu.memory_space<vmem>>, vector<1x32xbf16>
    %178 = arith.truncf %176 : vector<16x32xf32> to vector<16x32xbf16>
    %cst_71 = arith.constant dense<0.000000e+00> : vector<1x16xf32>
    %179 = tpu.matmul %177, %178, %cst_71 {dimension_numbers = #tpu.dot_dimension_numbers<[1], [1], [0], [0], [0, 0, 1, 0], [], []>} : vector<1x32xbf16>, vector<16x32xbf16>, vector<1x16xf32> -> vector<1x16xf32>
    %c0_72 = arith.constant 0 : index
    %c0_73 = arith.constant 0 : index
    %180 = vector.load %arg20[%c0_72, %c0_73] : memref<1x1xf32, #tpu.memory_space<vmem>>, vector<1x1xf32>
    %181 = vector.broadcast %180 : vector<1x1xf32> to vector<1x16xf32>
    %182 = arith.addf %179, %181 : vector<1x16xf32>
    %183 = arith.negf %182 : vector<1x16xf32>
    %184 = math.exp %183 : vector<1x16xf32>
    %cst_74 = arith.constant 1.000000e+00 : f32
    %185 = vector.broadcast %cst_74 : f32 to vector<1x16xf32>
    %186 = arith.addf %185, %184 : vector<1x16xf32>
    %187 = arith.divf %185, %186 : vector<1x16xf32>
    %c0_75 = arith.constant 0 : index
    %c0_76 = arith.constant 0 : index
    %c0_77 = arith.constant 0 : index
    %188 = vector.load %arg21[%c0_75, %c0_76, %c0_77] : memref<1x1x16xf32, #tpu.memory_space<vmem>>, vector<1x1x16xf32>
    %189 = vector.shape_cast %188 : vector<1x1x16xf32> to vector<1x16xf32>
    %190 = vector.shape_cast %187 : vector<1x16xf32> to vector<1x1x16xf32>
    tpu.vector_store %arg21[%c0_75, %c0_76, %c0_77], %190 {strides = array<i32>} : memref<1x1x16xf32, #tpu.memory_space<vmem>>, vector<1x1x16xf32>,
    return
  }
  func.func @transform_0(%arg0: i32) -> (i32, i32, i32, i32) {
    %c0_i32 = arith.constant 0 : i32
    %c0_i32_0 = arith.constant 0 : i32
    %c0_i32_1 = arith.constant 0 : i32
    %c0_i32_2 = arith.constant 0 : i32
    return %arg0, %c0_i32, %c0_i32_0, %c0_i32_1 : i32, i32, i32, i32
  }
  func.func @transform_1(%arg0: i32) -> (i32, i32) {
    %c0_i32 = arith.constant 0 : i32
    %c0_i32_0 = arith.constant 0 : i32
    %c0_i32_1 = arith.constant 0 : i32
    return %c0_i32, %c0_i32_0 : i32, i32
  }
  func.func @transform_2(%arg0: i32) -> (i32, i32) {
    %c0_i32 = arith.constant 0 : i32
    %c0_i32_0 = arith.constant 0 : i32
    %c0_i32_1 = arith.constant 0 : i32
    return %c0_i32, %c0_i32_0 : i32, i32
  }
  func.func @transform_3(%arg0: i32) -> (i32, i32) {
    %c0_i32 = arith.constant 0 : i32
    %c0_i32_0 = arith.constant 0 : i32
    %c0_i32_1 = arith.constant 0 : i32
    return %c0_i32, %c0_i32_0 : i32, i32
  }
  func.func @transform_4(%arg0: i32) -> (i32, i32) {
    %c0_i32 = arith.constant 0 : i32
    %c0_i32_0 = arith.constant 0 : i32
    %c0_i32_1 = arith.constant 0 : i32
    return %c0_i32, %c0_i32_0 : i32, i32
  }
  func.func @transform_5(%arg0: i32) -> (i32, i32) {
    %c0_i32 = arith.constant 0 : i32
    %c0_i32_0 = arith.constant 0 : i32
    %c0_i32_1 = arith.constant 0 : i32
    return %c0_i32, %c0_i32_0 : i32, i32
  }
  func.func @transform_6(%arg0: i32) -> (i32, i32) {
    %c0_i32 = arith.constant 0 : i32
    %c0_i32_0 = arith.constant 0 : i32
    %c0_i32_1 = arith.constant 0 : i32
    return %c0_i32, %c0_i32_0 : i32, i32
  }
  func.func @transform_7(%arg0: i32) -> (i32, i32) {
    %c0_i32 = arith.constant 0 : i32
    %c0_i32_0 = arith.constant 0 : i32
    %c0_i32_1 = arith.constant 0 : i32
    return %c0_i32, %c0_i32_0 : i32, i32
  }
  func.func @transform_8(%arg0: i32) -> (i32, i32) {
    %c0_i32 = arith.constant 0 : i32
    %c0_i32_0 = arith.constant 0 : i32
    %c0_i32_1 = arith.constant 0 : i32
    return %c0_i32, %c0_i32_0 : i32, i32
  }
  func.func @transform_9(%arg0: i32) -> (i32, i32) {
    %c0_i32 = arith.constant 0 : i32
    %c0_i32_0 = arith.constant 0 : i32
    %c0_i32_1 = arith.constant 0 : i32
    return %c0_i32, %c0_i32_0 : i32, i32
  }
  func.func @transform_10(%arg0: i32) -> (i32, i32) {
    %c0_i32 = arith.constant 0 : i32
    %c0_i32_0 = arith.constant 0 : i32
    %c0_i32_1 = arith.constant 0 : i32
    return %c0_i32, %c0_i32_0 : i32, i32
  }
  func.func @transform_11(%arg0: i32) -> (i32, i32) {
    %c0_i32 = arith.constant 0 : i32
    %c0_i32_0 = arith.constant 0 : i32
    %c0_i32_1 = arith.constant 0 : i32
    return %c0_i32, %c0_i32_0 : i32, i32
  }
  func.func @transform_12(%arg0: i32) -> (i32, i32) {
    %c0_i32 = arith.constant 0 : i32
    %c0_i32_0 = arith.constant 0 : i32
    %c0_i32_1 = arith.constant 0 : i32
    return %c0_i32, %c0_i32_0 : i32, i32
  }
  func.func @transform_13(%arg0: i32) -> (i32, i32) {
    %c0_i32 = arith.constant 0 : i32
    %c0_i32_0 = arith.constant 0 : i32
    %c0_i32_1 = arith.constant 0 : i32
    return %c0_i32, %c0_i32_0 : i32, i32
  }
  func.func @transform_14(%arg0: i32) -> (i32, i32) {
    %c0_i32 = arith.constant 0 : i32
    %c0_i32_0 = arith.constant 0 : i32
    %c0_i32_1 = arith.constant 0 : i32
    return %c0_i32, %c0_i32_0 : i32, i32
  }
  func.func @transform_15(%arg0: i32) -> (i32, i32) {
    %c0_i32 = arith.constant 0 : i32
    %c0_i32_0 = arith.constant 0 : i32
    %c0_i32_1 = arith.constant 0 : i32
    return %c0_i32, %c0_i32_0 : i32, i32
  }
  func.func @transform_16(%arg0: i32) -> (i32, i32) {
    %c0_i32 = arith.constant 0 : i32
    %c0_i32_0 = arith.constant 0 : i32
    %c0_i32_1 = arith.constant 0 : i32
    return %c0_i32, %c0_i32_0 : i32, i32
  }
  func.func @transform_17(%arg0: i32) -> (i32, i32) {
    %c0_i32 = arith.constant 0 : i32
    %c0_i32_0 = arith.constant 0 : i32
    %c0_i32_1 = arith.constant 0 : i32
    return %c0_i32, %c0_i32_0 : i32, i32
  }
  func.func @transform_18(%arg0: i32) -> (i32, i32) {
    %c0_i32 = arith.constant 0 : i32
    %c0_i32_0 = arith.constant 0 : i32
    %c0_i32_1 = arith.constant 0 : i32
    return %c0_i32, %c0_i32_0 : i32, i32
  }
  func.func @transform_19(%arg0: i32) -> (i32, i32) {
    %c0_i32 = arith.constant 0 : i32
    %c0_i32_0 = arith.constant 0 : i32
    %c0_i32_1 = arith.constant 0 : i32
    return %c0_i32, %c0_i32_0 : i32, i32
  }
  func.func @transform_20(%arg0: i32) -> (i32, i32, i32) {
    %c0_i32 = arith.constant 0 : i32
    %c0_i32_0 = arith.constant 0 : i32
    %c0_i32_1 = arith.constant 0 : i32
    return %arg0, %c0_i32, %c0_i32_0 : i32, i32, i32
  }
}

</mosaic_0001>

<llo_original>
// kernel: tpu_custom_call.1
$region0: #{tpu_custom_call.1}
  #allocation0 [shape = 'u32[]', space=smem, size = 0x4, offset = 0x4, fixed_abs, tag = 'smem constant byte address 0x4 - core index']
  #allocation1 [shape = 'u32[144,128]{1,0:T(1,128)}', space=vmem, size = 0x12000, scoped, tag = 'internal scratch']
  #allocation2 [shape = 'f32[1,1]{1,0:T(1,128)S(1)}', space=vmem, size = 0x200, scoped, tag = 'scoped memory for tpu_custom_call.1']
  %s0 = inlined_call_operand.hbm [shape: bf16[2,2,8,32], index: 0, kind: input, shape index: {}]
  %s1 = inlined_call_operand.hbm [shape: bf16[8,8], index: 1, kind: input, shape index: {}]
  %s2 = inlined_call_operand.hbm [shape: bf16[32,32], index: 2, kind: input, shape index: {}]
  %s3 = inlined_call_operand.hbm [shape: f32[1,32], index: 3, kind: input, shape index: {}]
  %s4 = inlined_call_operand.hbm [shape: bf16[32,32], index: 4, kind: input, shape index: {}]
  %s5 = inlined_call_operand.hbm [shape: f32[1,32], index: 5, kind: input, shape index: {}]
  %s6 = inlined_call_operand.hbm [shape: bf16[32,64], index: 6, kind: input, shape index: {}]
  %s7 = inlined_call_operand.hbm [shape: f32[1,64], index: 7, kind: input, shape index: {}]
  %s8 = inlined_call_operand.vmem [shape: bf16[32,32], index: 8, kind: input, shape index: {}]
  %s9 = inlined_call_operand.vmem [shape: f32[1,32], index: 9, kind: input, shape index: {}]
  %s10 = inlined_call_operand.vmem [shape: f32[1,32], index: 10, kind: input, shape index: {}]
  %s11 = inlined_call_operand.vmem [shape: f32[1,32], index: 11, kind: input, shape index: {}]
  %s12 = inlined_call_operand.hbm [shape: bf16[32,32], index: 12, kind: input, shape index: {}]
  %s13 = inlined_call_operand.vmem [shape: f32[1,32], index: 13, kind: input, shape index: {}]
  %s14 = inlined_call_operand.hbm [shape: bf16[32,32], index: 14, kind: input, shape index: {}]
  %s15 = inlined_call_operand.vmem [shape: f32[1,32], index: 15, kind: input, shape index: {}]
  %s16 = inlined_call_operand.vmem [shape: f32[1,32], index: 16, kind: input, shape index: {}]
  %s17 = inlined_call_operand.vmem [shape: f32[1,32], index: 17, kind: input, shape index: {}]
  %s18 = inlined_call_operand.vmem [shape: bf16[1,32], index: 18, kind: input, shape index: {}]
  %s19 = inlined_call_operand.<no memory space> [shape: f32[1,1], index: 19, kind: input, shape index: {}]
  %s20 = inlined_call_operand.hbm [shape: f32[1,1,16], index: 20, kind: output, shape index: {}]
  %s21 = sld [smem:[#allocation0]]
  $region130: #{tpu_custom_call.1} parent=0
    _
  %s23 = ssub.s32 1, %s21
  %s24 = scalar_select 0, %s23, %s21
  %v25 = vstv %s19
  %26 = vst [vmem:[#allocation2] sm:$0x1] %v25
  $region1: #{tpu_custom_call.1} parent=0
    #allocation3 [shape = 'u8[8192]{0}', space=vmem, size = 0x2000, scoped, tag = 'input window, operand 0, single buffered']
    #allocation4 [shape = 's32[1]{0}', space=sflag, size = 0x4, scoped, tag = 'scoped memory for tpu_custom_call.1']
    #allocation5 [shape = 's32[1]{0}', space=sflag, size = 0x4, scoped, tag = 'scoped memory for tpu_custom_call.1']
    #allocation6 [shape = 'u8[2048]{0}', space=vmem, size = 0x800, scoped, tag = 'input window, operand 1, single buffered']
    #allocation7 [shape = 's32[1]{0}', space=sflag, size = 0x4, scoped, tag = 'scoped memory for tpu_custom_call.1']
    #allocation8 [shape = 'u8[8192]{0}', space=vmem, size = 0x2000, scoped, tag = 'input window, operand 2, single buffered']
    #allocation9 [shape = 'u8[512]{0}', space=vmem, size = 0x400, scoped, tag = 'input window, operand 3, single buffered']
    #allocation10 [shape = 's32[1]{0}', space=sflag, size = 0x4, scoped, tag = 'scoped memory for tpu_custom_call.1']
    #allocation11 [shape = 'u8[8192]{0}', space=vmem, size = 0x2000, scoped, tag = 'input window, operand 4, single buffered']
    #allocation12 [shape = 'u8[512]{0}', space=vmem, size = 0x400, scoped, tag = 'input window, operand 5, single buffered']
    #allocation13 [shape = 's32[1]{0}', space=sflag, size = 0x4, scoped, tag = 'scoped memory for tpu_custom_call.1']
    #allocation14 [shape = 'u8[8192]{0}', space=vmem, size = 0x2000, scoped, tag = 'input window, operand 6, single buffered']
    #allocation15 [shape = 'u8[512]{0}', space=vmem, size = 0x400, scoped, tag = 'input window, operand 7, single buffered']
    #allocation16 [shape = 's32[1]{0}', space=sflag, size = 0x4, scoped, tag = 'scoped memory for tpu_custom_call.1']
    #allocation17 [shape = 'u8[8192]{0}', space=vmem, size = 0x2000, scoped, tag = 'input window, operand 12, single buffered']
    #allocation18 [shape = 'u8[8192]{0}', space=vmem, size = 0x2000, scoped, tag = 'input window, operand 14, single buffered']
    #allocation19 [shape = 's32[1]{0}', space=sflag, size = 0x4, scoped, tag = 'scoped memory for tpu_custom_call.1']
    #allocation20 [shape = 'u8[512]{0}', space=vmem, size = 0x400, scoped, tag = 'output window, operand 0, single buffered']
    %27 = vsyncpa [#allocation4], 0
    %28 = vsyncpa [#allocation7], 0
    %29 = vsyncpa [#allocation10], 0
    %30 = vsyncpa [#allocation13], 0
    %31 = vsyncpa [#allocation16], 0
    %32 = vsyncpa [#allocation19], 0
    %33 = vsyncpa [#allocation5], 0
    // Predicated region
    $region2: #{tpu_custom_call.1} parent=1 // pred_check
      _
    $region3: #{tpu_custom_call.1} parent=1 // pred_check_branch
      %35 = sbr.rel (0) target = $region5
    $region4: #{tpu_custom_call.1} parent=1 // pred_region
      %s37 = ssub.s32 256, 256
      %38 = vsyncadd [#allocation4], %s37
      %s39 = sshll.u32 [#allocation3], 4
      %s40 = int_to_ptr.vmem [resolvable:$true] %s39
      %45 = dma.hbm_to_vmem [thread:$0]  %s0, 256, %s40, [#allocation4], 64, 64, 4
    $region5: #{tpu_custom_call.1} parent=1 // pred_fallthru
      _
    // Predicated region
    $region6: #{tpu_custom_call.1} parent=1 // pred_check
      _
    $region7: #{tpu_custom_call.1} parent=1 // pred_check_branch
      %47 = sbr.rel (0) target = $region9
    $region8: #{tpu_custom_call.1} parent=1 // pred_region
      %s49 = ssub.s32 64, 64
      %50 = vsyncadd [#allocation7], %s49
      %s52 = sshll.u32 [#allocation6], 4
      %s53 = int_to_ptr.vmem [resolvable:$true] %s52
      %55 = dma.hbm_to_vmem [thread:$0]  %s1, 64, %s53, [#allocation7]
    $region9: #{tpu_custom_call.1} parent=1 // pred_fallthru
      _
    // Predicated region
    $region10: #{tpu_custom_call.1} parent=1 // pred_check
      _
    $region11: #{tpu_custom_call.1} parent=1 // pred_check_branch
      %57 = sbr.rel (0) target = $region13
    $region12: #{tpu_custom_call.1} parent=1 // pred_region
      %s59 = ssub.s32 256, 256
      %60 = vsyncadd [#allocation7], %s59
      %s61 = sshll.u32 [#allocation8], 4
      %s62 = int_to_ptr.vmem [resolvable:$true] %s61
      %67 = dma.hbm_to_vmem [thread:$0]  %s2, 256, %s62, [#allocation7], 64, 64, 4
    $region13: #{tpu_custom_call.1} parent=1 // pred_fallthru
      _
    // Predicated region
    $region14: #{tpu_custom_call.1} parent=1 // pred_check
      _
    $region15: #{tpu_custom_call.1} parent=1 // pred_check_branch
      %69 = sbr.rel (0) target = $region17
    $region16: #{tpu_custom_call.1} parent=1 // pred_region
      %s71 = ssub.s32 16, 16
      %72 = vsyncadd [#allocation10], %s71
      %s74 = sshll.u32 [#allocation9], 4
      %s75 = int_to_ptr.vmem [resolvable:$true] %s74
      %77 = dma.hbm_to_vmem [thread:$0]  %s3, 16, %s75, [#allocation10]
    $region17: #{tpu_custom_call.1} parent=1 // pred_fallthru
      _
    // Predicated region
    $region18: #{tpu_custom_call.1} parent=1 // pred_check
      _
    $region19: #{tpu_custom_call.1} parent=1 // pred_check_branch
      %79 = sbr.rel (0) target = $region21
    $region20: #{tpu_custom_call.1} parent=1 // pred_region
      %s81 = ssub.s32 256, 256
      %82 = vsyncadd [#allocation10], %s81
      %s83 = sshll.u32 [#allocation11], 4
      %s84 = int_to_ptr.vmem [resolvable:$true] %s83
      %89 = dma.hbm_to_vmem [thread:$0]  %s4, 256, %s84, [#allocation10], 64, 64, 4
    $region21: #{tpu_custom_call.1} parent=1 // pred_fallthru
      _
    // Predicated region
    $region22: #{tpu_custom_call.1} parent=1 // pred_check
      _
    $region23: #{tpu_custom_call.1} parent=1 // pred_check_branch
      %91 = sbr.rel (0) target = $region25
    $region24: #{tpu_custom_call.1} parent=1 // pred_region
      %s93 = ssub.s32 16, 16
      %94 = vsyncadd [#allocation13], %s93
      %s96 = sshll.u32 [#allocation12], 4
      %s97 = int_to_ptr.vmem [resolvable:$true] %s96
      %99 = dma.hbm_to_vmem [thread:$0]  %s5, 16, %s97, [#allocation13]
    $region25: #{tpu_custom_call.1} parent=1 // pred_fallthru
      _
    // Predicated region
    $region26: #{tpu_custom_call.1} parent=1 // pred_check
      _
    $region27: #{tpu_custom_call.1} parent=1 // pred_check_branch
      %101 = sbr.rel (0) target = $region29
    $region28: #{tpu_custom_call.1} parent=1 // pred_region
      %s103 = ssub.s32 256, 256
      %104 = vsyncadd [#allocation13], %s103
      %s105 = sshll.u32 [#allocation14], 4
      %s106 = int_to_ptr.vmem [resolvable:$true] %s105
      %111 = dma.hbm_to_vmem [thread:$0]  %s6, 256, %s106, [#allocation13], 64, 64, 4
    $region29: #{tpu_custom_call.1} parent=1 // pred_fallthru
      _
    // Predicated region
    $region30: #{tpu_custom_call.1} parent=1 // pred_check
      _
    $region31: #{tpu_custom_call.1} parent=1 // pred_check_branch
      %113 = sbr.rel (0) target = $region33
    $region32: #{tpu_custom_call.1} parent=1 // pred_region
      %s115 = ssub.s32 16, 16
      %116 = vsyncadd [#allocation16], %s115
      %s118 = sshll.u32 [#allocation15], 4
      %s119 = int_to_ptr.vmem [resolvable:$true] %s118
      %121 = dma.hbm_to_vmem [thread:$0]  %s7, 16, %s119, [#allocation16]
    $region33: #{tpu_custom_call.1} parent=1 // pred_fallthru
      _
    // Predicated region
    $region34: #{tpu_custom_call.1} parent=1 // pred_check
      _
    $region35: #{tpu_custom_call.1} parent=1 // pred_check_branch
      %123 = sbr.rel (0) target = $region37
    $region36: #{tpu_custom_call.1} parent=1 // pred_region
      _
    $region37: #{tpu_custom_call.1} parent=1 // pred_fallthru
      _
    // Predicated region
    $region38: #{tpu_custom_call.1} parent=1 // pred_check
      _
    $region39: #{tpu_custom_call.1} parent=1 // pred_check_branch
      %125 = sbr.rel (0) target = $region41
    $region40: #{tpu_custom_call.1} parent=1 // pred_region
      _
    $region41: #{tpu_custom_call.1} parent=1 // pred_fallthru
      _
    // Predicated region
    $region42: #{tpu_custom_call.1} parent=1 // pred_check
      _
    $region43: #{tpu_custom_call.1} parent=1 // pred_check_branch
      %127 = sbr.rel (0) target = $region45
    $region44: #{tpu_custom_call.1} parent=1 // pred_region
      _
    $region45: #{tpu_custom_call.1} parent=1 // pred_fallthru
      _
    // Predicated region
    $region46: #{tpu_custom_call.1} parent=1 // pred_check
      _
    $region47: #{tpu_custom_call.1} parent=1 // pred_check_branch
      %129 = sbr.rel (0) target = $region49
    $region48: #{tpu_custom_call.1} parent=1 // pred_region
      _
    $region49: #{tpu_custom_call.1} parent=1 // pred_fallthru
      _
    // Predicated region
    $region50: #{tpu_custom_call.1} parent=1 // pred_check
      _
    $region51: #{tpu_custom_call.1} parent=1 // pred_check_branch
      %131 = sbr.rel (0) target = $region53
    $region52: #{tpu_custom_call.1} parent=1 // pred_region
      %s133 = ssub.s32 256, 256
      %134 = vsyncadd [#allocation16], %s133
      %s135 = sshll.u32 [#allocation17], 4
      %s136 = int_to_ptr.vmem [resolvable:$true] %s135
      %141 = dma.hbm_to_vmem [thread:$0]  %s12, 256, %s136, [#allocation16], 64, 64, 4
    $region53: #{tpu_custom_call.1} parent=1 // pred_fallthru
      _
    // Predicated region
    $region54: #{tpu_custom_call.1} parent=1 // pred_check
      _
    $region55: #{tpu_custom_call.1} parent=1 // pred_check_branch
      %143 = sbr.rel (0) target = $region57
    $region56: #{tpu_custom_call.1} parent=1 // pred_region
      _
    $region57: #{tpu_custom_call.1} parent=1 // pred_fallthru
      _
    // Predicated region
    $region58: #{tpu_custom_call.1} parent=1 // pred_check
      _
    $region59: #{tpu_custom_call.1} parent=1 // pred_check_branch
      %145 = sbr.rel (0) target = $region61
    $region60: #{tpu_custom_call.1} parent=1 // pred_region
      %s147 = ssub.s32 256, 256
      %148 = vsyncadd [#allocation19], %s147
      %s149 = sshll.u32 [#allocation18], 4
      %s150 = int_to_ptr.vmem [resolvable:$true] %s149
      %155 = dma.hbm_to_vmem [thread:$0]  %s14, 256, %s150, [#allocation19], 64, 64, 4
    $region61: #{tpu_custom_call.1} parent=1 // pred_fallthru
      _
    // Predicated region
    $region62: #{tpu_custom_call.1} parent=1 // pred_check
      _
    $region63: #{tpu_custom_call.1} parent=1 // pred_check_branch
      %157 = sbr.rel (0) target = $region65
    $region64: #{tpu_custom_call.1} parent=1 // pred_region
      _
    $region65: #{tpu_custom_call.1} parent=1 // pred_fallthru
      _
    // Predicated region
    $region66: #{tpu_custom_call.1} parent=1 // pred_check
      _
    $region67: #{tpu_custom_call.1} parent=1 // pred_check_branch
      %159 = sbr.rel (0) target = $region69
    $region68: #{tpu_custom_call.1} parent=1 // pred_region
      _
    $region69: #{tpu_custom_call.1} parent=1 // pred_fallthru
      _
    // Predicated region
    $region70: #{tpu_custom_call.1} parent=1 // pred_check
      _
    $region71: #{tpu_custom_call.1} parent=1 // pred_check_branch
      %161 = sbr.rel (0) target = $region73
    $region72: #{tpu_custom_call.1} parent=1 // pred_region
      _
    $region73: #{tpu_custom_call.1} parent=1 // pred_fallthru
      _
    // Predicated region
    $region74: #{tpu_custom_call.1} parent=1 // pred_check
      _
    $region75: #{tpu_custom_call.1} parent=1 // pred_check_branch
      %163 = sbr.rel (0) target = $region77
    $region76: #{tpu_custom_call.1} parent=1 // pred_region
      _
    $region77: #{tpu_custom_call.1} parent=1 // pred_fallthru
      _
    // Predicated region
    $region78: #{tpu_custom_call.1} parent=1 // pred_check
      _
    $region79: #{tpu_custom_call.1} parent=1 // pred_check_branch
      %165 = sbr.rel (0) target = $region81
    $region80: #{tpu_custom_call.1} parent=1 // pred_region
      _
    $region81: #{tpu_custom_call.1} parent=1 // pred_fallthru
      _
    // Predicated region
    $region82: #{tpu_custom_call.1} parent=1 // pred_check
      _
    $region83: #{tpu_custom_call.1} parent=1 // pred_check_branch
      %167 = sbr.rel (0) target = $region85
    $region84: #{tpu_custom_call.1} parent=1 // pred_region
      %168 = dma.done [#allocation4], 256
    $region85: #{tpu_custom_call.1} parent=1 // pred_fallthru
      _
    // Predicated region
    $region86: #{tpu_custom_call.1} parent=1 // pred_check
      _
    $region87: #{tpu_custom_call.1} parent=1 // pred_check_branch
      %170 = sbr.rel (0) target = $region89
    $region88: #{tpu_custom_call.1} parent=1 // pred_region
      %171 = dma.done [#allocation7], 64
    $region89: #{tpu_custom_call.1} parent=1 // pred_fallthru
      _
    // Predicated region
    $region90: #{tpu_custom_call.1} parent=1 // pred_check
      _
    $region91: #{tpu_custom_call.1} parent=1 // pred_check_branch
      %173 = sbr.rel (0) target = $region93
    $region92: #{tpu_custom_call.1} parent=1 // pred_region
      %174 = dma.done [#allocation7], 256
    $region93: #{tpu_custom_call.1} parent=1 // pred_fallthru
      _
    // Predicated region
    $region94: #{tpu_custom_call.1} parent=1 // pred_check
      _
    $region95: #{tpu_custom_call.1} parent=1 // pred_check_branch
      %176 = sbr.rel (0) target = $region97
    $region96: #{tpu_custom_call.1} parent=1 // pred_region
      %177 = dma.done [#allocation10], 16
    $region97: #{tpu_custom_call.1} parent=1 // pred_fallthru
      _
    // Predicated region
    $region98: #{tpu_custom_call.1} parent=1 // pred_check
      _
    $region99: #{tpu_custom_call.1} parent=1 // pred_check_branch
      %179 = sbr.rel (0) target = $region101
    $region100: #{tpu_custom_call.1} parent=1 // pred_region
      %180 = dma.done [#allocation10], 256
    $region101: #{tpu_custom_call.1} parent=1 // pred_fallthru
      _
    // Predicated region
    $region102: #{tpu_custom_call.1} parent=1 // pred_check
      _
    $region103: #{tpu_custom_call.1} parent=1 // pred_check_branch
      %182 = sbr.rel (0) target = $region105
    $region104: #{tpu_custom_call.1} parent=1 // pred_region
      %183 = dma.done [#allocation13], 16
    $region105: #{tpu_custom_call.1} parent=1 // pred_fallthru
      _
    // Predicated region
    $region106: #{tpu_custom_call.1} parent=1 // pred_check
      _
    $region107: #{tpu_custom_call.1} parent=1 // pred_check_branch
      %185 = sbr.rel (0) target = $region109
    $region108: #{tpu_custom_call.1} parent=1 // pred_region
      %186 = dma.done [#allocation13], 256
    $region109: #{tpu_custom_call.1} parent=1 // pred_fallthru
      _
    // Predicated region
    $region110: #{tpu_custom_call.1} parent=1 // pred_check
      _
    $region111: #{tpu_custom_call.1} parent=1 // pred_check_branch
      %188 = sbr.rel (0) target = $region113
    $region112: #{tpu_custom_call.1} parent=1 // pred_region
      %189 = dma.done [#allocation16], 16
    $region113: #{tpu_custom_call.1} parent=1 // pred_fallthru
      _
    // Predicated region
    $region114: #{tpu_custom_call.1} parent=1 // pred_check
      _
    $region115: #{tpu_custom_call.1} parent=1 // pred_check_branch
      %191 = sbr.rel (0) target = $region117
    $region116: #{tpu_custom_call.1} parent=1 // pred_region
      %192 = dma.done [#allocation16], 256
    $region117: #{tpu_custom_call.1} parent=1 // pred_fallthru
      _
    // Predicated region
    $region118: #{tpu_custom_call.1} parent=1 // pred_check
      _
    $region119: #{tpu_custom_call.1} parent=1 // pred_check_branch
      %194 = sbr.rel (0) target = $region121
    $region120: #{tpu_custom_call.1} parent=1 // pred_region
      %195 = dma.done [#allocation19], 256
    $region121: #{tpu_custom_call.1} parent=1 // pred_fallthru
      _
    %v197 = vld [vmem:[#allocation3] sm:$0xf]
    %v198 = vld [vmem:[#allocation3 + $0x4] sm:$0xf]
    %v199 = vld [vmem:[#allocation3 + $0x8] sm:$0xf]
    %v200 = vld [vmem:[#allocation3 + $0xc] sm:$0xf]
    %v201 = vld [vmem:[#allocation8] sm:$0xf]
    %v202 = vld [vmem:[#allocation8 + $0x4] sm:$0xf]
    %v203 = vld [vmem:[#allocation8 + $0x8] sm:$0xf]
    %v204 = vld [vmem:[#allocation8 + $0xc] sm:$0xf]
    %v205 = vld [vmem:[#allocation9] sm:$0x1]
    %v207 = vlaneseq
    %v208 = vshrl.u32 %v207, 7
    %v209 = vsub.s32 0, %v208
    %v210 = vrot.slane %v205, %v209
    %v214 = vunpack.c.l.b16 %v198
    %v215 = vunpack.c.l.b16 %v200
    %v216 = vpack.c.b16 %v215, %v214
    %v221 = vunpack.c.l.b16 %v201
    %v222 = vunpack.c.l.b16 %v202
    %v223 = vunpack.c.l.b16 %v203
    %v224 = vunpack.c.l.b16 %v204
    %v225 = vpack.c.b16 %v222, %v221
    %v226 = vpack.c.b16 %v224, %v223
    %vm229 = vcmask 261120
    %v231 = vsel %vm229, %v216, 0
    %233 = vmatprep.subr.bf16.mxu0 0
    %234 = vmatpush1.bf16.msra.mxu0 0
    %235 = vmatprep.subr.bf16.mxu0 0
    %236 = vmatpush1.bf16.msra.mxu0 0
    %237 = vmatprep.subr.bf16.mxu0 0
    %238 = vmatpush1.bf16.msra.mxu0 0
    %239 = vmatprep.subr.bf16.mxu0 0
    %240 = vmatpush1.bf16.msra.mxu0 0
    %241 = vmatprep.subr.bf16.mxu0 0
    %242 = vmatpush1.bf16.msra.mxu0 0
    %243 = vmatprep.subr.bf16.mxu0 0
    %244 = vmatpush1.bf16.msra.mxu0 0
    %245 = vmatprep.subr.bf16.mxu0 0
    %246 = vmatpush1.bf16.msra.mxu0 %v226
    %247 = vmatprep.subr.bf16.mxu0 0
    %248 = vmatpush1.bf16.msra.mxu0 %v225
    %249 = vmatprep.subr.bf16.mxu0 0
    %250 = vmatpush2.bf16.msra.mxu0 0
    %251 = vmatprep.subr.bf16.mxu0 0
    %252 = vmatpush2.bf16.msra.mxu0 0
    %253 = vmatprep.subr.bf16.mxu0 0
    %254 = vmatpush2.bf16.msra.mxu0 0
    %255 = vmatprep.subr.bf16.mxu0 0
    %256 = vmatpush2.bf16.msra.mxu0 0
    %257 = vmatprep.subr.bf16.mxu0 0
    %258 = vmatpush2.bf16.msra.mxu0 0
    %259 = vmatprep.subr.bf16.mxu0 0
    %260 = vmatpush2.bf16.msra.mxu0 0
    %261 = vmatprep.subr.bf16.mxu0 0
    %262 = vmatpush2.bf16.msra.mxu0 0
    %263 = vmatprep.subr.bf16.mxu0 0
    %264 = vmatpush2.bf16.msra.mxu0 0
    %265 = vmatprep.mubr.bf16.mxu0 0
    %266 = vmatmul.mubr.bf16.gmra.mxu0 %v231
    %v267 = vpop.f32.mrf.mxu0
    %v268 = vadd.f32 %v210, %v267
    %v269 = vpop.f32.mrf.mxu0
    %v270 = vpop.f32.mrf.mxu0
    %v271 = vadd.f32 %v210, %v270
    %v272 = vpop.f32.mrf.mxu0
    %273 = vdwg.mxu0
    %v274 = vpack.c.bf16 %v271, %v268
    %v275 = vld [vmem:[#allocation11] sm:$0xf]
    %v276 = vld [vmem:[#allocation11 + $0x4] sm:$0xf]
    %v277 = vld [vmem:[#allocation11 + $0x8] sm:$0xf]
    %v278 = vld [vmem:[#allocation11 + $0xc] sm:$0xf]
    %v279 = vld [vmem:[#allocation12] sm:$0x1]
    %v281 = vlaneseq
    %v282 = vshrl.u32 %v281, 7
    %v283 = vsub.s32 0, %v282
    %v284 = vrot.slane %v279, %v283
    %v290 = vunpack.c.l.b16 %v275
    %v291 = vunpack.c.l.b16 %v276
    %v292 = vunpack.c.l.b16 %v277
    %v293 = vunpack.c.l.b16 %v278
    %v294 = vpack.c.b16 %v291, %v290
    %v295 = vpack.c.b16 %v293, %v292
    %v299 = vsel %vm229, %v274, 0
    %301 = vmatprep.subr.bf16.mxu0 0
    %302 = vmatpush1.bf16.msra.mxu0 0
    %303 = vmatprep.subr.bf16.mxu0 0
    %304 = vmatpush1.bf16.msra.mxu0 0
    %305 = vmatprep.subr.bf16.mxu0 0
    %306 = vmatpush1.bf16.msra.mxu0 0
    %307 = vmatprep.subr.bf16.mxu0 0
    %308 = vmatpush1.bf16.msra.mxu0 0
    %309 = vmatprep.subr.bf16.mxu0 0
    %310 = vmatpush1.bf16.msra.mxu0 0
    %311 = vmatprep.subr.bf16.mxu0 0
    %312 = vmatpush1.bf16.msra.mxu0 0
    %313 = vmatprep.subr.bf16.mxu0 0
    %314 = vmatpush1.bf16.msra.mxu0 %v295
    %315 = vmatprep.subr.bf16.mxu0 0
    %316 = vmatpush1.bf16.msra.mxu0 %v294
    %317 = vmatprep.subr.bf16.mxu0 0
    %318 = vmatpush2.bf16.msra.mxu0 0
    %319 = vmatprep.subr.bf16.mxu0 0
    %320 = vmatpush2.bf16.msra.mxu0 0
    %321 = vmatprep.subr.bf16.mxu0 0
    %322 = vmatpush2.bf16.msra.mxu0 0
    %323 = vmatprep.subr.bf16.mxu0 0
    %324 = vmatpush2.bf16.msra.mxu0 0
    %325 = vmatprep.subr.bf16.mxu0 0
    %326 = vmatpush2.bf16.msra.mxu0 0
    %327 = vmatprep.subr.bf16.mxu0 0
    %328 = vmatpush2.bf16.msra.mxu0 0
    %329 = vmatprep.subr.bf16.mxu0 0
    %330 = vmatpush2.bf16.msra.mxu0 0
    %331 = vmatprep.subr.bf16.mxu0 0
    %332 = vmatpush2.bf16.msra.mxu0 0
    %333 = vmatprep.mubr.bf16.mxu0 0
    %334 = vmatmul.mubr.bf16.gmra.mxu0 %v299
    %v335 = vpop.f32.mrf.mxu0
    %v336 = vadd.f32 %v284, %v335
    %v337 = vpop.f32.mrf.mxu0
    %v338 = vpop.f32.mrf.mxu0
    %v339 = vadd.f32 %v284, %v338
    %v340 = vpop.f32.mrf.mxu0
    %341 = vdwg.mxu0
    %v342 = vpack.c.bf16 %v339, %v336
    %v343 = vld [vmem:[#allocation14] sm:$0xf]
    %v344 = vld [vmem:[#allocation14 + $0x4] sm:$0xf]
    %v345 = vld [vmem:[#allocation14 + $0x8] sm:$0xf]
    %v346 = vld [vmem:[#allocation14 + $0xc] sm:$0xf]
    %v347 = vld [vmem:[#allocation15] sm:$0x1]
    %v349 = vlaneseq
    %v350 = vshrl.u32 %v349, 7
    %v351 = vsub.s32 0, %v350
    %v352 = vrot.slane %v347, %v351
    %v356 = vunpack.c.l.b16 %v197
    %v357 = vunpack.c.l.b16 %v199
    %v358 = vpack.c.b16 %v357, %v356
    %v363 = vunpack.c.l.b16 %v343
    %v364 = vunpack.c.l.b16 %v344
    %v365 = vunpack.c.l.b16 %v345
    %v366 = vunpack.c.l.b16 %v346
    %v367 = vpack.c.b16 %v364, %v363
    %v368 = vpack.c.b16 %v366, %v365
    %v372 = vsel %vm229, %v358, 0
    %374 = vmatprep.subr.bf16.mxu0 0
    %375 = vmatpush1.bf16.msra.mxu0 0
    %376 = vmatprep.subr.bf16.mxu0 0
    %377 = vmatpush1.bf16.msra.mxu0 0
    %378 = vmatprep.subr.bf16.mxu0 0
    %379 = vmatpush1.bf16.msra.mxu0 0
    %380 = vmatprep.subr.bf16.mxu0 0
    %381 = vmatpush1.bf16.msra.mxu0 0
    %382 = vmatprep.subr.bf16.mxu0 0
    %383 = vmatpush1.bf16.msra.mxu0 0
    %384 = vmatprep.subr.bf16.mxu0 0
    %385 = vmatpush1.bf16.msra.mxu0 0
    %386 = vmatprep.subr.bf16.mxu0 0
    %387 = vmatpush1.bf16.msra.mxu0 %v368
    %388 = vmatprep.subr.bf16.mxu0 0
    %389 = vmatpush1.bf16.msra.mxu0 %v367
    %390 = vmatprep.subr.bf16.mxu0 0
    %391 = vmatpush2.bf16.msra.mxu0 0
    %392 = vmatprep.subr.bf16.mxu0 0
    %393 = vmatpush2.bf16.msra.mxu0 0
    %394 = vmatprep.subr.bf16.mxu0 0
    %395 = vmatpush2.bf16.msra.mxu0 0
    %396 = vmatprep.subr.bf16.mxu0 0
    %397 = vmatpush2.bf16.msra.mxu0 0
    %398 = vmatprep.subr.bf16.mxu0 0
    %399 = vmatpush2.bf16.msra.mxu0 0
    %400 = vmatprep.subr.bf16.mxu0 0
    %401 = vmatpush2.bf16.msra.mxu0 0
    %402 = vmatprep.subr.bf16.mxu0 0
    %403 = vmatpush2.bf16.msra.mxu0 0
    %404 = vmatprep.subr.bf16.mxu0 0
    %405 = vmatpush2.bf16.msra.mxu0 0
    %406 = vmatprep.mubr.bf16.mxu0 0
    %407 = vmatmul.mubr.bf16.gmra.mxu0 %v372
    %v408 = vpop.f32.mrf.mxu0
    %v409 = vadd.f32 %v352, %v408
    %v410 = vpop.f32.mrf.mxu0
    %v411 = vpop.f32.mrf.mxu0
    %v412 = vadd.f32 %v352, %v411
    %v413 = vpop.f32.mrf.mxu0
    %414 = vdwg.mxu0
    %v415 = vpack.c.bf16 %v412, %v409
    %v417 = vunpack.c.l.b16 %v342
    %v418 = vunpack.c.h.b16 %v342
    %v419 = vpack.c.b16 %v417, %v417
    %v420 = vpack.c.b16 %v418, %v418
    %v422 = vunpack.c.l.b16 %v415
    %v423 = vunpack.c.h.b16 %v415
    %v424 = vpack.c.b16 %v422, %v422
    %v425 = vpack.c.b16 %v423, %v423
    %v426 = vld [vmem:[#allocation6] sm:$0xf]
    %v427 = vunpack.c.l.bf16 %v426
    %vm428 = vcmask 64512
    %v430 = vsel %vm428, %v419, 0
    %v433 = vsel %vm428, %v424, 0
    %435 = vmatprep.subr.bf16.mxu0 0
    %436 = vmatpush1.bf16.xpose.msra.mxu0 0
    %437 = vmatprep.subr.bf16.mxu0 0
    %438 = vmatpush1.bf16.xpose.msra.mxu0 0
    %439 = vmatprep.subr.bf16.mxu0 0
    %440 = vmatpush1.bf16.xpose.msra.mxu0 0
    %441 = vmatprep.subr.bf16.mxu0 0
    %442 = vmatpush1.bf16.xpose.msra.mxu0 0
    %443 = vmatprep.subr.bf16.mxu0 0
    %444 = vmatpush1.bf16.xpose.msra.mxu0 0
    %445 = vmatprep.subr.bf16.mxu0 0
    %446 = vmatpush1.bf16.xpose.msra.mxu0 0
    %447 = vmatprep.subr.bf16.mxu0 0
    %448 = vmatpush1.bf16.xpose.msra.mxu0 0
    %449 = vmatprep.subr.bf16.mxu0 0
    %450 = vmatpush1.bf16.xpose.msra.mxu0 %v433
    %451 = vmatprep.subr.bf16.mxu0 0
    %452 = vmatpush2.bf16.xpose.msra.mxu0 0
    %453 = vmatprep.subr.bf16.mxu0 0
    %454 = vmatpush2.bf16.xpose.msra.mxu0 0
    %455 = vmatprep.subr.bf16.mxu0 0
    %456 = vmatpush2.bf16.xpose.msra.mxu0 0
    %457 = vmatprep.subr.bf16.mxu0 0
    %458 = vmatpush2.bf16.xpose.msra.mxu0 0
    %459 = vmatprep.subr.bf16.mxu0 0
    %460 = vmatpush2.bf16.xpose.msra.mxu0 0
    %461 = vmatprep.subr.bf16.mxu0 0
    %462 = vmatpush2.bf16.xpose.msra.mxu0 0
    %463 = vmatprep.subr.bf16.mxu0 0
    %464 = vmatpush2.bf16.xpose.msra.mxu0 0
    %465 = vmatprep.subr.bf16.mxu0 0
    %466 = vmatpush2.bf16.xpose.msra.mxu0 0
    %467 = vmatprep.mubr.bf16.mxu0 0
    %468 = vmatmul.mubr.bf16.gmra.mxu0 %v430
    %v469 = vpop.f32.mrf.mxu0
    %v470 = vadd.f32 %v427, %v469
    %v471 = vpop.f32.mrf.mxu0
    %v472 = vpop.f32.mrf.mxu0
    %v473 = vpop.f32.mrf.mxu0
    %474 = vdwg.mxu0
    %v476 = vsel %vm428, %v420, 0
    %v479 = vsel %vm428, %v425, 0
    %481 = vmatprep.subr.bf16.mxu0 0
    %482 = vmatpush1.bf16.xpose.msra.mxu0 0
    %483 = vmatprep.subr.bf16.mxu0 0
    %484 = vmatpush1.bf16.xpose.msra.mxu0 0
    %485 = vmatprep.subr.bf16.mxu0 0
    %486 = vmatpush1.bf16.xpose.msra.mxu0 0
    %487 = vmatprep.subr.bf16.mxu0 0
    %488 = vmatpush1.bf16.xpose.msra.mxu0 0
    %489 = vmatprep.subr.bf16.mxu0 0
    %490 = vmatpush1.bf16.xpose.msra.mxu0 0
    %491 = vmatprep.subr.bf16.mxu0 0
    %492 = vmatpush1.bf16.xpose.msra.mxu0 0
    %493 = vmatprep.subr.bf16.mxu0 0
    %494 = vmatpush1.bf16.xpose.msra.mxu0 0
    %495 = vmatprep.subr.bf16.mxu0 0
    %496 = vmatpush1.bf16.xpose.msra.mxu0 %v479
    %497 = vmatprep.subr.bf16.mxu0 0
    %498 = vmatpush2.bf16.xpose.msra.mxu0 0
    %499 = vmatprep.subr.bf16.mxu0 0
    %500 = vmatpush2.bf16.xpose.msra.mxu0 0
    %501 = vmatprep.subr.bf16.mxu0 0
    %502 = vmatpush2.bf16.xpose.msra.mxu0 0
    %503 = vmatprep.subr.bf16.mxu0 0
    %504 = vmatpush2.bf16.xpose.msra.mxu0 0
    %505 = vmatprep.subr.bf16.mxu0 0
    %506 = vmatpush2.bf16.xpose.msra.mxu0 0
    %507 = vmatprep.subr.bf16.mxu0 0
    %508 = vmatpush2.bf16.xpose.msra.mxu0 0
    %509 = vmatprep.subr.bf16.mxu0 0
    %510 = vmatpush2.bf16.xpose.msra.mxu0 0
    %511 = vmatprep.subr.bf16.mxu0 0
    %512 = vmatpush2.bf16.xpose.msra.mxu0 0
    %513 = vmatprep.mubr.bf16.mxu0 0
    %514 = vmatmul.mubr.bf16.gmra.mxu0 %v476
    %v515 = vpop.f32.mrf.mxu0
    %v516 = vadd.f32 %v427, %v515
    %v517 = vpop.f32.mrf.mxu0
    %v518 = vpop.f32.mrf.mxu0
    %v519 = vpop.f32.mrf.mxu0
    %520 = vdwg.mxu0
    %v521 = vsel %vm428, %v470, -inf
    %522 = vmax.xlane.f32.xlu0 %v521
    %v523 = vpop.xlane.xlu0 %522
    %v524 = vsel %vm428, %v516, -inf
    %525 = vmax.xlane.f32.xlu0 %v524
    %v526 = vpop.xlane.xlu0 %525
    %v527 = vsub.f32 %v470, %v523
    %v528 = vsub.f32 %v516, %v526
    %v529 = vmul.f32 %v527, 1.442695
    %v530 = vpow.pop %v529
    %v531 = vmul.f32 %v528, 1.442695
    %v532 = vpow.pop %v531
    %v533 = vsel %vm428, %v530, 0.0
    %534 = vadd.xlane.f32.xlu0 %v533
    %v535 = vpop.xlane.xlu0 %534
    %v536 = vsel %vm428, %v532, 0.0
    %537 = vadd.xlane.f32.xlu0 %v536
    %v538 = vpop.xlane.xlu0 %537
    %v539 = vrcp.pop %v535
    %v540 = vrcp.pop %v538
    %v541 = vmul.f32 %v530, %v539
    %v542 = vmul.f32 %v532, %v540
    %v543 = vpack.c.bf16 %v541, %v541
    %v544 = vpack.c.bf16 %v542, %v542
    %545 = vrot.lane.b32.xlu0 %v424, 96
    %v546 = vpop.permute.xlu0 %545
    %v548 = vsel %vm428, %v543, 0
    %vm550 = vcmask 1043456
    %v552 = vsel %vm550, %v546, 0
    %554 = vmatprep.subr.bf16.mxu0 0
    %555 = vmatpush1.bf16.msra.mxu0 0
    %556 = vmatprep.subr.bf16.mxu0 0
    %557 = vmatpush1.bf16.msra.mxu0 0
    %558 = vmatprep.subr.bf16.mxu0 0
    %559 = vmatpush1.bf16.msra.mxu0 0
    %560 = vmatprep.subr.bf16.mxu0 0
    %561 = vmatpush1.bf16.msra.mxu0 0
    %562 = vmatprep.subr.bf16.mxu0 0
    %563 = vmatpush1.bf16.msra.mxu0 0
    %564 = vmatprep.subr.bf16.mxu0 0
    %565 = vmatpush1.bf16.msra.mxu0 0
    %566 = vmatprep.subr.bf16.mxu0 0
    %567 = vmatpush1.bf16.msra.mxu0 0
    %568 = vmatprep.subr.bf16.mxu0 0
    %569 = vmatpush1.bf16.msra.mxu0 %v552
    %570 = vmatprep.subr.bf16.mxu0 0
    %571 = vmatpush2.bf16.msra.mxu0 0
    %572 = vmatprep.subr.bf16.mxu0 0
    %573 = vmatpush2.bf16.msra.mxu0 0
    %574 = vmatprep.subr.bf16.mxu0 0
    %575 = vmatpush2.bf16.msra.mxu0 0
    %576 = vmatprep.subr.bf16.mxu0 0
    %577 = vmatpush2.bf16.msra.mxu0 0
    %578 = vmatprep.subr.bf16.mxu0 0
    %579 = vmatpush2.bf16.msra.mxu0 0
    %580 = vmatprep.subr.bf16.mxu0 0
    %581 = vmatpush2.bf16.msra.mxu0 0
    %582 = vmatprep.subr.bf16.mxu0 0
    %583 = vmatpush2.bf16.msra.mxu0 0
    %584 = vmatprep.subr.bf16.mxu0 0
    %585 = vmatpush2.bf16.msra.mxu0 0
    %586 = vmatprep.mubr.bf16.mxu0 0
    %587 = vmatmul.mubr.bf16.gmra.mxu0 %v548
    %v588 = vpop.f32.mrf.mxu0
    %v589 = vadd.f32 0.0, %v588
    %v590 = vpop.f32.mrf.mxu0
    %v591 = vpop.f32.mrf.mxu0
    %v592 = vpop.f32.mrf.mxu0
    %593 = vdwg.mxu0
    %594 = vrot.lane.b32.xlu0 %v425, 96
    %v595 = vpop.permute.xlu0 %594
    %v597 = vsel %vm428, %v544, 0
    %v600 = vsel %vm550, %v595, 0
    %602 = vmatprep.subr.bf16.mxu0 0
    %603 = vmatpush1.bf16.msra.mxu0 0
    %604 = vmatprep.subr.bf16.mxu0 0
    %605 = vmatpush1.bf16.msra.mxu0 0
    %606 = vmatprep.subr.bf16.mxu0 0
    %607 = vmatpush1.bf16.msra.mxu0 0
    %608 = vmatprep.subr.bf16.mxu0 0
    %609 = vmatpush1.bf16.msra.mxu0 0
    %610 = vmatprep.subr.bf16.mxu0 0
    %611 = vmatpush1.bf16.msra.mxu0 0
    %612 = vmatprep.subr.bf16.mxu0 0
    %613 = vmatpush1.bf16.msra.mxu0 0
    %614 = vmatprep.subr.bf16.mxu0 0
    %615 = vmatpush1.bf16.msra.mxu0 0
    %616 = vmatprep.subr.bf16.mxu0 0
    %617 = vmatpush1.bf16.msra.mxu0 %v600
    %618 = vmatprep.subr.bf16.mxu0 0
    %619 = vmatpush2.bf16.msra.mxu0 0
    %620 = vmatprep.subr.bf16.mxu0 0
    %621 = vmatpush2.bf16.msra.mxu0 0
    %622 = vmatprep.subr.bf16.mxu0 0
    %623 = vmatpush2.bf16.msra.mxu0 0
    %624 = vmatprep.subr.bf16.mxu0 0
    %625 = vmatpush2.bf16.msra.mxu0 0
    %626 = vmatprep.subr.bf16.mxu0 0
    %627 = vmatpush2.bf16.msra.mxu0 0
    %628 = vmatprep.subr.bf16.mxu0 0
    %629 = vmatpush2.bf16.msra.mxu0 0
    %630 = vmatprep.subr.bf16.mxu0 0
    %631 = vmatpush2.bf16.msra.mxu0 0
    %632 = vmatprep.subr.bf16.mxu0 0
    %633 = vmatpush2.bf16.msra.mxu0 0
    %634 = vmatprep.mubr.bf16.mxu0 0
    %635 = vmatmul.mubr.bf16.gmra.mxu0 %v597
    %v636 = vpop.f32.mrf.mxu0
    %v637 = vadd.f32 0.0, %v636
    %v638 = vpop.f32.mrf.mxu0
    %v639 = vpop.f32.mrf.mxu0
    %v640 = vpop.f32.mrf.mxu0
    %641 = vdwg.mxu0
    %v642 = vpack.c.bf16 %v589, %v589
    %v643 = vpack.c.bf16 %v637, %v637
    %644 = vrot.lane.b32.xlu0 %v419, 120
    %v645 = vpop.permute.xlu0 %644
    %646 = vrot.lane.b32.xlu0 %v424, 120
    %v647 = vpop.permute.xlu0 %646
    %v649 = vsel %vm428, %v645, 0
    %v652 = vsel %vm428, %v647, 0
    %654 = vmatprep.subr.bf16.mxu0 0
    %655 = vmatpush1.bf16.xpose.msra.mxu0 0
    %656 = vmatprep.subr.bf16.mxu0 0
    %657 = vmatpush1.bf16.xpose.msra.mxu0 0
    %658 = vmatprep.subr.bf16.mxu0 0
    %659 = vmatpush1.bf16.xpose.msra.mxu0 0
    %660 = vmatprep.subr.bf16.mxu0 0
    %661 = vmatpush1.bf16.xpose.msra.mxu0 0
    %662 = vmatprep.subr.bf16.mxu0 0
    %663 = vmatpush1.bf16.xpose.msra.mxu0 0
    %664 = vmatprep.subr.bf16.mxu0 0
    %665 = vmatpush1.bf16.xpose.msra.mxu0 0
    %666 = vmatprep.subr.bf16.mxu0 0
    %667 = vmatpush1.bf16.xpose.msra.mxu0 0
    %668 = vmatprep.subr.bf16.mxu0 0
    %669 = vmatpush1.bf16.xpose.msra.mxu0 %v652
    %670 = vmatprep.subr.bf16.mxu0 0
    %671 = vmatpush2.bf16.xpose.msra.mxu0 0
    %672 = vmatprep.subr.bf16.mxu0 0
    %673 = vmatpush2.bf16.xpose.msra.mxu0 0
    %674 = vmatprep.subr.bf16.mxu0 0
    %675 = vmatpush2.bf16.xpose.msra.mxu0 0
    %676 = vmatprep.subr.bf16.mxu0 0
    %677 = vmatpush2.bf16.xpose.msra.mxu0 0
    %678 = vmatprep.subr.bf16.mxu0 0
    %679 = vmatpush2.bf16.xpose.msra.mxu0 0
    %680 = vmatprep.subr.bf16.mxu0 0
    %681 = vmatpush2.bf16.xpose.msra.mxu0 0
    %682 = vmatprep.subr.bf16.mxu0 0
    %683 = vmatpush2.bf16.xpose.msra.mxu0 0
    %684 = vmatprep.subr.bf16.mxu0 0
    %685 = vmatpush2.bf16.xpose.msra.mxu0 0
    %686 = vmatprep.mubr.bf16.mxu0 0
    %687 = vmatmul.mubr.bf16.gmra.mxu0 %v649
    %v688 = vpop.f32.mrf.mxu0
    %v689 = vadd.f32 %v427, %v688
    %v690 = vpop.f32.mrf.mxu0
    %v691 = vpop.f32.mrf.mxu0
    %v692 = vpop.f32.mrf.mxu0
    %693 = vdwg.mxu0
    %694 = vrot.lane.b32.xlu0 %v420, 120
    %v695 = vpop.permute.xlu0 %694
    %696 = vrot.lane.b32.xlu0 %v425, 120
    %v697 = vpop.permute.xlu0 %696
    %v699 = vsel %vm428, %v695, 0
    %v702 = vsel %vm428, %v697, 0
    %704 = vmatprep.subr.bf16.mxu0 0
    %705 = vmatpush1.bf16.xpose.msra.mxu0 0
    %706 = vmatprep.subr.bf16.mxu0 0
    %707 = vmatpush1.bf16.xpose.msra.mxu0 0
    %708 = vmatprep.subr.bf16.mxu0 0
    %709 = vmatpush1.bf16.xpose.msra.mxu0 0
    %710 = vmatprep.subr.bf16.mxu0 0
    %711 = vmatpush1.bf16.xpose.msra.mxu0 0
    %712 = vmatprep.subr.bf16.mxu0 0
    %713 = vmatpush1.bf16.xpose.msra.mxu0 0
    %714 = vmatprep.subr.bf16.mxu0 0
    %715 = vmatpush1.bf16.xpose.msra.mxu0 0
    %716 = vmatprep.subr.bf16.mxu0 0
    %717 = vmatpush1.bf16.xpose.msra.mxu0 0
    %718 = vmatprep.subr.bf16.mxu0 0
    %719 = vmatpush1.bf16.xpose.msra.mxu0 %v702
    %720 = vmatprep.subr.bf16.mxu0 0
    %721 = vmatpush2.bf16.xpose.msra.mxu0 0
    %722 = vmatprep.subr.bf16.mxu0 0
    %723 = vmatpush2.bf16.xpose.msra.mxu0 0
    %724 = vmatprep.subr.bf16.mxu0 0
    %725 = vmatpush2.bf16.xpose.msra.mxu0 0
    %726 = vmatprep.subr.bf16.mxu0 0
    %727 = vmatpush2.bf16.xpose.msra.mxu0 0
    %728 = vmatprep.subr.bf16.mxu0 0
    %729 = vmatpush2.bf16.xpose.msra.mxu0 0
    %730 = vmatprep.subr.bf16.mxu0 0
    %731 = vmatpush2.bf16.xpose.msra.mxu0 0
    %732 = vmatprep.subr.bf16.mxu0 0
    %733 = vmatpush2.bf16.xpose.msra.mxu0 0
    %734 = vmatprep.subr.bf16.mxu0 0
    %735 = vmatpush2.bf16.xpose.msra.mxu0 0
    %736 = vmatprep.mubr.bf16.mxu0 0
    %737 = vmatmul.mubr.bf16.gmra.mxu0 %v699
    %v738 = vpop.f32.mrf.mxu0
    %v739 = vadd.f32 %v427, %v738
    %v740 = vpop.f32.mrf.mxu0
    %v741 = vpop.f32.mrf.mxu0
    %v742 = vpop.f32.mrf.mxu0
    %743 = vdwg.mxu0
    %v744 = vsel %vm428, %v689, -inf
    %745 = vmax.xlane.f32.xlu0 %v744
    %v746 = vpop.xlane.xlu0 %745
    %v747 = vsel %vm428, %v739, -inf
    %748 = vmax.xlane.f32.xlu0 %v747
    %v749 = vpop.xlane.xlu0 %748
    %v750 = vsub.f32 %v689, %v746
    %v751 = vsub.f32 %v739, %v749
    %v752 = vmul.f32 %v750, 1.442695
    %v753 = vpow.pop %v752
    %v754 = vmul.f32 %v751, 1.442695
    %v755 = vpow.pop %v754
    %v756 = vsel %vm428, %v753, 0.0
    %757 = vadd.xlane.f32.xlu0 %v756
    %v758 = vpop.xlane.xlu0 %757
    %v759 = vsel %vm428, %v755, 0.0
    %760 = vadd.xlane.f32.xlu0 %v759
    %v761 = vpop.xlane.xlu0 %760
    %v762 = vrcp.pop %v758
    %v763 = vrcp.pop %v761
    %v764 = vmul.f32 %v753, %v762
    %v765 = vmul.f32 %v755, %v763
    %v766 = vpack.c.bf16 %v764, %v764
    %v767 = vpack.c.bf16 %v765, %v765
    %768 = vrot.lane.b32.xlu0 %v424, 88
    %v769 = vpop.permute.xlu0 %768
    %v771 = vsel %vm428, %v766, 0
    %v774 = vsel %vm550, %v769, 0
    %776 = vmatprep.subr.bf16.mxu0 0
    %777 = vmatpush1.bf16.msra.mxu0 0
    %778 = vmatprep.subr.bf16.mxu0 0
    %779 = vmatpush1.bf16.msra.mxu0 0
    %780 = vmatprep.subr.bf16.mxu0 0
    %781 = vmatpush1.bf16.msra.mxu0 0
    %782 = vmatprep.subr.bf16.mxu0 0
    %783 = vmatpush1.bf16.msra.mxu0 0
    %784 = vmatprep.subr.bf16.mxu0 0
    %785 = vmatpush1.bf16.msra.mxu0 0
    %786 = vmatprep.subr.bf16.mxu0 0
    %787 = vmatpush1.bf16.msra.mxu0 0
    %788 = vmatprep.subr.bf16.mxu0 0
    %789 = vmatpush1.bf16.msra.mxu0 0
    %790 = vmatprep.subr.bf16.mxu0 0
    %791 = vmatpush1.bf16.msra.mxu0 %v774
    %792 = vmatprep.subr.bf16.mxu0 0
    %793 = vmatpush2.bf16.msra.mxu0 0
    %794 = vmatprep.subr.bf16.mxu0 0
    %795 = vmatpush2.bf16.msra.mxu0 0
    %796 = vmatprep.subr.bf16.mxu0 0
    %797 = vmatpush2.bf16.msra.mxu0 0
    %798 = vmatprep.subr.bf16.mxu0 0
    %799 = vmatpush2.bf16.msra.mxu0 0
    %800 = vmatprep.subr.bf16.mxu0 0
    %801 = vmatpush2.bf16.msra.mxu0 0
    %802 = vmatprep.subr.bf16.mxu0 0
    %803 = vmatpush2.bf16.msra.mxu0 0
    %804 = vmatprep.subr.bf16.mxu0 0
    %805 = vmatpush2.bf16.msra.mxu0 0
    %806 = vmatprep.subr.bf16.mxu0 0
    %807 = vmatpush2.bf16.msra.mxu0 0
    %808 = vmatprep.mubr.bf16.mxu0 0
    %809 = vmatmul.mubr.bf16.gmra.mxu0 %v771
    %v810 = vpop.f32.mrf.mxu0
    %v811 = vadd.f32 0.0, %v810
    %v812 = vpop.f32.mrf.mxu0
    %v813 = vpop.f32.mrf.mxu0
    %v814 = vpop.f32.mrf.mxu0
    %815 = vdwg.mxu0
    %816 = vrot.lane.b32.xlu0 %v425, 88
    %v817 = vpop.permute.xlu0 %816
    %v819 = vsel %vm428, %v767, 0
    %v822 = vsel %vm550, %v817, 0
    %824 = vmatprep.subr.bf16.mxu0 0
    %825 = vmatpush1.bf16.msra.mxu0 0
    %826 = vmatprep.subr.bf16.mxu0 0
    %827 = vmatpush1.bf16.msra.mxu0 0
    %828 = vmatprep.subr.bf16.mxu0 0
    %829 = vmatpush1.bf16.msra.mxu0 0
    %830 = vmatprep.subr.bf16.mxu0 0
    %831 = vmatpush1.bf16.msra.mxu0 0
    %832 = vmatprep.subr.bf16.mxu0 0
    %833 = vmatpush1.bf16.msra.mxu0 0
    %834 = vmatprep.subr.bf16.mxu0 0
    %835 = vmatpush1.bf16.msra.mxu0 0
    %836 = vmatprep.subr.bf16.mxu0 0
    %837 = vmatpush1.bf16.msra.mxu0 0
    %838 = vmatprep.subr.bf16.mxu0 0
    %839 = vmatpush1.bf16.msra.mxu0 %v822
    %840 = vmatprep.subr.bf16.mxu0 0
    %841 = vmatpush2.bf16.msra.mxu0 0
    %842 = vmatprep.subr.bf16.mxu0 0
    %843 = vmatpush2.bf16.msra.mxu0 0
    %844 = vmatprep.subr.bf16.mxu0 0
    %845 = vmatpush2.bf16.msra.mxu0 0
    %846 = vmatprep.subr.bf16.mxu0 0
    %847 = vmatpush2.bf16.msra.mxu0 0
    %848 = vmatprep.subr.bf16.mxu0 0
    %849 = vmatpush2.bf16.msra.mxu0 0
    %850 = vmatprep.subr.bf16.mxu0 0
    %851 = vmatpush2.bf16.msra.mxu0 0
    %852 = vmatprep.subr.bf16.mxu0 0
    %853 = vmatpush2.bf16.msra.mxu0 0
    %854 = vmatprep.subr.bf16.mxu0 0
    %855 = vmatpush2.bf16.msra.mxu0 0
    %856 = vmatprep.mubr.bf16.mxu0 0
    %857 = vmatmul.mubr.bf16.gmra.mxu0 %v819
    %v858 = vpop.f32.mrf.mxu0
    %v859 = vadd.f32 0.0, %v858
    %v860 = vpop.f32.mrf.mxu0
    %v861 = vpop.f32.mrf.mxu0
    %v862 = vpop.f32.mrf.mxu0
    %863 = vdwg.mxu0
    %v864 = vpack.c.bf16 %v811, %v811
    %v865 = vpack.c.bf16 %v859, %v859
    %866 = vrot.lane.b32.xlu0 %v419, 112
    %v867 = vpop.permute.xlu0 %866
    %868 = vrot.lane.b32.xlu0 %v424, 112
    %v869 = vpop.permute.xlu0 %868
    %v871 = vsel %vm428, %v867, 0
    %v874 = vsel %vm428, %v869, 0
    %876 = vmatprep.subr.bf16.mxu0 0
    %877 = vmatpush1.bf16.xpose.msra.mxu0 0
    %878 = vmatprep.subr.bf16.mxu0 0
    %879 = vmatpush1.bf16.xpose.msra.mxu0 0
    %880 = vmatprep.subr.bf16.mxu0 0
    %881 = vmatpush1.bf16.xpose.msra.mxu0 0
    %882 = vmatprep.subr.bf16.mxu0 0
    %883 = vmatpush1.bf16.xpose.msra.mxu0 0
    %884 = vmatprep.subr.bf16.mxu0 0
    %885 = vmatpush1.bf16.xpose.msra.mxu0 0
    %886 = vmatprep.subr.bf16.mxu0 0
    %887 = vmatpush1.bf16.xpose.msra.mxu0 0
    %888 = vmatprep.subr.bf16.mxu0 0
    %889 = vmatpush1.bf16.xpose.msra.mxu0 0
    %890 = vmatprep.subr.bf16.mxu0 0
    %891 = vmatpush1.bf16.xpose.msra.mxu0 %v874
    %892 = vmatprep.subr.bf16.mxu0 0
    %893 = vmatpush2.bf16.xpose.msra.mxu0 0
    %894 = vmatprep.subr.bf16.mxu0 0
    %895 = vmatpush2.bf16.xpose.msra.mxu0 0
    %896 = vmatprep.subr.bf16.mxu0 0
    %897 = vmatpush2.bf16.xpose.msra.mxu0 0
    %898 = vmatprep.subr.bf16.mxu0 0
    %899 = vmatpush2.bf16.xpose.msra.mxu0 0
    %900 = vmatprep.subr.bf16.mxu0 0
    %901 = vmatpush2.bf16.xpose.msra.mxu0 0
    %902 = vmatprep.subr.bf16.mxu0 0
    %903 = vmatpush2.bf16.xpose.msra.mxu0 0
    %904 = vmatprep.subr.bf16.mxu0 0
    %905 = vmatpush2.bf16.xpose.msra.mxu0 0
    %906 = vmatprep.subr.bf16.mxu0 0
    %907 = vmatpush2.bf16.xpose.msra.mxu0 0
    %908 = vmatprep.mubr.bf16.mxu0 0
    %909 = vmatmul.mubr.bf16.gmra.mxu0 %v871
    %v910 = vpop.f32.mrf.mxu0
    %v911 = vadd.f32 %v427, %v910
    %v912 = vpop.f32.mrf.mxu0
    %v913 = vpop.f32.mrf.mxu0
    %v914 = vpop.f32.mrf.mxu0
    %915 = vdwg.mxu0
    %916 = vrot.lane.b32.xlu0 %v420, 112
    %v917 = vpop.permute.xlu0 %916
    %918 = vrot.lane.b32.xlu0 %v425, 112
    %v919 = vpop.permute.xlu0 %918
    %v921 = vsel %vm428, %v917, 0
    %v924 = vsel %vm428, %v919, 0
    %926 = vmatprep.subr.bf16.mxu0 0
    %927 = vmatpush1.bf16.xpose.msra.mxu0 0
    %928 = vmatprep.subr.bf16.mxu0 0
    %929 = vmatpush1.bf16.xpose.msra.mxu0 0
    %930 = vmatprep.subr.bf16.mxu0 0
    %931 = vmatpush1.bf16.xpose.msra.mxu0 0
    %932 = vmatprep.subr.bf16.mxu0 0
    %933 = vmatpush1.bf16.xpose.msra.mxu0 0
    %934 = vmatprep.subr.bf16.mxu0 0
    %935 = vmatpush1.bf16.xpose.msra.mxu0 0
    %936 = vmatprep.subr.bf16.mxu0 0
    %937 = vmatpush1.bf16.xpose.msra.mxu0 0
    %938 = vmatprep.subr.bf16.mxu0 0
    %939 = vmatpush1.bf16.xpose.msra.mxu0 0
    %940 = vmatprep.subr.bf16.mxu0 0
    %941 = vmatpush1.bf16.xpose.msra.mxu0 %v924
    %942 = vmatprep.subr.bf16.mxu0 0
    %943 = vmatpush2.bf16.xpose.msra.mxu0 0
    %944 = vmatprep.subr.bf16.mxu0 0
    %945 = vmatpush2.bf16.xpose.msra.mxu0 0
    %946 = vmatprep.subr.bf16.mxu0 0
    %947 = vmatpush2.bf16.xpose.msra.mxu0 0
    %948 = vmatprep.subr.bf16.mxu0 0
    %949 = vmatpush2.bf16.xpose.msra.mxu0 0
    %950 = vmatprep.subr.bf16.mxu0 0
    %951 = vmatpush2.bf16.xpose.msra.mxu0 0
    %952 = vmatprep.subr.bf16.mxu0 0
    %953 = vmatpush2.bf16.xpose.msra.mxu0 0
    %954 = vmatprep.subr.bf16.mxu0 0
    %955 = vmatpush2.bf16.xpose.msra.mxu0 0
    %956 = vmatprep.subr.bf16.mxu0 0
    %957 = vmatpush2.bf16.xpose.msra.mxu0 0
    %958 = vmatprep.mubr.bf16.mxu0 0
    %959 = vmatmul.mubr.bf16.gmra.mxu0 %v921
    %v960 = vpop.f32.mrf.mxu0
    %v961 = vadd.f32 %v427, %v960
    %v962 = vpop.f32.mrf.mxu0
    %v963 = vpop.f32.mrf.mxu0
    %v964 = vpop.f32.mrf.mxu0
    %965 = vdwg.mxu0
    %v966 = vsel %vm428, %v911, -inf
    %967 = vmax.xlane.f32.xlu0 %v966
    %v968 = vpop.xlane.xlu0 %967
    %v969 = vsel %vm428, %v961, -inf
    %970 = vmax.xlane.f32.xlu0 %v969
    %v971 = vpop.xlane.xlu0 %970
    %v972 = vsub.f32 %v911, %v968
    %v973 = vsub.f32 %v961, %v971
    %v974 = vmul.f32 %v972, 1.442695
    %v975 = vpow.pop %v974
    %v976 = vmul.f32 %v973, 1.442695
    %v977 = vpow.pop %v976
    %v978 = vsel %vm428, %v975, 0.0
    %979 = vadd.xlane.f32.xlu0 %v978
    %v980 = vpop.xlane.xlu0 %979
    %v981 = vsel %vm428, %v977, 0.0
    %982 = vadd.xlane.f32.xlu0 %v981
    %v983 = vpop.xlane.xlu0 %982
    %v984 = vrcp.pop %v980
    %v985 = vrcp.pop %v983
    %v986 = vmul.f32 %v975, %v984
    %v987 = vmul.f32 %v977, %v985
    %v988 = vpack.c.bf16 %v986, %v986
    %v989 = vpack.c.bf16 %v987, %v987
    %990 = vrot.lane.b32.xlu0 %v424, 80
    %v991 = vpop.permute.xlu0 %990
    %v993 = vsel %vm428, %v988, 0
    %v996 = vsel %vm550, %v991, 0
    %998 = vmatprep.subr.bf16.mxu0 0
    %999 = vmatpush1.bf16.msra.mxu0 0
    %1000 = vmatprep.subr.bf16.mxu0 0
    %1001 = vmatpush1.bf16.msra.mxu0 0
    %1002 = vmatprep.subr.bf16.mxu0 0
    %1003 = vmatpush1.bf16.msra.mxu0 0
    %1004 = vmatprep.subr.bf16.mxu0 0
    %1005 = vmatpush1.bf16.msra.mxu0 0
    %1006 = vmatprep.subr.bf16.mxu0 0
    %1007 = vmatpush1.bf16.msra.mxu0 0
    %1008 = vmatprep.subr.bf16.mxu0 0
    %1009 = vmatpush1.bf16.msra.mxu0 0
    %1010 = vmatprep.subr.bf16.mxu0 0
    %1011 = vmatpush1.bf16.msra.mxu0 0
    %1012 = vmatprep.subr.bf16.mxu0 0
    %1013 = vmatpush1.bf16.msra.mxu0 %v996
    %1014 = vmatprep.subr.bf16.mxu0 0
    %1015 = vmatpush2.bf16.msra.mxu0 0
    %1016 = vmatprep.subr.bf16.mxu0 0
    %1017 = vmatpush2.bf16.msra.mxu0 0
    %1018 = vmatprep.subr.bf16.mxu0 0
    %1019 = vmatpush2.bf16.msra.mxu0 0
    %1020 = vmatprep.subr.bf16.mxu0 0
    %1021 = vmatpush2.bf16.msra.mxu0 0
    %1022 = vmatprep.subr.bf16.mxu0 0
    %1023 = vmatpush2.bf16.msra.mxu0 0
    %1024 = vmatprep.subr.bf16.mxu0 0
    %1025 = vmatpush2.bf16.msra.mxu0 0
    %1026 = vmatprep.subr.bf16.mxu0 0
    %1027 = vmatpush2.bf16.msra.mxu0 0
    %1028 = vmatprep.subr.bf16.mxu0 0
    %1029 = vmatpush2.bf16.msra.mxu0 0
    %1030 = vmatprep.mubr.bf16.mxu0 0
    %1031 = vmatmul.mubr.bf16.gmra.mxu0 %v993
    %v1032 = vpop.f32.mrf.mxu0
    %v1033 = vadd.f32 0.0, %v1032
    %v1034 = vpop.f32.mrf.mxu0
    %v1035 = vpop.f32.mrf.mxu0
    %v1036 = vpop.f32.mrf.mxu0
    %1037 = vdwg.mxu0
    %1038 = vrot.lane.b32.xlu0 %v425, 80
    %v1039 = vpop.permute.xlu0 %1038
    %v1041 = vsel %vm428, %v989, 0
    %v1044 = vsel %vm550, %v1039, 0
    %1046 = vmatprep.subr.bf16.mxu0 0
    %1047 = vmatpush1.bf16.msra.mxu0 0
    %1048 = vmatprep.subr.bf16.mxu0 0
    %1049 = vmatpush1.bf16.msra.mxu0 0
    %1050 = vmatprep.subr.bf16.mxu0 0
    %1051 = vmatpush1.bf16.msra.mxu0 0
    %1052 = vmatprep.subr.bf16.mxu0 0
    %1053 = vmatpush1.bf16.msra.mxu0 0
    %1054 = vmatprep.subr.bf16.mxu0 0
    %1055 = vmatpush1.bf16.msra.mxu0 0
    %1056 = vmatprep.subr.bf16.mxu0 0
    %1057 = vmatpush1.bf16.msra.mxu0 0
    %1058 = vmatprep.subr.bf16.mxu0 0
    %1059 = vmatpush1.bf16.msra.mxu0 0
    %1060 = vmatprep.subr.bf16.mxu0 0
    %1061 = vmatpush1.bf16.msra.mxu0 %v1044
    %1062 = vmatprep.subr.bf16.mxu0 0
    %1063 = vmatpush2.bf16.msra.mxu0 0
    %1064 = vmatprep.subr.bf16.mxu0 0
    %1065 = vmatpush2.bf16.msra.mxu0 0
    %1066 = vmatprep.subr.bf16.mxu0 0
    %1067 = vmatpush2.bf16.msra.mxu0 0
    %1068 = vmatprep.subr.bf16.mxu0 0
    %1069 = vmatpush2.bf16.msra.mxu0 0
    %1070 = vmatprep.subr.bf16.mxu0 0
    %1071 = vmatpush2.bf16.msra.mxu0 0
    %1072 = vmatprep.subr.bf16.mxu0 0
    %1073 = vmatpush2.bf16.msra.mxu0 0
    %1074 = vmatprep.subr.bf16.mxu0 0
    %1075 = vmatpush2.bf16.msra.mxu0 0
    %1076 = vmatprep.subr.bf16.mxu0 0
    %1077 = vmatpush2.bf16.msra.mxu0 0
    %1078 = vmatprep.mubr.bf16.mxu0 0
    %1079 = vmatmul.mubr.bf16.gmra.mxu0 %v1041
    %v1080 = vpop.f32.mrf.mxu0
    %v1081 = vadd.f32 0.0, %v1080
    %v1082 = vpop.f32.mrf.mxu0
    %v1083 = vpop.f32.mrf.mxu0
    %v1084 = vpop.f32.mrf.mxu0
    %1085 = vdwg.mxu0
    %v1086 = vpack.c.bf16 %v1033, %v1033
    %v1087 = vpack.c.bf16 %v1081, %v1081
    %1088 = vrot.lane.b32.xlu0 %v419, 104
    %v1089 = vpop.permute.xlu0 %1088
    %1090 = vrot.lane.b32.xlu0 %v424, 104
    %v1091 = vpop.permute.xlu0 %1090
    %v1093 = vsel %vm428, %v1089, 0
    %v1096 = vsel %vm428, %v1091, 0
    %1098 = vmatprep.subr.bf16.mxu0 0
    %1099 = vmatpush1.bf16.xpose.msra.mxu0 0
    %1100 = vmatprep.subr.bf16.mxu0 0
    %1101 = vmatpush1.bf16.xpose.msra.mxu0 0
    %1102 = vmatprep.subr.bf16.mxu0 0
    %1103 = vmatpush1.bf16.xpose.msra.mxu0 0
    %1104 = vmatprep.subr.bf16.mxu0 0
    %1105 = vmatpush1.bf16.xpose.msra.mxu0 0
    %1106 = vmatprep.subr.bf16.mxu0 0
    %1107 = vmatpush1.bf16.xpose.msra.mxu0 0
    %1108 = vmatprep.subr.bf16.mxu0 0
    %1109 = vmatpush1.bf16.xpose.msra.mxu0 0
    %1110 = vmatprep.subr.bf16.mxu0 0
    %1111 = vmatpush1.bf16.xpose.msra.mxu0 0
    %1112 = vmatprep.subr.bf16.mxu0 0
    %1113 = vmatpush1.bf16.xpose.msra.mxu0 %v1096
    %1114 = vmatprep.subr.bf16.mxu0 0
    %1115 = vmatpush2.bf16.xpose.msra.mxu0 0
    %1116 = vmatprep.subr.bf16.mxu0 0
    %1117 = vmatpush2.bf16.xpose.msra.mxu0 0
    %1118 = vmatprep.subr.bf16.mxu0 0
    %1119 = vmatpush2.bf16.xpose.msra.mxu0 0
    %1120 = vmatprep.subr.bf16.mxu0 0
    %1121 = vmatpush2.bf16.xpose.msra.mxu0 0
    %1122 = vmatprep.subr.bf16.mxu0 0
    %1123 = vmatpush2.bf16.xpose.msra.mxu0 0
    %1124 = vmatprep.subr.bf16.mxu0 0
    %1125 = vmatpush2.bf16.xpose.msra.mxu0 0
    %1126 = vmatprep.subr.bf16.mxu0 0
    %1127 = vmatpush2.bf16.xpose.msra.mxu0 0
    %1128 = vmatprep.subr.bf16.mxu0 0
    %1129 = vmatpush2.bf16.xpose.msra.mxu0 0
    %1130 = vmatprep.mubr.bf16.mxu0 0
    %1131 = vmatmul.mubr.bf16.gmra.mxu0 %v1093
    %v1132 = vpop.f32.mrf.mxu0
    %v1133 = vadd.f32 %v427, %v1132
    %v1134 = vpop.f32.mrf.mxu0
    %v1135 = vpop.f32.mrf.mxu0
    %v1136 = vpop.f32.mrf.mxu0
    %1137 = vdwg.mxu0
    %1138 = vrot.lane.b32.xlu0 %v420, 104
    %v1139 = vpop.permute.xlu0 %1138
    %1140 = vrot.lane.b32.xlu0 %v425, 104
    %v1141 = vpop.permute.xlu0 %1140
    %v1143 = vsel %vm428, %v1139, 0
    %v1146 = vsel %vm428, %v1141, 0
    %1148 = vmatprep.subr.bf16.mxu0 0
    %1149 = vmatpush1.bf16.xpose.msra.mxu0 0
    %1150 = vmatprep.subr.bf16.mxu0 0
    %1151 = vmatpush1.bf16.xpose.msra.mxu0 0
    %1152 = vmatprep.subr.bf16.mxu0 0
    %1153 = vmatpush1.bf16.xpose.msra.mxu0 0
    %1154 = vmatprep.subr.bf16.mxu0 0
    %1155 = vmatpush1.bf16.xpose.msra.mxu0 0
    %1156 = vmatprep.subr.bf16.mxu0 0
    %1157 = vmatpush1.bf16.xpose.msra.mxu0 0
    %1158 = vmatprep.subr.bf16.mxu0 0
    %1159 = vmatpush1.bf16.xpose.msra.mxu0 0
    %1160 = vmatprep.subr.bf16.mxu0 0
    %1161 = vmatpush1.bf16.xpose.msra.mxu0 0
    %1162 = vmatprep.subr.bf16.mxu0 0
    %1163 = vmatpush1.bf16.xpose.msra.mxu0 %v1146
    %1164 = vmatprep.subr.bf16.mxu0 0
    %1165 = vmatpush2.bf16.xpose.msra.mxu0 0
    %1166 = vmatprep.subr.bf16.mxu0 0
    %1167 = vmatpush2.bf16.xpose.msra.mxu0 0
    %1168 = vmatprep.subr.bf16.mxu0 0
    %1169 = vmatpush2.bf16.xpose.msra.mxu0 0
    %1170 = vmatprep.subr.bf16.mxu0 0
    %1171 = vmatpush2.bf16.xpose.msra.mxu0 0
    %1172 = vmatprep.subr.bf16.mxu0 0
    %1173 = vmatpush2.bf16.xpose.msra.mxu0 0
    %1174 = vmatprep.subr.bf16.mxu0 0
    %1175 = vmatpush2.bf16.xpose.msra.mxu0 0
    %1176 = vmatprep.subr.bf16.mxu0 0
    %1177 = vmatpush2.bf16.xpose.msra.mxu0 0
    %1178 = vmatprep.subr.bf16.mxu0 0
    %1179 = vmatpush2.bf16.xpose.msra.mxu0 0
    %1180 = vmatprep.mubr.bf16.mxu0 0
    %1181 = vmatmul.mubr.bf16.gmra.mxu0 %v1143
    %v1182 = vpop.f32.mrf.mxu0
    %v1183 = vadd.f32 %v427, %v1182
    %v1184 = vpop.f32.mrf.mxu0
    %v1185 = vpop.f32.mrf.mxu0
    %v1186 = vpop.f32.mrf.mxu0
    %1187 = vdwg.mxu0
    %v1188 = vsel %vm428, %v1133, -inf
    %1189 = vmax.xlane.f32.xlu0 %v1188
    %v1190 = vpop.xlane.xlu0 %1189
    %v1191 = vsel %vm428, %v1183, -inf
    %1192 = vmax.xlane.f32.xlu0 %v1191
    %v1193 = vpop.xlane.xlu0 %1192
    %v1194 = vsub.f32 %v1133, %v1190
    %v1195 = vsub.f32 %v1183, %v1193
    %v1196 = vmul.f32 %v1194, 1.442695
    %v1197 = vpow.pop %v1196
    %v1198 = vmul.f32 %v1195, 1.442695
    %v1199 = vpow.pop %v1198
    %v1200 = vsel %vm428, %v1197, 0.0
    %1201 = vadd.xlane.f32.xlu0 %v1200
    %v1202 = vpop.xlane.xlu0 %1201
    %v1203 = vsel %vm428, %v1199, 0.0
    %1204 = vadd.xlane.f32.xlu0 %v1203
    %v1205 = vpop.xlane.xlu0 %1204
    %v1206 = vrcp.pop %v1202
    %v1207 = vrcp.pop %v1205
    %v1208 = vmul.f32 %v1197, %v1206
    %v1209 = vmul.f32 %v1199, %v1207
    %v1210 = vpack.c.bf16 %v1208, %v1208
    %v1211 = vpack.c.bf16 %v1209, %v1209
    %1212 = vrot.lane.b32.xlu0 %v424, 72
    %v1213 = vpop.permute.xlu0 %1212
    %v1215 = vsel %vm428, %v1210, 0
    %v1218 = vsel %vm550, %v1213, 0
    %1220 = vmatprep.subr.bf16.mxu0 0
    %1221 = vmatpush1.bf16.msra.mxu0 0
    %1222 = vmatprep.subr.bf16.mxu0 0
    %1223 = vmatpush1.bf16.msra.mxu0 0
    %1224 = vmatprep.subr.bf16.mxu0 0
    %1225 = vmatpush1.bf16.msra.mxu0 0
    %1226 = vmatprep.subr.bf16.mxu0 0
    %1227 = vmatpush1.bf16.msra.mxu0 0
    %1228 = vmatprep.subr.bf16.mxu0 0
    %1229 = vmatpush1.bf16.msra.mxu0 0
    %1230 = vmatprep.subr.bf16.mxu0 0
    %1231 = vmatpush1.bf16.msra.mxu0 0
    %1232 = vmatprep.subr.bf16.mxu0 0
    %1233 = vmatpush1.bf16.msra.mxu0 0
    %1234 = vmatprep.subr.bf16.mxu0 0
    %1235 = vmatpush1.bf16.msra.mxu0 %v1218
    %1236 = vmatprep.subr.bf16.mxu0 0
    %1237 = vmatpush2.bf16.msra.mxu0 0
    %1238 = vmatprep.subr.bf16.mxu0 0
    %1239 = vmatpush2.bf16.msra.mxu0 0
    %1240 = vmatprep.subr.bf16.mxu0 0
    %1241 = vmatpush2.bf16.msra.mxu0 0
    %1242 = vmatprep.subr.bf16.mxu0 0
    %1243 = vmatpush2.bf16.msra.mxu0 0
    %1244 = vmatprep.subr.bf16.mxu0 0
    %1245 = vmatpush2.bf16.msra.mxu0 0
    %1246 = vmatprep.subr.bf16.mxu0 0
    %1247 = vmatpush2.bf16.msra.mxu0 0
    %1248 = vmatprep.subr.bf16.mxu0 0
    %1249 = vmatpush2.bf16.msra.mxu0 0
    %1250 = vmatprep.subr.bf16.mxu0 0
    %1251 = vmatpush2.bf16.msra.mxu0 0
    %1252 = vmatprep.mubr.bf16.mxu0 0
    %1253 = vmatmul.mubr.bf16.gmra.mxu0 %v1215
    %v1254 = vpop.f32.mrf.mxu0
    %v1255 = vadd.f32 0.0, %v1254
    %v1256 = vpop.f32.mrf.mxu0
    %v1257 = vpop.f32.mrf.mxu0
    %v1258 = vpop.f32.mrf.mxu0
    %1259 = vdwg.mxu0
    %1260 = vrot.lane.b32.xlu0 %v425, 72
    %v1261 = vpop.permute.xlu0 %1260
    %v1263 = vsel %vm428, %v1211, 0
    %v1266 = vsel %vm550, %v1261, 0
    %1268 = vmatprep.subr.bf16.mxu0 0
    %1269 = vmatpush1.bf16.msra.mxu0 0
    %1270 = vmatprep.subr.bf16.mxu0 0
    %1271 = vmatpush1.bf16.msra.mxu0 0
    %1272 = vmatprep.subr.bf16.mxu0 0
    %1273 = vmatpush1.bf16.msra.mxu0 0
    %1274 = vmatprep.subr.bf16.mxu0 0
    %1275 = vmatpush1.bf16.msra.mxu0 0
    %1276 = vmatprep.subr.bf16.mxu0 0
    %1277 = vmatpush1.bf16.msra.mxu0 0
    %1278 = vmatprep.subr.bf16.mxu0 0
    %1279 = vmatpush1.bf16.msra.mxu0 0
    %1280 = vmatprep.subr.bf16.mxu0 0
    %1281 = vmatpush1.bf16.msra.mxu0 0
    %1282 = vmatprep.subr.bf16.mxu0 0
    %1283 = vmatpush1.bf16.msra.mxu0 %v1266
    %1284 = vmatprep.subr.bf16.mxu0 0
    %1285 = vmatpush2.bf16.msra.mxu0 0
    %1286 = vmatprep.subr.bf16.mxu0 0
    %1287 = vmatpush2.bf16.msra.mxu0 0
    %1288 = vmatprep.subr.bf16.mxu0 0
    %1289 = vmatpush2.bf16.msra.mxu0 0
    %1290 = vmatprep.subr.bf16.mxu0 0
    %1291 = vmatpush2.bf16.msra.mxu0 0
    %1292 = vmatprep.subr.bf16.mxu0 0
    %1293 = vmatpush2.bf16.msra.mxu0 0
    %1294 = vmatprep.subr.bf16.mxu0 0
    %1295 = vmatpush2.bf16.msra.mxu0 0
    %1296 = vmatprep.subr.bf16.mxu0 0
    %1297 = vmatpush2.bf16.msra.mxu0 0
    %1298 = vmatprep.subr.bf16.mxu0 0
    %1299 = vmatpush2.bf16.msra.mxu0 0
    %1300 = vmatprep.mubr.bf16.mxu0 0
    %1301 = vmatmul.mubr.bf16.gmra.mxu0 %v1263
    %v1302 = vpop.f32.mrf.mxu0
    %v1303 = vadd.f32 0.0, %v1302
    %v1304 = vpop.f32.mrf.mxu0
    %v1305 = vpop.f32.mrf.mxu0
    %v1306 = vpop.f32.mrf.mxu0
    %1307 = vdwg.mxu0
    %v1308 = vpack.c.bf16 %v1255, %v1255
    %v1309 = vpack.c.bf16 %v1303, %v1303
    %1312 = vrot.lane.b32.xlu0 %v864, 8
    %v1313 = vpop.permute.xlu0 %1312
    %1314 = vrot.lane.b32.xlu0 %v865, 8
    %v1315 = vpop.permute.xlu0 %1314
    %1318 = vrot.lane.b32.xlu0 %v1086, 16
    %v1319 = vpop.permute.xlu0 %1318
    %1320 = vrot.lane.b32.xlu0 %v1087, 16
    %v1321 = vpop.permute.xlu0 %1320
    %1324 = vrot.lane.b32.xlu0 %v1308, 24
    %v1325 = vpop.permute.xlu0 %1324
    %1326 = vrot.lane.b32.xlu0 %v1309, 24
    %v1327 = vpop.permute.xlu0 %1326
    %v1330 = vsel %vm428, %v642, %v1313
    %v1333 = vsel %vm428, %v643, %v1315
    %vm1334 = vcmask 130048
    %v1336 = vsel %vm1334, %v1330, %v1319
    %v1338 = vsel %vm1334, %v1333, %v1321
    %vm1339 = vcmask 195584
    %v1341 = vsel %vm1339, %v1336, %v1325
    %v1343 = vsel %vm1339, %v1338, %v1327
    %v1344 = vld [vmem:[%s8] sm:$0xf]
    %v1345 = vld [vmem:[%s8 + $0x4] sm:$0xf]
    %v1346 = vld [vmem:[%s8 + $0x8] sm:$0xf]
    %v1347 = vld [vmem:[%s8 + $0xc] sm:$0xf]
    %v1348 = vld [vmem:[%s9] sm:$0x1]
    %v1350 = vlaneseq
    %v1351 = vshrl.u32 %v1350, 7
    %v1352 = vsub.s32 0, %v1351
    %v1353 = vrot.slane %v1348, %v1352
    %v1357 = vunpack.c.l.b16 %v1341
    %v1358 = vunpack.c.l.b16 %v1343
    %v1359 = vpack.c.b16 %v1358, %v1357
    %v1364 = vunpack.c.l.b16 %v1344
    %v1365 = vunpack.c.l.b16 %v1345
    %v1366 = vunpack.c.l.b16 %v1346
    %v1367 = vunpack.c.l.b16 %v1347
    %v1368 = vpack.c.b16 %v1365, %v1364
    %v1369 = vpack.c.b16 %v1367, %v1366
    %v1373 = vsel %vm229, %v1359, 0
    %1375 = vmatprep.subr.bf16.mxu0 0
    %1376 = vmatpush1.bf16.msra.mxu0 0
    %1377 = vmatprep.subr.bf16.mxu0 0
    %1378 = vmatpush1.bf16.msra.mxu0 0
    %1379 = vmatprep.subr.bf16.mxu0 0
    %1380 = vmatpush1.bf16.msra.mxu0 0
    %1381 = vmatprep.subr.bf16.mxu0 0
    %1382 = vmatpush1.bf16.msra.mxu0 0
    %1383 = vmatprep.subr.bf16.mxu0 0
    %1384 = vmatpush1.bf16.msra.mxu0 0
    %1385 = vmatprep.subr.bf16.mxu0 0
    %1386 = vmatpush1.bf16.msra.mxu0 0
    %1387 = vmatprep.subr.bf16.mxu0 0
    %1388 = vmatpush1.bf16.msra.mxu0 %v1369
    %1389 = vmatprep.subr.bf16.mxu0 0
    %1390 = vmatpush1.bf16.msra.mxu0 %v1368
    %1391 = vmatprep.subr.bf16.mxu0 0
    %1392 = vmatpush2.bf16.msra.mxu0 0
    %1393 = vmatprep.subr.bf16.mxu0 0
    %1394 = vmatpush2.bf16.msra.mxu0 0
    %1395 = vmatprep.subr.bf16.mxu0 0
    %1396 = vmatpush2.bf16.msra.mxu0 0
    %1397 = vmatprep.subr.bf16.mxu0 0
    %1398 = vmatpush2.bf16.msra.mxu0 0
    %1399 = vmatprep.subr.bf16.mxu0 0
    %1400 = vmatpush2.bf16.msra.mxu0 0
    %1401 = vmatprep.subr.bf16.mxu0 0
    %1402 = vmatpush2.bf16.msra.mxu0 0
    %1403 = vmatprep.subr.bf16.mxu0 0
    %1404 = vmatpush2.bf16.msra.mxu0 0
    %1405 = vmatprep.subr.bf16.mxu0 0
    %1406 = vmatpush2.bf16.msra.mxu0 0
    %1407 = vmatprep.mubr.bf16.mxu0 0
    %1408 = vmatmul.mubr.bf16.gmra.mxu0 %v1373
    %v1409 = vpop.f32.mrf.mxu0
    %v1410 = vadd.f32 %v1353, %v1409
    %v1411 = vpop.f32.mrf.mxu0
    %v1412 = vpop.f32.mrf.mxu0
    %v1413 = vadd.f32 %v1353, %v1412
    %v1414 = vpop.f32.mrf.mxu0
    %1415 = vdwg.mxu0
    %v1416 = vadd.f32 %v268, %v1410
    %v1417 = vadd.f32 %v271, %v1413
    %v1418 = vld [vmem:[%s10] sm:$0x1]
    %v1419 = vld [vmem:[%s11] sm:$0x1]
    %v1420 = vsel %vm229, %v1416, 0.0
    %1421 = vadd.xlane.f32.xlu0 %v1420
    %v1422 = vpop.xlane.xlu0 %1421
    %v1423 = vsel %vm229, %v1417, 0.0
    %1424 = vadd.xlane.f32.xlu0 %v1423
    %v1425 = vpop.xlane.xlu0 %1424
    %v1426 = vrcp.pop 32.0
    %v1427 = vmul.f32 %v1422, %v1426
    %v1428 = vmul.f32 %v1425, %v1426
    %v1429 = vsub.f32 %v1416, %v1427
    %v1430 = vsub.f32 %v1417, %v1428
    %v1431 = vmul.f32 %v1429, %v1429
    %v1432 = vmul.f32 %v1430, %v1430
    %v1433 = vsel %vm229, %v1431, 0.0
    %1434 = vadd.xlane.f32.xlu0 %v1433
    %v1435 = vpop.xlane.xlu0 %1434
    %v1436 = vsel %vm229, %v1432, 0.0
    %1437 = vadd.xlane.f32.xlu0 %v1436
    %v1438 = vpop.xlane.xlu0 %1437
    %v1439 = vmul.f32 %v1435, %v1426
    %v1440 = vmul.f32 %v1438, %v1426
    %v1441 = vadd.f32 %v1439, 1e-05
    %v1442 = vadd.f32 %v1440, 1e-05
    %v1443 = vrsqrt.pop %v1441
    %v1444 = vrsqrt.pop %v1442
    %v1445 = vmul.f32 %v1429, %v1443
    %v1446 = vmul.f32 %v1430, %v1444
    %v1448 = vlaneseq
    %v1449 = vshrl.u32 %v1448, 7
    %v1450 = vsub.s32 0, %v1449
    %v1451 = vrot.slane %v1418, %v1450
    %v1453 = vmul.f32 %v1445, %v1451
    %v1454 = vmul.f32 %v1446, %v1451
    %v1456 = vlaneseq
    %v1457 = vshrl.u32 %v1456, 7
    %v1458 = vsub.s32 0, %v1457
    %v1459 = vrot.slane %v1419, %v1458
    %v1461 = vadd.f32 %v1453, %v1459
    %v1462 = vadd.f32 %v1454, %v1459
    %v1463 = vpack.c.bf16 %v1462, %v1461
    %v1464 = vld [vmem:[#allocation17] sm:$0xf]
    %v1465 = vld [vmem:[#allocation17 + $0x4] sm:$0xf]
    %v1466 = vld [vmem:[#allocation17 + $0x8] sm:$0xf]
    %v1467 = vld [vmem:[#allocation17 + $0xc] sm:$0xf]
    %v1468 = vld [vmem:[%s13] sm:$0x1]
    %v1470 = vlaneseq
    %v1471 = vshrl.u32 %v1470, 7
    %v1472 = vsub.s32 0, %v1471
    %v1473 = vrot.slane %v1468, %v1472
    %v1479 = vunpack.c.l.b16 %v1464
    %v1480 = vunpack.c.l.b16 %v1465
    %v1481 = vunpack.c.l.b16 %v1466
    %v1482 = vunpack.c.l.b16 %v1467
    %v1483 = vpack.c.b16 %v1480, %v1479
    %v1484 = vpack.c.b16 %v1482, %v1481
    %v1488 = vsel %vm229, %v1463, 0
    %1490 = vmatprep.subr.bf16.mxu0 0
    %1491 = vmatpush1.bf16.msra.mxu0 0
    %1492 = vmatprep.subr.bf16.mxu0 0
    %1493 = vmatpush1.bf16.msra.mxu0 0
    %1494 = vmatprep.subr.bf16.mxu0 0
    %1495 = vmatpush1.bf16.msra.mxu0 0
    %1496 = vmatprep.subr.bf16.mxu0 0
    %1497 = vmatpush1.bf16.msra.mxu0 0
    %1498 = vmatprep.subr.bf16.mxu0 0
    %1499 = vmatpush1.bf16.msra.mxu0 0
    %1500 = vmatprep.subr.bf16.mxu0 0
    %1501 = vmatpush1.bf16.msra.mxu0 0
    %1502 = vmatprep.subr.bf16.mxu0 0
    %1503 = vmatpush1.bf16.msra.mxu0 %v1484
    %1504 = vmatprep.subr.bf16.mxu0 0
    %1505 = vmatpush1.bf16.msra.mxu0 %v1483
    %1506 = vmatprep.subr.bf16.mxu0 0
    %1507 = vmatpush2.bf16.msra.mxu0 0
    %1508 = vmatprep.subr.bf16.mxu0 0
    %1509 = vmatpush2.bf16.msra.mxu0 0
    %1510 = vmatprep.subr.bf16.mxu0 0
    %1511 = vmatpush2.bf16.msra.mxu0 0
    %1512 = vmatprep.subr.bf16.mxu0 0
    %1513 = vmatpush2.bf16.msra.mxu0 0
    %1514 = vmatprep.subr.bf16.mxu0 0
    %1515 = vmatpush2.bf16.msra.mxu0 0
    %1516 = vmatprep.subr.bf16.mxu0 0
    %1517 = vmatpush2.bf16.msra.mxu0 0
    %1518 = vmatprep.subr.bf16.mxu0 0
    %1519 = vmatpush2.bf16.msra.mxu0 0
    %1520 = vmatprep.subr.bf16.mxu0 0
    %1521 = vmatpush2.bf16.msra.mxu0 0
    %1522 = vmatprep.mubr.bf16.mxu0 0
    %1523 = vmatmul.mubr.bf16.gmra.mxu0 %v1488
    %v1524 = vpop.f32.mrf.mxu0
    %v1525 = vadd.f32 %v1473, %v1524
    %v1526 = vpop.f32.mrf.mxu0
    %v1527 = vpop.f32.mrf.mxu0
    %v1528 = vadd.f32 %v1473, %v1527
    %v1529 = vpop.f32.mrf.mxu0
    %1530 = vdwg.mxu0
    %v1531 = vmax.f32 %v1525, 0.0
    %v1532 = vmax.f32 %v1528, 0.0
    %v1533 = vpack.c.bf16 %v1532, %v1531
    %v1534 = vld [vmem:[#allocation18] sm:$0xf]
    %v1535 = vld [vmem:[#allocation18 + $0x4] sm:$0xf]
    %v1536 = vld [vmem:[#allocation18 + $0x8] sm:$0xf]
    %v1537 = vld [vmem:[#allocation18 + $0xc] sm:$0xf]
    %v1538 = vld [vmem:[%s15] sm:$0x1]
    %v1540 = vlaneseq
    %v1541 = vshrl.u32 %v1540, 7
    %v1542 = vsub.s32 0, %v1541
    %v1543 = vrot.slane %v1538, %v1542
    %v1549 = vunpack.c.l.b16 %v1534
    %v1550 = vunpack.c.l.b16 %v1535
    %v1551 = vunpack.c.l.b16 %v1536
    %v1552 = vunpack.c.l.b16 %v1537
    %v1553 = vpack.c.b16 %v1550, %v1549
    %v1554 = vpack.c.b16 %v1552, %v1551
    %v1558 = vsel %vm229, %v1533, 0
    %1560 = vmatprep.subr.bf16.mxu0 0
    %1561 = vmatpush1.bf16.msra.mxu0 0
    %1562 = vmatprep.subr.bf16.mxu0 0
    %1563 = vmatpush1.bf16.msra.mxu0 0
    %1564 = vmatprep.subr.bf16.mxu0 0
    %1565 = vmatpush1.bf16.msra.mxu0 0
    %1566 = vmatprep.subr.bf16.mxu0 0
    %1567 = vmatpush1.bf16.msra.mxu0 0
    %1568 = vmatprep.subr.bf16.mxu0 0
    %1569 = vmatpush1.bf16.msra.mxu0 0
    %1570 = vmatprep.subr.bf16.mxu0 0
    %1571 = vmatpush1.bf16.msra.mxu0 0
    %1572 = vmatprep.subr.bf16.mxu0 0
    %1573 = vmatpush1.bf16.msra.mxu0 %v1554
    %1574 = vmatprep.subr.bf16.mxu0 0
    %1575 = vmatpush1.bf16.msra.mxu0 %v1553
    %1576 = vmatprep.subr.bf16.mxu0 0
    %1577 = vmatpush2.bf16.msra.mxu0 0
    %1578 = vmatprep.subr.bf16.mxu0 0
    %1579 = vmatpush2.bf16.msra.mxu0 0
    %1580 = vmatprep.subr.bf16.mxu0 0
    %1581 = vmatpush2.bf16.msra.mxu0 0
    %1582 = vmatprep.subr.bf16.mxu0 0
    %1583 = vmatpush2.bf16.msra.mxu0 0
    %1584 = vmatprep.subr.bf16.mxu0 0
    %1585 = vmatpush2.bf16.msra.mxu0 0
    %1586 = vmatprep.subr.bf16.mxu0 0
    %1587 = vmatpush2.bf16.msra.mxu0 0
    %1588 = vmatprep.subr.bf16.mxu0 0
    %1589 = vmatpush2.bf16.msra.mxu0 0
    %1590 = vmatprep.subr.bf16.mxu0 0
    %1591 = vmatpush2.bf16.msra.mxu0 0
    %1592 = vmatprep.mubr.bf16.mxu0 0
    %1593 = vmatmul.mubr.bf16.gmra.mxu0 %v1558
    %v1594 = vpop.f32.mrf.mxu0
    %v1595 = vadd.f32 %v1543, %v1594
    %v1596 = vpop.f32.mrf.mxu0
    %v1597 = vpop.f32.mrf.mxu0
    %v1598 = vadd.f32 %v1543, %v1597
    %v1599 = vpop.f32.mrf.mxu0
    %1600 = vdwg.mxu0
    %v1601 = vadd.f32 %v1595, %v1461
    %v1602 = vadd.f32 %v1598, %v1462
    %v1603 = vld [vmem:[%s16] sm:$0x1]
    %v1604 = vld [vmem:[%s17] sm:$0x1]
    %v1605 = vsel %vm229, %v1601, 0.0
    %1606 = vadd.xlane.f32.xlu0 %v1605
    %v1607 = vpop.xlane.xlu0 %1606
    %v1608 = vsel %vm229, %v1602, 0.0
    %1609 = vadd.xlane.f32.xlu0 %v1608
    %v1610 = vpop.xlane.xlu0 %1609
    %v1611 = vmul.f32 %v1607, %v1426
    %v1612 = vmul.f32 %v1610, %v1426
    %v1613 = vsub.f32 %v1601, %v1611
    %v1614 = vsub.f32 %v1602, %v1612
    %v1615 = vmul.f32 %v1613, %v1613
    %v1616 = vmul.f32 %v1614, %v1614
    %v1617 = vsel %vm229, %v1615, 0.0
    %1618 = vadd.xlane.f32.xlu0 %v1617
    %v1619 = vpop.xlane.xlu0 %1618
    %v1620 = vsel %vm229, %v1616, 0.0
    %1621 = vadd.xlane.f32.xlu0 %v1620
    %v1622 = vpop.xlane.xlu0 %1621
    %v1623 = vmul.f32 %v1619, %v1426
    %v1624 = vmul.f32 %v1622, %v1426
    %v1625 = vadd.f32 %v1623, 1e-05
    %v1626 = vadd.f32 %v1624, 1e-05
    %v1627 = vrsqrt.pop %v1625
    %v1628 = vrsqrt.pop %v1626
    %v1629 = vmul.f32 %v1613, %v1627
    %v1630 = vmul.f32 %v1614, %v1628
    %v1632 = vlaneseq
    %v1633 = vshrl.u32 %v1632, 7
    %v1634 = vsub.s32 0, %v1633
    %v1635 = vrot.slane %v1603, %v1634
    %v1637 = vmul.f32 %v1629, %v1635
    %v1638 = vmul.f32 %v1630, %v1635
    %v1640 = vlaneseq
    %v1641 = vshrl.u32 %v1640, 7
    %v1642 = vsub.s32 0, %v1641
    %v1643 = vrot.slane %v1604, %v1642
    %v1645 = vadd.f32 %v1637, %v1643
    %v1646 = vadd.f32 %v1638, %v1643
    %v1647 = vld [vmem:[%s18] sm:$0x1]
    %v1648 = vpack.c.bf16 %v1646, %v1645
    %v1649 = vld [vmem:[#allocation2] sm:$0x1]
    %1651 = vset.pattern.permute.xlu0 0
    %1652 = vperm.xlu0 %1651, %v1649
    %v1653 = vpop.permute.xlu0 %1652
    %v1655 = vlaneseq
    %v1656 = vshrl.u32 %v1655, 7
    %v1657 = vsub.s32 0, %v1656
    %v1658 = vrot.slane %v1653, %v1657
    %v1660 = vsel %vm229, %v1647, 0
    %v1663 = vsel %vm229, %v1648, 0
    %1665 = vmatprep.subr.bf16.mxu0 0
    %1666 = vmatpush1.bf16.xpose.msra.mxu0 0
    %1667 = vmatprep.subr.bf16.mxu0 0
    %1668 = vmatpush1.bf16.xpose.msra.mxu0 0
    %1669 = vmatprep.subr.bf16.mxu0 0
    %1670 = vmatpush1.bf16.xpose.msra.mxu0 0
    %1671 = vmatprep.subr.bf16.mxu0 0
    %1672 = vmatpush1.bf16.xpose.msra.mxu0 0
    %1673 = vmatprep.subr.bf16.mxu0 0
    %1674 = vmatpush1.bf16.xpose.msra.mxu0 0
    %1675 = vmatprep.subr.bf16.mxu0 0
    %1676 = vmatpush1.bf16.xpose.msra.mxu0 0
    %1677 = vmatprep.subr.bf16.mxu0 0
    %1678 = vmatpush1.bf16.xpose.msra.mxu0 0
    %1679 = vmatprep.subr.bf16.mxu0 0
    %1680 = vmatpush1.bf16.xpose.msra.mxu0 %v1663
    %1681 = vmatprep.subr.bf16.mxu0 0
    %1682 = vmatpush2.bf16.xpose.msra.mxu0 0
    %1683 = vmatprep.subr.bf16.mxu0 0
    %1684 = vmatpush2.bf16.xpose.msra.mxu0 0
    %1685 = vmatprep.subr.bf16.mxu0 0
    %1686 = vmatpush2.bf16.xpose.msra.mxu0 0
    %1687 = vmatprep.subr.bf16.mxu0 0
    %1688 = vmatpush2.bf16.xpose.msra.mxu0 0
    %1689 = vmatprep.subr.bf16.mxu0 0
    %1690 = vmatpush2.bf16.xpose.msra.mxu0 0
    %1691 = vmatprep.subr.bf16.mxu0 0
    %1692 = vmatpush2.bf16.xpose.msra.mxu0 0
    %1693 = vmatprep.subr.bf16.mxu0 0
    %1694 = vmatpush2.bf16.xpose.msra.mxu0 0
    %1695 = vmatprep.subr.bf16.mxu0 0
    %1696 = vmatpush2.bf16.xpose.msra.mxu0 0
    %1697 = vmatprep.mubr.bf16.mxu0 0
    %1698 = vmatmul.mubr.bf16.gmra.mxu0 %v1660
    %v1699 = vpop.f32.mrf.mxu0
    %v1700 = vadd.f32 %v1658, %v1699
    %v1701 = vpop.f32.mrf.mxu0
    %v1702 = vpop.f32.mrf.mxu0
    %v1703 = vpop.f32.mrf.mxu0
    %1704 = vdwg.mxu0
    %v1705 = vxor.u32 %v1700, 2147483648
    %v1706 = vmul.f32 %v1705, 1.442695
    %v1707 = vpow.pop %v1706
    %v1708 = vadd.f32 %v1707, 1.0
    %v1709 = vrcp.pop %v1708
    %v1710 = vmul.f32 1.0, %v1709
    %vm1711 = vcmask 122880
    %1712 = vst.msk [vmem:[#allocation20] sm:$0x1] %vm1711, %v1710
    // Predicated region
    $region122: #{tpu_custom_call.1} parent=1 // pred_check
      _
    $region123: #{tpu_custom_call.1} parent=1 // pred_check_branch
      %1714 = sbr.rel (0) target = $region125
    $region124: #{tpu_custom_call.1} parent=1 // pred_region
      %s1716 = ssub.s32 16, 16
      %1717 = vsyncadd [#allocation5], %s1716
      %s1719 = sshll.u32 [#allocation20], 4
      %s1720 = int_to_ptr.vmem [resolvable:$true] %s1719
      %1722 = dma.vmem_to_hbm [thread:$0]  %s1720, 16, %s20, [#allocation5]
    $region125: #{tpu_custom_call.1} parent=1 // pred_fallthru
      _
    // Predicated region
    $region126: #{tpu_custom_call.1} parent=1 // pred_check
      _
    $region127: #{tpu_custom_call.1} parent=1 // pred_check_branch
      %1724 = sbr.rel (0) target = $region129
    $region128: #{tpu_custom_call.1} parent=1 // pred_region
      %1725 = dma.done [#allocation5], 16
    $region129: #{tpu_custom_call.1} parent=1 // pred_fallthru
      _
    %1726 = vsyncpa [#allocation4], 1
    %1727 = vsyncpa [#allocation7], 1
    %1728 = vsyncpa [#allocation10], 1
    %1729 = vsyncpa [#allocation13], 1
    %1730 = vsyncpa [#allocation16], 1
    %1731 = vsyncpa [#allocation19], 1
    %1732 = vsyncpa [#allocation5], 1

// kernel: tpu_custom_call.1
$region0: #{tpu_custom_call.1}
  #allocation0 [shape = 'u32[]', space=smem, size = 0x4, offset = 0x4, fixed_abs, tag = 'smem constant byte address 0x4 - core index']
  #allocation1 [shape = 'u32[144,128]{1,0:T(1,128)}', space=vmem, size = 0x12000, scoped, tag = 'internal scratch']
  #allocation2 [shape = 'f32[1,1]{1,0:T(1,128)S(1)}', space=vmem, size = 0x200, scoped, tag = 'scoped memory for tpu_custom_call.1']
  %s0 = inlined_call_operand.hbm [shape: bf16[2,2,8,32], index: 0, kind: input, shape index: {}]
  %s1 = inlined_call_operand.hbm [shape: bf16[8,8], index: 1, kind: input, shape index: {}]
  %s2 = inlined_call_operand.hbm [shape: bf16[32,32], index: 2, kind: input, shape index: {}]
  %s3 = inlined_call_operand.hbm [shape: f32[1,32], index: 3, kind: input, shape index: {}]
  %s4 = inlined_call_operand.hbm [shape: bf16[32,32], index: 4, kind: input, shape index: {}]
  %s5 = inlined_call_operand.hbm [shape: f32[1,32], index: 5, kind: input, shape index: {}]
  %s6 = inlined_call_operand.hbm [shape: bf16[32,64], index: 6, kind: input, shape index: {}]
  %s7 = inlined_call_operand.hbm [shape: f32[1,64], index: 7, kind: input, shape index: {}]
  %s8 = inlined_call_operand.vmem [shape: bf16[32,32], index: 8, kind: input, shape index: {}]
  %s9 = inlined_call_operand.vmem [shape: f32[1,32], index: 9, kind: input, shape index: {}]
  %s10 = inlined_call_operand.vmem [shape: f32[1,32], index: 10, kind: input, shape index: {}]
  %s11 = inlined_call_operand.vmem [shape: f32[1,32], index: 11, kind: input, shape index: {}]
  %s12 = inlined_call_operand.hbm [shape: bf16[32,32], index: 12, kind: input, shape index: {}]
  %s13 = inlined_call_operand.vmem [shape: f32[1,32], index: 13, kind: input, shape index: {}]
  %s14 = inlined_call_operand.hbm [shape: bf16[32,32], index: 14, kind: input, shape index: {}]
  %s15 = inlined_call_operand.vmem [shape: f32[1,32], index: 15, kind: input, shape index: {}]
  %s16 = inlined_call_operand.vmem [shape: f32[1,32], index: 16, kind: input, shape index: {}]
  %s17 = inlined_call_operand.vmem [shape: f32[1,32], index: 17, kind: input, shape index: {}]
  %s18 = inlined_call_operand.vmem [shape: bf16[1,32], index: 18, kind: input, shape index: {}]
  %s19 = inlined_call_operand.<no memory space> [shape: f32[1,1], index: 19, kind: input, shape index: {}]
  %s20 = inlined_call_operand.hbm [shape: f32[1,1,16], index: 20, kind: output, shape index: {}]
  %s21 = sld [smem:[#allocation0]]
  $region130: #{tpu_custom_call.1} parent=0
    _
  %s23 = ssub.s32 1, %s21
  %s24 = scalar_select 0, %s23, %s21
  %v25 = vstv %s19
  %26 = vst [vmem:[#allocation2] sm:$0x1] %v25
  $region1: #{tpu_custom_call.1} parent=0
    #allocation3 [shape = 'u8[8192]{0}', space=vmem, size = 0x2000, scoped, tag = 'input window, operand 0, single buffered']
    #allocation4 [shape = 's32[1]{0}', space=sflag, size = 0x4, scoped, tag = 'scoped memory for tpu_custom_call.1']
    #allocation5 [shape = 's32[1]{0}', space=sflag, size = 0x4, scoped, tag = 'scoped memory for tpu_custom_call.1']
    #allocation6 [shape = 'u8[2048]{0}', space=vmem, size = 0x800, scoped, tag = 'input window, operand 1, single buffered']
    #allocation7 [shape = 's32[1]{0}', space=sflag, size = 0x4, scoped, tag = 'scoped memory for tpu_custom_call.1']
    #allocation8 [shape = 'u8[8192]{0}', space=vmem, size = 0x2000, scoped, tag = 'input window, operand 2, single buffered']
    #allocation9 [shape = 'u8[512]{0}', space=vmem, size = 0x400, scoped, tag = 'input window, operand 3, single buffered']
    #allocation10 [shape = 's32[1]{0}', space=sflag, size = 0x4, scoped, tag = 'scoped memory for tpu_custom_call.1']
    #allocation11 [shape = 'u8[8192]{0}', space=vmem, size = 0x2000, scoped, tag = 'input window, operand 4, single buffered']
    #allocation12 [shape = 'u8[512]{0}', space=vmem, size = 0x400, scoped, tag = 'input window, operand 5, single buffered']
    #allocation13 [shape = 's32[1]{0}', space=sflag, size = 0x4, scoped, tag = 'scoped memory for tpu_custom_call.1']
    #allocation14 [shape = 'u8[8192]{0}', space=vmem, size = 0x2000, scoped, tag = 'input window, operand 6, single buffered']
    #allocation15 [shape = 'u8[512]{0}', space=vmem, size = 0x400, scoped, tag = 'input window, operand 7, single buffered']
    #allocation16 [shape = 's32[1]{0}', space=sflag, size = 0x4, scoped, tag = 'scoped memory for tpu_custom_call.1']
    #allocation17 [shape = 'u8[8192]{0}', space=vmem, size = 0x2000, scoped, tag = 'input window, operand 12, single buffered']
    #allocation18 [shape = 'u8[8192]{0}', space=vmem, size = 0x2000, scoped, tag = 'input window, operand 14, single buffered']
    #allocation19 [shape = 's32[1]{0}', space=sflag, size = 0x4, scoped, tag = 'scoped memory for tpu_custom_call.1']
    #allocation20 [shape = 'u8[512]{0}', space=vmem, size = 0x400, scoped, tag = 'output window, operand 0, single buffered']
    %27 = vsyncpa [#allocation4], 0
    %28 = vsyncpa [#allocation7], 0
    %29 = vsyncpa [#allocation10], 0
    %30 = vsyncpa [#allocation13], 0
    %31 = vsyncpa [#allocation16], 0
    %32 = vsyncpa [#allocation19], 0
    %33 = vsyncpa [#allocation5], 0
    // Predicated region
    $region2: #{tpu_custom_call.1} parent=1 // pred_check
      _
    $region3: #{tpu_custom_call.1} parent=1 // pred_check_branch
      %35 = sbr.rel (0) target = $region5
    $region4: #{tpu_custom_call.1} parent=1 // pred_region
      %s37 = ssub.s32 256, 256
      %38 = vsyncadd [#allocation4], %s37
      %s39 = sshll.u32 [#allocation3], 4
      %s40 = int_to_ptr.vmem [resolvable:$true] %s39
      %45 = dma.hbm_to_vmem [thread:$0]  %s0, 256, %s40, [#allocation4], 64, 64, 4
    $region5: #{tpu_custom_call.1} parent=1 // pred_fallthru
      _
    // Predicated region
    $region6: #{tpu_custom_call.1} parent=1 // pred_check
      _
    $region7: #{tpu_custom_call.1} parent=1 // pred_check_branch
      %47 = sbr.rel (0) target = $region9
    $region8: #{tpu_custom_call.1} parent=1 // pred_region
      %s49 = ssub.s32 64, 64
      %50 = vsyncadd [#allocation7], %s49
      %s52 = sshll.u32 [#allocation6], 4
      %s53 = int_to_ptr.vmem [resolvable:$true] %s52
      %55 = dma.hbm_to_vmem [thread:$0]  %s1, 64, %s53, [#allocation7]
    $region9: #{tpu_custom_call.1} parent=1 // pred_fallthru
      _
    // Predicated region
    $region10: #{tpu_custom_call.1} parent=1 // pred_check
      _
    $region11: #{tpu_custom_call.1} parent=1 // pred_check_branch
      %57 = sbr.rel (0) target = $region13
    $region12: #{tpu_custom_call.1} parent=1 // pred_region
      %s59 = ssub.s32 256, 256
      %60 = vsyncadd [#allocation7], %s59
      %s61 = sshll.u32 [#allocation8], 4
      %s62 = int_to_ptr.vmem [resolvable:$true] %s61
      %67 = dma.hbm_to_vmem [thread:$0]  %s2, 256, %s62, [#allocation7], 64, 64, 4
    $region13: #{tpu_custom_call.1} parent=1 // pred_fallthru
      _
    // Predicated region
    $region14: #{tpu_custom_call.1} parent=1 // pred_check
      _
    $region15: #{tpu_custom_call.1} parent=1 // pred_check_branch
      %69 = sbr.rel (0) target = $region17
    $region16: #{tpu_custom_call.1} parent=1 // pred_region
      %s71 = ssub.s32 16, 16
      %72 = vsyncadd [#allocation10], %s71
      %s74 = sshll.u32 [#allocation9], 4
      %s75 = int_to_ptr.vmem [resolvable:$true] %s74
      %77 = dma.hbm_to_vmem [thread:$0]  %s3, 16, %s75, [#allocation10]
    $region17: #{tpu_custom_call.1} parent=1 // pred_fallthru
      _
    // Predicated region
    $region18: #{tpu_custom_call.1} parent=1 // pred_check
      _
    $region19: #{tpu_custom_call.1} parent=1 // pred_check_branch
      %79 = sbr.rel (0) target = $region21
    $region20: #{tpu_custom_call.1} parent=1 // pred_region
      %s81 = ssub.s32 256, 256
      %82 = vsyncadd [#allocation10], %s81
      %s83 = sshll.u32 [#allocation11], 4
      %s84 = int_to_ptr.vmem [resolvable:$true] %s83
      %89 = dma.hbm_to_vmem [thread:$0]  %s4, 256, %s84, [#allocation10], 64, 64, 4
    $region21: #{tpu_custom_call.1} parent=1 // pred_fallthru
      _
    // Predicated region
    $region22: #{tpu_custom_call.1} parent=1 // pred_check
      _
    $region23: #{tpu_custom_call.1} parent=1 // pred_check_branch
      %91 = sbr.rel (0) target = $region25
    $region24: #{tpu_custom_call.1} parent=1 // pred_region
      %s93 = ssub.s32 16, 16
      %94 = vsyncadd [#allocation13], %s93
      %s96 = sshll.u32 [#allocation12], 4
      %s97 = int_to_ptr.vmem [resolvable:$true] %s96
      %99 = dma.hbm_to_vmem [thread:$0]  %s5, 16, %s97, [#allocation13]
    $region25: #{tpu_custom_call.1} parent=1 // pred_fallthru
      _
    // Predicated region
    $region26: #{tpu_custom_call.1} parent=1 // pred_check
      _
    $region27: #{tpu_custom_call.1} parent=1 // pred_check_branch
      %101 = sbr.rel (0) target = $region29
    $region28: #{tpu_custom_call.1} parent=1 // pred_region
      %s103 = ssub.s32 256, 256
      %104 = vsyncadd [#allocation13], %s103
      %s105 = sshll.u32 [#allocation14], 4
      %s106 = int_to_ptr.vmem [resolvable:$true] %s105
      %111 = dma.hbm_to_vmem [thread:$0]  %s6, 256, %s106, [#allocation13], 64, 64, 4
    $region29: #{tpu_custom_call.1} parent=1 // pred_fallthru
      _
    // Predicated region
    $region30: #{tpu_custom_call.1} parent=1 // pred_check
      _
    $region31: #{tpu_custom_call.1} parent=1 // pred_check_branch
      %113 = sbr.rel (0) target = $region33
    $region32: #{tpu_custom_call.1} parent=1 // pred_region
      %s115 = ssub.s32 16, 16
      %116 = vsyncadd [#allocation16], %s115
      %s118 = sshll.u32 [#allocation15], 4
      %s119 = int_to_ptr.vmem [resolvable:$true] %s118
      %121 = dma.hbm_to_vmem [thread:$0]  %s7, 16, %s119, [#allocation16]
    $region33: #{tpu_custom_call.1} parent=1 // pred_fallthru
      _
    // Predicated region
    $region34: #{tpu_custom_call.1} parent=1 // pred_check
      _
    $region35: #{tpu_custom_call.1} parent=1 // pred_check_branch
      %123 = sbr.rel (0) target = $region37
    $region36: #{tpu_custom_call.1} parent=1 // pred_region
      _
    $region37: #{tpu_custom_call.1} parent=1 // pred_fallthru
      _
    // Predicated region
    $region38: #{tpu_custom_call.1} parent=1 // pred_check
      _
    $region39: #{tpu_custom_call.1} parent=1 // pred_check_branch
      %125 = sbr.rel (0) target = $region41
    $region40: #{tpu_custom_call.1} parent=1 // pred_region
      _
    $region41: #{tpu_custom_call.1} parent=1 // pred_fallthru
      _
    // Predicated region
    $region42: #{tpu_custom_call.1} parent=1 // pred_check
      _
    $region43: #{tpu_custom_call.1} parent=1 // pred_check_branch
      %127 = sbr.rel (0) target = $region45
    $region44: #{tpu_custom_call.1} parent=1 // pred_region
      _
    $region45: #{tpu_custom_call.1} parent=1 // pred_fallthru
      _
    // Predicated region
    $region46: #{tpu_custom_call.1} parent=1 // pred_check
      _
    $region47: #{tpu_custom_call.1} parent=1 // pred_check_branch
      %129 = sbr.rel (0) target = $region49
    $region48: #{tpu_custom_call.1} parent=1 // pred_region
      _
    $region49: #{tpu_custom_call.1} parent=1 // pred_fallthru
      _
    // Predicated region
    $region50: #{tpu_custom_call.1} parent=1 // pred_check
      _
    $region51: #{tpu_custom_call.1} parent=1 // pred_check_branch
      %131 = sbr.rel (0) target = $region53
    $region52: #{tpu_custom_call.1} parent=1 // pred_region
      %s133 = ssub.s32 256, 256
      %134 = vsyncadd [#allocation16], %s133
      %s135 = sshll.u32 [#allocation17], 4
      %s136 = int_to_ptr.vmem [resolvable:$true] %s135
      %141 = dma.hbm_to_vmem [thread:$0]  %s12, 256, %s136, [#allocation16], 64, 64, 4
    $region53: #{tpu_custom_call.1} parent=1 // pred_fallthru
      _
    // Predicated region
    $region54: #{tpu_custom_call.1} parent=1 // pred_check
      _
    $region55: #{tpu_custom_call.1} parent=1 // pred_check_branch
      %143 = sbr.rel (0) target = $region57
    $region56: #{tpu_custom_call.1} parent=1 // pred_region
      _
    $region57: #{tpu_custom_call.1} parent=1 // pred_fallthru
      _
    // Predicated region
    $region58: #{tpu_custom_call.1} parent=1 // pred_check
      _
    $region59: #{tpu_custom_call.1} parent=1 // pred_check_branch
      %145 = sbr.rel (0) target = $region61
    $region60: #{tpu_custom_call.1} parent=1 // pred_region
      %s147 = ssub.s32 256, 256
      %148 = vsyncadd [#allocation19], %s147
      %s149 = sshll.u32 [#allocation18], 4
      %s150 = int_to_ptr.vmem [resolvable:$true] %s149
      %155 = dma.hbm_to_vmem [thread:$0]  %s14, 256, %s150, [#allocation19], 64, 64, 4
    $region61: #{tpu_custom_call.1} parent=1 // pred_fallthru
      _
    // Predicated region
    $region62: #{tpu_custom_call.1} parent=1 // pred_check
      _
    $region63: #{tpu_custom_call.1} parent=1 // pred_check_branch
      %157 = sbr.rel (0) target = $region65
    $region64: #{tpu_custom_call.1} parent=1 // pred_region
      _
    $region65: #{tpu_custom_call.1} parent=1 // pred_fallthru
      _
    // Predicated region
    $region66: #{tpu_custom_call.1} parent=1 // pred_check
      _
    $region67: #{tpu_custom_call.1} parent=1 // pred_check_branch
      %159 = sbr.rel (0) target = $region69
    $region68: #{tpu_custom_call.1} parent=1 // pred_region
      _
    $region69: #{tpu_custom_call.1} parent=1 // pred_fallthru
      _
    // Predicated region
    $region70: #{tpu_custom_call.1} parent=1 // pred_check
      _
    $region71: #{tpu_custom_call.1} parent=1 // pred_check_branch
      %161 = sbr.rel (0) target = $region73
    $region72: #{tpu_custom_call.1} parent=1 // pred_region
      _
    $region73: #{tpu_custom_call.1} parent=1 // pred_fallthru
      _
    // Predicated region
    $region74: #{tpu_custom_call.1} parent=1 // pred_check
      _
    $region75: #{tpu_custom_call.1} parent=1 // pred_check_branch
      %163 = sbr.rel (0) target = $region77
    $region76: #{tpu_custom_call.1} parent=1 // pred_region
      _
    $region77: #{tpu_custom_call.1} parent=1 // pred_fallthru
      _
    // Predicated region
    $region78: #{tpu_custom_call.1} parent=1 // pred_check
      _
    $region79: #{tpu_custom_call.1} parent=1 // pred_check_branch
      %165 = sbr.rel (0) target = $region81
    $region80: #{tpu_custom_call.1} parent=1 // pred_region
      _
    $region81: #{tpu_custom_call.1} parent=1 // pred_fallthru
      _
    // Predicated region
    $region82: #{tpu_custom_call.1} parent=1 // pred_check
      _
    $region83: #{tpu_custom_call.1} parent=1 // pred_check_branch
      %167 = sbr.rel (0) target = $region85
    $region84: #{tpu_custom_call.1} parent=1 // pred_region
      %168 = dma.done [#allocation4], 256
    $region85: #{tpu_custom_call.1} parent=1 // pred_fallthru
      _
    // Predicated region
    $region86: #{tpu_custom_call.1} parent=1 // pred_check
      _
    $region87: #{tpu_custom_call.1} parent=1 // pred_check_branch
      %170 = sbr.rel (0) target = $region89
    $region88: #{tpu_custom_call.1} parent=1 // pred_region
      %171 = dma.done [#allocation7], 64
    $region89: #{tpu_custom_call.1} parent=1 // pred_fallthru
      _
    // Predicated region
    $region90: #{tpu_custom_call.1} parent=1 // pred_check
      _
    $region91: #{tpu_custom_call.1} parent=1 // pred_check_branch
      %173 = sbr.rel (0) target = $region93
    $region92: #{tpu_custom_call.1} parent=1 // pred_region
      %174 = dma.done [#allocation7], 256
    $region93: #{tpu_custom_call.1} parent=1 // pred_fallthru
      _
    // Predicated region
    $region94: #{tpu_custom_call.1} parent=1 // pred_check
      _
    $region95: #{tpu_custom_call.1} parent=1 // pred_check_branch
      %176 = sbr.rel (0) target = $region97
    $region96: #{tpu_custom_call.1} parent=1 // pred_region
      %177 = dma.done [#allocation10], 16
    $region97: #{tpu_custom_call.1} parent=1 // pred_fallthru
      _
    // Predicated region
    $region98: #{tpu_custom_call.1} parent=1 // pred_check
      _
    $region99: #{tpu_custom_call.1} parent=1 // pred_check_branch
      %179 = sbr.rel (0) target = $region101
    $region100: #{tpu_custom_call.1} parent=1 // pred_region
      %180 = dma.done [#allocation10], 256
    $region101: #{tpu_custom_call.1} parent=1 // pred_fallthru
      _
    // Predicated region
    $region102: #{tpu_custom_call.1} parent=1 // pred_check
      _
    $region103: #{tpu_custom_call.1} parent=1 // pred_check_branch
      %182 = sbr.rel (0) target = $region105
    $region104: #{tpu_custom_call.1} parent=1 // pred_region
      %183 = dma.done [#allocation13], 16
    $region105: #{tpu_custom_call.1} parent=1 // pred_fallthru
      _
    // Predicated region
    $region106: #{tpu_custom_call.1} parent=1 // pred_check
      _
    $region107: #{tpu_custom_call.1} parent=1 // pred_check_branch
      %185 = sbr.rel (0) target = $region109
    $region108: #{tpu_custom_call.1} parent=1 // pred_region
      %186 = dma.done [#allocation13], 256
    $region109: #{tpu_custom_call.1} parent=1 // pred_fallthru
      _
    // Predicated region
    $region110: #{tpu_custom_call.1} parent=1 // pred_check
      _
    $region111: #{tpu_custom_call.1} parent=1 // pred_check_branch
      %188 = sbr.rel (0) target = $region113
    $region112: #{tpu_custom_call.1} parent=1 // pred_region
      %189 = dma.done [#allocation16], 16
    $region113: #{tpu_custom_call.1} parent=1 // pred_fallthru
      _
    // Predicated region
    $region114: #{tpu_custom_call.1} parent=1 // pred_check
      _
    $region115: #{tpu_custom_call.1} parent=1 // pred_check_branch
      %191 = sbr.rel (0) target = $region117
    $region116: #{tpu_custom_call.1} parent=1 // pred_region
      %192 = dma.done [#allocation16], 256
    $region117: #{tpu_custom_call.1} parent=1 // pred_fallthru
      _
    // Predicated region
    $region118: #{tpu_custom_call.1} parent=1 // pred_check
      _
    $region119: #{tpu_custom_call.1} parent=1 // pred_check_branch
      %194 = sbr.rel (0) target = $region121
    $region120: #{tpu_custom_call.1} parent=1 // pred_region
      %195 = dma.done [#allocation19], 256
    $region121: #{tpu_custom_call.1} parent=1 // pred_fallthru
      _
    %v197 = vld [vmem:[#allocation3] sm:$0xf]
    %v198 = vld [vmem:[#allocation3 + $0x4] sm:$0xf]
    %v199 = vld [vmem:[#allocation3 + $0x8] sm:$0xf]
    %v200 = vld [vmem:[#allocation3 + $0xc] sm:$0xf]
    %v201 = vld [vmem:[#allocation8] sm:$0xf]
    %v202 = vld [vmem:[#allocation8 + $0x4] sm:$0xf]
    %v203 = vld [vmem:[#allocation8 + $0x8] sm:$0xf]
    %v204 = vld [vmem:[#allocation8 + $0xc] sm:$0xf]
    %v205 = vld [vmem:[#allocation9] sm:$0x1]
    %v207 = vlaneseq
    %v208 = vshrl.u32 %v207, 7
    %v209 = vsub.s32 0, %v208
    %v210 = vrot.slane %v205, %v209
    %v214 = vunpack.c.l.b16 %v198
    %v215 = vunpack.c.l.b16 %v200
    %v216 = vpack.c.b16 %v215, %v214
    %v221 = vunpack.c.l.b16 %v201
    %v222 = vunpack.c.l.b16 %v202
    %v223 = vunpack.c.l.b16 %v203
    %v224 = vunpack.c.l.b16 %v204
    %v225 = vpack.c.b16 %v222, %v221
    %v226 = vpack.c.b16 %v224, %v223
    %vm229 = vcmask 261120
    %v231 = vsel %vm229, %v216, 0
    %233 = vmatprep.subr.bf16.mxu0 0
    %234 = vmatpush1.bf16.msra.mxu0 0
    %235 = vmatprep.subr.bf16.mxu0 0
    %236 = vmatpush1.bf16.msra.mxu0 0
    %237 = vmatprep.subr.bf16.mxu0 0
    %238 = vmatpush1.bf16.msra.mxu0 0
    %239 = vmatprep.subr.bf16.mxu0 0
    %240 = vmatpush1.bf16.msra.mxu0 0
    %241 = vmatprep.subr.bf16.mxu0 0
    %242 = vmatpush1.bf16.msra.mxu0 0
    %243 = vmatprep.subr.bf16.mxu0 0
    %244 = vmatpush1.bf16.msra.mxu0 0
    %245 = vmatprep.subr.bf16.mxu0 0
    %246 = vmatpush1.bf16.msra.mxu0 %v226
    %247 = vmatprep.subr.bf16.mxu0 0
    %248 = vmatpush1.bf16.msra.mxu0 %v225
    %249 = vmatprep.subr.bf16.mxu0 0
    %250 = vmatpush2.bf16.msra.mxu0 0
    %251 = vmatprep.subr.bf16.mxu0 0
    %252 = vmatpush2.bf16.msra.mxu0 0
    %253 = vmatprep.subr.bf16.mxu0 0
    %254 = vmatpush2.bf16.msra.mxu0 0
    %255 = vmatprep.subr.bf16.mxu0 0
    %256 = vmatpush2.bf16.msra.mxu0 0
    %257 = vmatprep.subr.bf16.mxu0 0
    %258 = vmatpush2.bf16.msra.mxu0 0
    %259 = vmatprep.subr.bf16.mxu0 0
    %260 = vmatpush2.bf16.msra.mxu0 0
    %261 = vmatprep.subr.bf16.mxu0 0
    %262 = vmatpush2.bf16.msra.mxu0 0
    %263 = vmatprep.subr.bf16.mxu0 0
    %264 = vmatpush2.bf16.msra.mxu0 0
    %265 = vmatprep.mubr.bf16.mxu0 0
    %266 = vmatmul.mubr.bf16.gmra.mxu0 %v231
    %v267 = vpop.f32.mrf.mxu0
    %v268 = vadd.f32 %v210, %v267
    %v269 = vpop.f32.mrf.mxu0
    %v270 = vpop.f32.mrf.mxu0
    %v271 = vadd.f32 %v210, %v270
    %v272 = vpop.f32.mrf.mxu0
    %273 = vdwg.mxu0
    %v274 = vpack.c.bf16 %v271, %v268
    %v275 = vld [vmem:[#allocation11] sm:$0xf]
    %v276 = vld [vmem:[#allocation11 + $0x4] sm:$0xf]
    %v277 = vld [vmem:[#allocation11 + $0x8] sm:$0xf]
    %v278 = vld [vmem:[#allocation11 + $0xc] sm:$0xf]
    %v279 = vld [vmem:[#allocation12] sm:$0x1]
    %v281 = vlaneseq
    %v282 = vshrl.u32 %v281, 7
    %v283 = vsub.s32 0, %v282
    %v284 = vrot.slane %v279, %v283
    %v290 = vunpack.c.l.b16 %v275
    %v291 = vunpack.c.l.b16 %v276
    %v292 = vunpack.c.l.b16 %v277
    %v293 = vunpack.c.l.b16 %v278
    %v294 = vpack.c.b16 %v291, %v290
    %v295 = vpack.c.b16 %v293, %v292
    %v299 = vsel %vm229, %v274, 0
    %301 = vmatprep.subr.bf16.mxu0 0
    %302 = vmatpush1.bf16.msra.mxu0 0
    %303 = vmatprep.subr.bf16.mxu0 0
    %304 = vmatpush1.bf16.msra.mxu0 0
    %305 = vmatprep.subr.bf16.mxu0 0
    %306 = vmatpush1.bf16.msra.mxu0 0
    %307 = vmatprep.subr.bf16.mxu0 0
    %308 = vmatpush1.bf16.msra.mxu0 0
    %309 = vmatprep.subr.bf16.mxu0 0
    %310 = vmatpush1.bf16.msra.mxu0 0
    %311 = vmatprep.subr.bf16.mxu0 0
    %312 = vmatpush1.bf16.msra.mxu0 0
    %313 = vmatprep.subr.bf16.mxu0 0
    %314 = vmatpush1.bf16.msra.mxu0 %v295
    %315 = vmatprep.subr.bf16.mxu0 0
    %316 = vmatpush1.bf16.msra.mxu0 %v294
    %317 = vmatprep.subr.bf16.mxu0 0
    %318 = vmatpush2.bf16.msra.mxu0 0
    %319 = vmatprep.subr.bf16.mxu0 0
    %320 = vmatpush2.bf16.msra.mxu0 0
    %321 = vmatprep.subr.bf16.mxu0 0
    %322 = vmatpush2.bf16.msra.mxu0 0
    %323 = vmatprep.subr.bf16.mxu0 0
    %324 = vmatpush2.bf16.msra.mxu0 0
    %325 = vmatprep.subr.bf16.mxu0 0
    %326 = vmatpush2.bf16.msra.mxu0 0
    %327 = vmatprep.subr.bf16.mxu0 0
    %328 = vmatpush2.bf16.msra.mxu0 0
    %329 = vmatprep.subr.bf16.mxu0 0
    %330 = vmatpush2.bf16.msra.mxu0 0
    %331 = vmatprep.subr.bf16.mxu0 0
    %332 = vmatpush2.bf16.msra.mxu0 0
    %333 = vmatprep.mubr.bf16.mxu0 0
    %334 = vmatmul.mubr.bf16.gmra.mxu0 %v299
    %v335 = vpop.f32.mrf.mxu0
    %v336 = vadd.f32 %v284, %v335
    %v337 = vpop.f32.mrf.mxu0
    %v338 = vpop.f32.mrf.mxu0
    %v339 = vadd.f32 %v284, %v338
    %v340 = vpop.f32.mrf.mxu0
    %341 = vdwg.mxu0
    %v342 = vpack.c.bf16 %v339, %v336
    %v343 = vld [vmem:[#allocation14] sm:$0xf]
    %v344 = vld [vmem:[#allocation14 + $0x4] sm:$0xf]
    %v345 = vld [vmem:[#allocation14 + $0x8] sm:$0xf]
    %v346 = vld [vmem:[#allocation14 + $0xc] sm:$0xf]
    %v347 = vld [vmem:[#allocation15] sm:$0x1]
    %v349 = vlaneseq
    %v350 = vshrl.u32 %v349, 7
    %v351 = vsub.s32 0, %v350
    %v352 = vrot.slane %v347, %v351
    %v356 = vunpack.c.l.b16 %v197
    %v357 = vunpack.c.l.b16 %v199
    %v358 = vpack.c.b16 %v357, %v356
    %v363 = vunpack.c.l.b16 %v343
    %v364 = vunpack.c.l.b16 %v344
    %v365 = vunpack.c.l.b16 %v345
    %v366 = vunpack.c.l.b16 %v346
    %v367 = vpack.c.b16 %v364, %v363
    %v368 = vpack.c.b16 %v366, %v365
    %v372 = vsel %vm229, %v358, 0
    %374 = vmatprep.subr.bf16.mxu0 0
    %375 = vmatpush1.bf16.msra.mxu0 0
    %376 = vmatprep.subr.bf16.mxu0 0
    %377 = vmatpush1.bf16.msra.mxu0 0
    %378 = vmatprep.subr.bf16.mxu0 0
    %379 = vmatpush1.bf16.msra.mxu0 0
    %380 = vmatprep.subr.bf16.mxu0 0
    %381 = vmatpush1.bf16.msra.mxu0 0
    %382 = vmatprep.subr.bf16.mxu0 0
    %383 = vmatpush1.bf16.msra.mxu0 0
    %384 = vmatprep.subr.bf16.mxu0 0
    %385 = vmatpush1.bf16.msra.mxu0 0
    %386 = vmatprep.subr.bf16.mxu0 0
    %387 = vmatpush1.bf16.msra.mxu0 %v368
    %388 = vmatprep.subr.bf16.mxu0 0
    %389 = vmatpush1.bf16.msra.mxu0 %v367
    %390 = vmatprep.subr.bf16.mxu0 0
    %391 = vmatpush2.bf16.msra.mxu0 0
    %392 = vmatprep.subr.bf16.mxu0 0
    %393 = vmatpush2.bf16.msra.mxu0 0
    %394 = vmatprep.subr.bf16.mxu0 0
    %395 = vmatpush2.bf16.msra.mxu0 0
    %396 = vmatprep.subr.bf16.mxu0 0
    %397 = vmatpush2.bf16.msra.mxu0 0
    %398 = vmatprep.subr.bf16.mxu0 0
    %399 = vmatpush2.bf16.msra.mxu0 0
    %400 = vmatprep.subr.bf16.mxu0 0
    %401 = vmatpush2.bf16.msra.mxu0 0
    %402 = vmatprep.subr.bf16.mxu0 0
    %403 = vmatpush2.bf16.msra.mxu0 0
    %404 = vmatprep.subr.bf16.mxu0 0
    %405 = vmatpush2.bf16.msra.mxu0 0
    %406 = vmatprep.mubr.bf16.mxu0 0
    %407 = vmatmul.mubr.bf16.gmra.mxu0 %v372
    %v408 = vpop.f32.mrf.mxu0
    %v409 = vadd.f32 %v352, %v408
    %v410 = vpop.f32.mrf.mxu0
    %v411 = vpop.f32.mrf.mxu0
    %v412 = vadd.f32 %v352, %v411
    %v413 = vpop.f32.mrf.mxu0
    %414 = vdwg.mxu0
    %v415 = vpack.c.bf16 %v412, %v409
    %v417 = vunpack.c.l.b16 %v342
    %v418 = vunpack.c.h.b16 %v342
    %v419 = vpack.c.b16 %v417, %v417
    %v420 = vpack.c.b16 %v418, %v418
    %v422 = vunpack.c.l.b16 %v415
    %v423 = vunpack.c.h.b16 %v415
    %v424 = vpack.c.b16 %v422, %v422
    %v425 = vpack.c.b16 %v423, %v423
    %v426 = vld [vmem:[#allocation6] sm:$0xf]
    %v427 = vunpack.c.l.bf16 %v426
    %vm428 = vcmask 64512
    %v430 = vsel %vm428, %v419, 0
    %v433 = vsel %vm428, %v424, 0
    %435 = vmatprep.subr.bf16.mxu0 0
    %436 = vmatpush1.bf16.xpose.msra.mxu0 0
    %437 = vmatprep.subr.bf16.mxu0 0
    %438 = vmatpush1.bf16.xpose.msra.mxu0 0
    %439 = vmatprep.subr.bf16.mxu0 0
    %440 = vmatpush1.bf16.xpose.msra.mxu0 0
    %441 = vmatprep.subr.bf16.mxu0 0
    %442 = vmatpush1.bf16.xpose.msra.mxu0 0
    %443 = vmatprep.subr.bf16.mxu0 0
    %444 = vmatpush1.bf16.xpose.msra.mxu0 0
    %445 = vmatprep.subr.bf16.mxu0 0
    %446 = vmatpush1.bf16.xpose.msra.mxu0 0
    %447 = vmatprep.subr.bf16.mxu0 0
    %448 = vmatpush1.bf16.xpose.msra.mxu0 0
    %449 = vmatprep.subr.bf16.mxu0 0
    %450 = vmatpush1.bf16.xpose.msra.mxu0 %v433
    %451 = vmatprep.subr.bf16.mxu0 0
    %452 = vmatpush2.bf16.xpose.msra.mxu0 0
    %453 = vmatprep.subr.bf16.mxu0 0
    %454 = vmatpush2.bf16.xpose.msra.mxu0 0
    %455 = vmatprep.subr.bf16.mxu0 0
    %456 = vmatpush2.bf16.xpose.msra.mxu0 0
    %457 = vmatprep.subr.bf16.mxu0 0
    %458 = vmatpush2.bf16.xpose.msra.mxu0 0
    %459 = vmatprep.subr.bf16.mxu0 0
    %460 = vmatpush2.bf16.xpose.msra.mxu0 0
    %461 = vmatprep.subr.bf16.mxu0 0
    %462 = vmatpush2.bf16.xpose.msra.mxu0 0
    %463 = vmatprep.subr.bf16.mxu0 0
    %464 = vmatpush2.bf16.xpose.msra.mxu0 0
    %465 = vmatprep.subr.bf16.mxu0 0
    %466 = vmatpush2.bf16.xpose.msra.mxu0 0
    %467 = vmatprep.mubr.bf16.mxu0 0
    %468 = vmatmul.mubr.bf16.gmra.mxu0 %v430
    %v469 = vpop.f32.mrf.mxu0
    %v470 = vadd.f32 %v427, %v469
    %v471 = vpop.f32.mrf.mxu0
    %v472 = vpop.f32.mrf.mxu0
    %v473 = vpop.f32.mrf.mxu0
    %474 = vdwg.mxu0
    %v476 = vsel %vm428, %v420, 0
    %v479 = vsel %vm428, %v425, 0
    %481 = vmatprep.subr.bf16.mxu0 0
    %482 = vmatpush1.bf16.xpose.msra.mxu0 0
    %483 = vmatprep.subr.bf16.mxu0 0
    %484 = vmatpush1.bf16.xpose.msra.mxu0 0
    %485 = vmatprep.subr.bf16.mxu0 0
    %486 = vmatpush1.bf16.xpose.msra.mxu0 0
    %487 = vmatprep.subr.bf16.mxu0 0
    %488 = vmatpush1.bf16.xpose.msra.mxu0 0
    %489 = vmatprep.subr.bf16.mxu0 0
    %490 = vmatpush1.bf16.xpose.msra.mxu0 0
    %491 = vmatprep.subr.bf16.mxu0 0
    %492 = vmatpush1.bf16.xpose.msra.mxu0 0
    %493 = vmatprep.subr.bf16.mxu0 0
    %494 = vmatpush1.bf16.xpose.msra.mxu0 0
    %495 = vmatprep.subr.bf16.mxu0 0
    %496 = vmatpush1.bf16.xpose.msra.mxu0 %v479
    %497 = vmatprep.subr.bf16.mxu0 0
    %498 = vmatpush2.bf16.xpose.msra.mxu0 0
    %499 = vmatprep.subr.bf16.mxu0 0
    %500 = vmatpush2.bf16.xpose.msra.mxu0 0
    %501 = vmatprep.subr.bf16.mxu0 0
    %502 = vmatpush2.bf16.xpose.msra.mxu0 0
    %503 = vmatprep.subr.bf16.mxu0 0
    %504 = vmatpush2.bf16.xpose.msra.mxu0 0
    %505 = vmatprep.subr.bf16.mxu0 0
    %506 = vmatpush2.bf16.xpose.msra.mxu0 0
    %507 = vmatprep.subr.bf16.mxu0 0
    %508 = vmatpush2.bf16.xpose.msra.mxu0 0
    %509 = vmatprep.subr.bf16.mxu0 0
    %510 = vmatpush2.bf16.xpose.msra.mxu0 0
    %511 = vmatprep.subr.bf16.mxu0 0
    %512 = vmatpush2.bf16.xpose.msra.mxu0 0
    %513 = vmatprep.mubr.bf16.mxu0 0
    %514 = vmatmul.mubr.bf16.gmra.mxu0 %v476
    %v515 = vpop.f32.mrf.mxu0
    %v516 = vadd.f32 %v427, %v515
    %v517 = vpop.f32.mrf.mxu0
    %v518 = vpop.f32.mrf.mxu0
    %v519 = vpop.f32.mrf.mxu0
    %520 = vdwg.mxu0
    %v521 = vsel %vm428, %v470, -inf
    %522 = vmax.xlane.f32.xlu0 %v521
    %v523 = vpop.xlane.xlu0 %522
    %v524 = vsel %vm428, %v516, -inf
    %525 = vmax.xlane.f32.xlu0 %v524
    %v526 = vpop.xlane.xlu0 %525
    %v527 = vsub.f32 %v470, %v523
    %v528 = vsub.f32 %v516, %v526
    %v529 = vmul.f32 %v527, 1.442695
    %v530 = vpow.pop %v529
    %v531 = vmul.f32 %v528, 1.442695
    %v532 = vpow.pop %v531
    %v533 = vsel %vm428, %v530, 0.0
    %534 = vadd.xlane.f32.xlu0 %v533
    %v535 = vpop.xlane.xlu0 %534
    %v536 = vsel %vm428, %v532, 0.0
    %537 = vadd.xlane.f32.xlu0 %v536
    %v538 = vpop.xlane.xlu0 %537
    %v539 = vrcp.pop %v535
    %v540 = vrcp.pop %v538
    %v541 = vmul.f32 %v530, %v539
    %v542 = vmul.f32 %v532, %v540
    %v543 = vpack.c.bf16 %v541, %v541
    %v544 = vpack.c.bf16 %v542, %v542
    %545 = vrot.lane.b32.xlu0 %v424, 96
    %v546 = vpop.permute.xlu0 %545
    %v548 = vsel %vm428, %v543, 0
    %vm550 = vcmask 1043456
    %v552 = vsel %vm550, %v546, 0
    %554 = vmatprep.subr.bf16.mxu0 0
    %555 = vmatpush1.bf16.msra.mxu0 0
    %556 = vmatprep.subr.bf16.mxu0 0
    %557 = vmatpush1.bf16.msra.mxu0 0
    %558 = vmatprep.subr.bf16.mxu0 0
    %559 = vmatpush1.bf16.msra.mxu0 0
    %560 = vmatprep.subr.bf16.mxu0 0
    %561 = vmatpush1.bf16.msra.mxu0 0
    %562 = vmatprep.subr.bf16.mxu0 0
    %563 = vmatpush1.bf16.msra.mxu0 0
    %564 = vmatprep.subr.bf16.mxu0 0
    %565 = vmatpush1.bf16.msra.mxu0 0
    %566 = vmatprep.subr.bf16.mxu0 0
    %567 = vmatpush1.bf16.msra.mxu0 0
    %568 = vmatprep.subr.bf16.mxu0 0
    %569 = vmatpush1.bf16.msra.mxu0 %v552
    %570 = vmatprep.subr.bf16.mxu0 0
    %571 = vmatpush2.bf16.msra.mxu0 0
    %572 = vmatprep.subr.bf16.mxu0 0
    %573 = vmatpush2.bf16.msra.mxu0 0
    %574 = vmatprep.subr.bf16.mxu0 0
    %575 = vmatpush2.bf16.msra.mxu0 0
    %576 = vmatprep.subr.bf16.mxu0 0
    %577 = vmatpush2.bf16.msra.mxu0 0
    %578 = vmatprep.subr.bf16.mxu0 0
    %579 = vmatpush2.bf16.msra.mxu0 0
    %580 = vmatprep.subr.bf16.mxu0 0
    %581 = vmatpush2.bf16.msra.mxu0 0
    %582 = vmatprep.subr.bf16.mxu0 0
    %583 = vmatpush2.bf16.msra.mxu0 0
    %584 = vmatprep.subr.bf16.mxu0 0
    %585 = vmatpush2.bf16.msra.mxu0 0
    %586 = vmatprep.mubr.bf16.mxu0 0
    %587 = vmatmul.mubr.bf16.gmra.mxu0 %v548
    %v588 = vpop.f32.mrf.mxu0
    %v589 = vadd.f32 0.0, %v588
    %v590 = vpop.f32.mrf.mxu0
    %v591 = vpop.f32.mrf.mxu0
    %v592 = vpop.f32.mrf.mxu0
    %593 = vdwg.mxu0
    %594 = vrot.lane.b32.xlu0 %v425, 96
    %v595 = vpop.permute.xlu0 %594
    %v597 = vsel %vm428, %v544, 0
    %v600 = vsel %vm550, %v595, 0
    %602 = vmatprep.subr.bf16.mxu0 0
    %603 = vmatpush1.bf16.msra.mxu0 0
    %604 = vmatprep.subr.bf16.mxu0 0
    %605 = vmatpush1.bf16.msra.mxu0 0
    %606 = vmatprep.subr.bf16.mxu0 0
    %607 = vmatpush1.bf16.msra.mxu0 0
    %608 = vmatprep.subr.bf16.mxu0 0
    %609 = vmatpush1.bf16.msra.mxu0 0
    %610 = vmatprep.subr.bf16.mxu0 0
    %611 = vmatpush1.bf16.msra.mxu0 0
    %612 = vmatprep.subr.bf16.mxu0 0
    %613 = vmatpush1.bf16.msra.mxu0 0
    %614 = vmatprep.subr.bf16.mxu0 0
    %615 = vmatpush1.bf16.msra.mxu0 0
    %616 = vmatprep.subr.bf16.mxu0 0
    %617 = vmatpush1.bf16.msra.mxu0 %v600
    %618 = vmatprep.subr.bf16.mxu0 0
    %619 = vmatpush2.bf16.msra.mxu0 0
    %620 = vmatprep.subr.bf16.mxu0 0
    %621 = vmatpush2.bf16.msra.mxu0 0
    %622 = vmatprep.subr.bf16.mxu0 0
    %623 = vmatpush2.bf16.msra.mxu0 0
    %624 = vmatprep.subr.bf16.mxu0 0
    %625 = vmatpush2.bf16.msra.mxu0 0
    %626 = vmatprep.subr.bf16.mxu0 0
    %627 = vmatpush2.bf16.msra.mxu0 0
    %628 = vmatprep.subr.bf16.mxu0 0
    %629 = vmatpush2.bf16.msra.mxu0 0
    %630 = vmatprep.subr.bf16.mxu0 0
    %631 = vmatpush2.bf16.msra.mxu0 0
    %632 = vmatprep.subr.bf16.mxu0 0
    %633 = vmatpush2.bf16.msra.mxu0 0
    %634 = vmatprep.mubr.bf16.mxu0 0
    %635 = vmatmul.mubr.bf16.gmra.mxu0 %v597
    %v636 = vpop.f32.mrf.mxu0
    %v637 = vadd.f32 0.0, %v636
    %v638 = vpop.f32.mrf.mxu0
    %v639 = vpop.f32.mrf.mxu0
    %v640 = vpop.f32.mrf.mxu0
    %641 = vdwg.mxu0
    %v642 = vpack.c.bf16 %v589, %v589
    %v643 = vpack.c.bf16 %v637, %v637
    %644 = vrot.lane.b32.xlu0 %v419, 120
    %v645 = vpop.permute.xlu0 %644
    %646 = vrot.lane.b32.xlu0 %v424, 120
    %v647 = vpop.permute.xlu0 %646
    %v649 = vsel %vm428, %v645, 0
    %v652 = vsel %vm428, %v647, 0
    %654 = vmatprep.subr.bf16.mxu0 0
    %655 = vmatpush1.bf16.xpose.msra.mxu0 0
    %656 = vmatprep.subr.bf16.mxu0 0
    %657 = vmatpush1.bf16.xpose.msra.mxu0 0
    %658 = vmatprep.subr.bf16.mxu0 0
    %659 = vmatpush1.bf16.xpose.msra.mxu0 0
    %660 = vmatprep.subr.bf16.mxu0 0
    %661 = vmatpush1.bf16.xpose.msra.mxu0 0
    %662 = vmatprep.subr.bf16.mxu0 0
    %663 = vmatpush1.bf16.xpose.msra.mxu0 0
    %664 = vmatprep.subr.bf16.mxu0 0
    %665 = vmatpush1.bf16.xpose.msra.mxu0 0
    %666 = vmatprep.subr.bf16.mxu0 0
    %667 = vmatpush1.bf16.xpose.msra.mxu0 0
    %668 = vmatprep.subr.bf16.mxu0 0
    %669 = vmatpush1.bf16.xpose.msra.mxu0 %v652
    %670 = vmatprep.subr.bf16.mxu0 0
    %671 = vmatpush2.bf16.xpose.msra.mxu0 0
    %672 = vmatprep.subr.bf16.mxu0 0
    %673 = vmatpush2.bf16.xpose.msra.mxu0 0
    %674 = vmatprep.subr.bf16.mxu0 0
    %675 = vmatpush2.bf16.xpose.msra.mxu0 0
    %676 = vmatprep.subr.bf16.mxu0 0
    %677 = vmatpush2.bf16.xpose.msra.mxu0 0
    %678 = vmatprep.subr.bf16.mxu0 0
    %679 = vmatpush2.bf16.xpose.msra.mxu0 0
    %680 = vmatprep.subr.bf16.mxu0 0
    %681 = vmatpush2.bf16.xpose.msra.mxu0 0
    %682 = vmatprep.subr.bf16.mxu0 0
    %683 = vmatpush2.bf16.xpose.msra.mxu0 0
    %684 = vmatprep.subr.bf16.mxu0 0
    %685 = vmatpush2.bf16.xpose.msra.mxu0 0
    %686 = vmatprep.mubr.bf16.mxu0 0
    %687 = vmatmul.mubr.bf16.gmra.mxu0 %v649
    %v688 = vpop.f32.mrf.mxu0
    %v689 = vadd.f32 %v427, %v688
    %v690 = vpop.f32.mrf.mxu0
    %v691 = vpop.f32.mrf.mxu0
    %v692 = vpop.f32.mrf.mxu0
    %693 = vdwg.mxu0
    %694 = vrot.lane.b32.xlu0 %v420, 120
    %v695 = vpop.permute.xlu0 %694
    %696 = vrot.lane.b32.xlu0 %v425, 120
    %v697 = vpop.permute.xlu0 %696
    %v699 = vsel %vm428, %v695, 0
    %v702 = vsel %vm428, %v697, 0
    %704 = vmatprep.subr.bf16.mxu0 0
    %705 = vmatpush1.bf16.xpose.msra.mxu0 0
    %706 = vmatprep.subr.bf16.mxu0 0
    %707 = vmatpush1.bf16.xpose.msra.mxu0 0
    %708 = vmatprep.subr.bf16.mxu0 0
    %709 = vmatpush1.bf16.xpose.msra.mxu0 0
    %710 = vmatprep.subr.bf16.mxu0 0
    %711 = vmatpush1.bf16.xpose.msra.mxu0 0
    %712 = vmatprep.subr.bf16.mxu0 0
    %713 = vmatpush1.bf16.xpose.msra.mxu0 0
    %714 = vmatprep.subr.bf16.mxu0 0
    %715 = vmatpush1.bf16.xpose.msra.mxu0 0
    %716 = vmatprep.subr.bf16.mxu0 0
    %717 = vmatpush1.bf16.xpose.msra.mxu0 0
    %718 = vmatprep.subr.bf16.mxu0 0
    %719 = vmatpush1.bf16.xpose.msra.mxu0 %v702
    %720 = vmatprep.subr.bf16.mxu0 0
    %721 = vmatpush2.bf16.xpose.msra.mxu0 0
    %722 = vmatprep.subr.bf16.mxu0 0
    %723 = vmatpush2.bf16.xpose.msra.mxu0 0
    %724 = vmatprep.subr.bf16.mxu0 0
    %725 = vmatpush2.bf16.xpose.msra.mxu0 0
    %726 = vmatprep.subr.bf16.mxu0 0
    %727 = vmatpush2.bf16.xpose.msra.mxu0 0
    %728 = vmatprep.subr.bf16.mxu0 0
    %729 = vmatpush2.bf16.xpose.msra.mxu0 0
    %730 = vmatprep.subr.bf16.mxu0 0
    %731 = vmatpush2.bf16.xpose.msra.mxu0 0
    %732 = vmatprep.subr.bf16.mxu0 0
    %733 = vmatpush2.bf16.xpose.msra.mxu0 0
    %734 = vmatprep.subr.bf16.mxu0 0
    %735 = vmatpush2.bf16.xpose.msra.mxu0 0
    %736 = vmatprep.mubr.bf16.mxu0 0
    %737 = vmatmul.mubr.bf16.gmra.mxu0 %v699
    %v738 = vpop.f32.mrf.mxu0
    %v739 = vadd.f32 %v427, %v738
    %v740 = vpop.f32.mrf.mxu0
    %v741 = vpop.f32.mrf.mxu0
    %v742 = vpop.f32.mrf.mxu0
    %743 = vdwg.mxu0
    %v744 = vsel %vm428, %v689, -inf
    %745 = vmax.xlane.f32.xlu0 %v744
    %v746 = vpop.xlane.xlu0 %745
    %v747 = vsel %vm428, %v739, -inf
    %748 = vmax.xlane.f32.xlu0 %v747
    %v749 = vpop.xlane.xlu0 %748
    %v750 = vsub.f32 %v689, %v746
    %v751 = vsub.f32 %v739, %v749
    %v752 = vmul.f32 %v750, 1.442695
    %v753 = vpow.pop %v752
    %v754 = vmul.f32 %v751, 1.442695
    %v755 = vpow.pop %v754
    %v756 = vsel %vm428, %v753, 0.0
    %757 = vadd.xlane.f32.xlu0 %v756
    %v758 = vpop.xlane.xlu0 %757
    %v759 = vsel %vm428, %v755, 0.0
    %760 = vadd.xlane.f32.xlu0 %v759
    %v761 = vpop.xlane.xlu0 %760
    %v762 = vrcp.pop %v758
    %v763 = vrcp.pop %v761
    %v764 = vmul.f32 %v753, %v762
    %v765 = vmul.f32 %v755, %v763
    %v766 = vpack.c.bf16 %v764, %v764
    %v767 = vpack.c.bf16 %v765, %v765
    %768 = vrot.lane.b32.xlu0 %v424, 88
    %v769 = vpop.permute.xlu0 %768
    %v771 = vsel %vm428, %v766, 0
    %v774 = vsel %vm550, %v769, 0
    %776 = vmatprep.subr.bf16.mxu0 0
    %777 = vmatpush1.bf16.msra.mxu0 0
    %778 = vmatprep.subr.bf16.mxu0 0
    %779 = vmatpush1.bf16.msra.mxu0 0
    %780 = vmatprep.subr.bf16.mxu0 0
    %781 = vmatpush1.bf16.msra.mxu0 0
    %782 = vmatprep.subr.bf16.mxu0 0
    %783 = vmatpush1.bf16.msra.mxu0 0
    %784 = vmatprep.subr.bf16.mxu0 0
    %785 = vmatpush1.bf16.msra.mxu0 0
    %786 = vmatprep.subr.bf16.mxu0 0
    %787 = vmatpush1.bf16.msra.mxu0 0
    %788 = vmatprep.subr.bf16.mxu0 0
    %789 = vmatpush1.bf16.msra.mxu0 0
    %790 = vmatprep.subr.bf16.mxu0 0
    %791 = vmatpush1.bf16.msra.mxu0 %v774
    %792 = vmatprep.subr.bf16.mxu0 0
    %793 = vmatpush2.bf16.msra.mxu0 0
    %794 = vmatprep.subr.bf16.mxu0 0
    %795 = vmatpush2.bf16.msra.mxu0 0
    %796 = vmatprep.subr.bf16.mxu0 0
    %797 = vmatpush2.bf16.msra.mxu0 0
    %798 = vmatprep.subr.bf16.mxu0 0
    %799 = vmatpush2.bf16.msra.mxu0 0
    %800 = vmatprep.subr.bf16.mxu0 0
    %801 = vmatpush2.bf16.msra.mxu0 0
    %802 = vmatprep.subr.bf16.mxu0 0
    %803 = vmatpush2.bf16.msra.mxu0 0
    %804 = vmatprep.subr.bf16.mxu0 0
    %805 = vmatpush2.bf16.msra.mxu0 0
    %806 = vmatprep.subr.bf16.mxu0 0
    %807 = vmatpush2.bf16.msra.mxu0 0
    %808 = vmatprep.mubr.bf16.mxu0 0
    %809 = vmatmul.mubr.bf16.gmra.mxu0 %v771
    %v810 = vpop.f32.mrf.mxu0
    %v811 = vadd.f32 0.0, %v810
    %v812 = vpop.f32.mrf.mxu0
    %v813 = vpop.f32.mrf.mxu0
    %v814 = vpop.f32.mrf.mxu0
    %815 = vdwg.mxu0
    %816 = vrot.lane.b32.xlu0 %v425, 88
    %v817 = vpop.permute.xlu0 %816
    %v819 = vsel %vm428, %v767, 0
    %v822 = vsel %vm550, %v817, 0
    %824 = vmatprep.subr.bf16.mxu0 0
    %825 = vmatpush1.bf16.msra.mxu0 0
    %826 = vmatprep.subr.bf16.mxu0 0
    %827 = vmatpush1.bf16.msra.mxu0 0
    %828 = vmatprep.subr.bf16.mxu0 0
    %829 = vmatpush1.bf16.msra.mxu0 0
    %830 = vmatprep.subr.bf16.mxu0 0
    %831 = vmatpush1.bf16.msra.mxu0 0
    %832 = vmatprep.subr.bf16.mxu0 0
    %833 = vmatpush1.bf16.msra.mxu0 0
    %834 = vmatprep.subr.bf16.mxu0 0
    %835 = vmatpush1.bf16.msra.mxu0 0
    %836 = vmatprep.subr.bf16.mxu0 0
    %837 = vmatpush1.bf16.msra.mxu0 0
    %838 = vmatprep.subr.bf16.mxu0 0
    %839 = vmatpush1.bf16.msra.mxu0 %v822
    %840 = vmatprep.subr.bf16.mxu0 0
    %841 = vmatpush2.bf16.msra.mxu0 0
    %842 = vmatprep.subr.bf16.mxu0 0
    %843 = vmatpush2.bf16.msra.mxu0 0
    %844 = vmatprep.subr.bf16.mxu0 0
    %845 = vmatpush2.bf16.msra.mxu0 0
    %846 = vmatprep.subr.bf16.mxu0 0
    %847 = vmatpush2.bf16.msra.mxu0 0
    %848 = vmatprep.subr.bf16.mxu0 0
    %849 = vmatpush2.bf16.msra.mxu0 0
    %850 = vmatprep.subr.bf16.mxu0 0
    %851 = vmatpush2.bf16.msra.mxu0 0
    %852 = vmatprep.subr.bf16.mxu0 0
    %853 = vmatpush2.bf16.msra.mxu0 0
    %854 = vmatprep.subr.bf16.mxu0 0
    %855 = vmatpush2.bf16.msra.mxu0 0
    %856 = vmatprep.mubr.bf16.mxu0 0
    %857 = vmatmul.mubr.bf16.gmra.mxu0 %v819
    %v858 = vpop.f32.mrf.mxu0
    %v859 = vadd.f32 0.0, %v858
    %v860 = vpop.f32.mrf.mxu0
    %v861 = vpop.f32.mrf.mxu0
    %v862 = vpop.f32.mrf.mxu0
    %863 = vdwg.mxu0
    %v864 = vpack.c.bf16 %v811, %v811
    %v865 = vpack.c.bf16 %v859, %v859
    %866 = vrot.lane.b32.xlu0 %v419, 112
    %v867 = vpop.permute.xlu0 %866
    %868 = vrot.lane.b32.xlu0 %v424, 112
    %v869 = vpop.permute.xlu0 %868
    %v871 = vsel %vm428, %v867, 0
    %v874 = vsel %vm428, %v869, 0
    %876 = vmatprep.subr.bf16.mxu0 0
    %877 = vmatpush1.bf16.xpose.msra.mxu0 0
    %878 = vmatprep.subr.bf16.mxu0 0
    %879 = vmatpush1.bf16.xpose.msra.mxu0 0
    %880 = vmatprep.subr.bf16.mxu0 0
    %881 = vmatpush1.bf16.xpose.msra.mxu0 0
    %882 = vmatprep.subr.bf16.mxu0 0
    %883 = vmatpush1.bf16.xpose.msra.mxu0 0
    %884 = vmatprep.subr.bf16.mxu0 0
    %885 = vmatpush1.bf16.xpose.msra.mxu0 0
    %886 = vmatprep.subr.bf16.mxu0 0
    %887 = vmatpush1.bf16.xpose.msra.mxu0 0
    %888 = vmatprep.subr.bf16.mxu0 0
    %889 = vmatpush1.bf16.xpose.msra.mxu0 0
    %890 = vmatprep.subr.bf16.mxu0 0
    %891 = vmatpush1.bf16.xpose.msra.mxu0 %v874
    %892 = vmatprep.subr.bf16.mxu0 0
    %893 = vmatpush2.bf16.xpose.msra.mxu0 0
    %894 = vmatprep.subr.bf16.mxu0 0
    %895 = vmatpush2.bf16.xpose.msra.mxu0 0
    %896 = vmatprep.subr.bf16.mxu0 0
    %897 = vmatpush2.bf16.xpose.msra.mxu0 0
    %898 = vmatprep.subr.bf16.mxu0 0
    %899 = vmatpush2.bf16.xpose.msra.mxu0 0
    %900 = vmatprep.subr.bf16.mxu0 0
    %901 = vmatpush2.bf16.xpose.msra.mxu0 0
    %902 = vmatprep.subr.bf16.mxu0 0
    %903 = vmatpush2.bf16.xpose.msra.mxu0 0
    %904 = vmatprep.subr.bf16.mxu0 0
    %905 = vmatpush2.bf16.xpose.msra.mxu0 0
    %906 = vmatprep.subr.bf16.mxu0 0
    %907 = vmatpush2.bf16.xpose.msra.mxu0 0
    %908 = vmatprep.mubr.bf16.mxu0 0
    %909 = vmatmul.mubr.bf16.gmra.mxu0 %v871
    %v910 = vpop.f32.mrf.mxu0
    %v911 = vadd.f32 %v427, %v910
    %v912 = vpop.f32.mrf.mxu0
    %v913 = vpop.f32.mrf.mxu0
    %v914 = vpop.f32.mrf.mxu0
    %915 = vdwg.mxu0
    %916 = vrot.lane.b32.xlu0 %v420, 112
    %v917 = vpop.permute.xlu0 %916
    %918 = vrot.lane.b32.xlu0 %v425, 112
    %v919 = vpop.permute.xlu0 %918
    %v921 = vsel %vm428, %v917, 0
    %v924 = vsel %vm428, %v919, 0
    %926 = vmatprep.subr.bf16.mxu0 0
    %927 = vmatpush1.bf16.xpose.msra.mxu0 0
    %928 = vmatprep.subr.bf16.mxu0 0
    %929 = vmatpush1.bf16.xpose.msra.mxu0 0
    %930 = vmatprep.subr.bf16.mxu0 0
    %931 = vmatpush1.bf16.xpose.msra.mxu0 0
    %932 = vmatprep.subr.bf16.mxu0 0
    %933 = vmatpush1.bf16.xpose.msra.mxu0 0
    %934 = vmatprep.subr.bf16.mxu0 0
    %935 = vmatpush1.bf16.xpose.msra.mxu0 0
    %936 = vmatprep.subr.bf16.mxu0 0
    %937 = vmatpush1.bf16.xpose.msra.mxu0 0
    %938 = vmatprep.subr.bf16.mxu0 0
    %939 = vmatpush1.bf16.xpose.msra.mxu0 0
    %940 = vmatprep.subr.bf16.mxu0 0
    %941 = vmatpush1.bf16.xpose.msra.mxu0 %v924
    %942 = vmatprep.subr.bf16.mxu0 0
    %943 = vmatpush2.bf16.xpose.msra.mxu0 0
    %944 = vmatprep.subr.bf16.mxu0 0
    %945 = vmatpush2.bf16.xpose.msra.mxu0 0
    %946 = vmatprep.subr.bf16.mxu0 0
    %947 = vmatpush2.bf16.xpose.msra.mxu0 0
    %948 = vmatprep.subr.bf16.mxu0 0
    %949 = vmatpush2.bf16.xpose.msra.mxu0 0
    %950 = vmatprep.subr.bf16.mxu0 0
    %951 = vmatpush2.bf16.xpose.msra.mxu0 0
    %952 = vmatprep.subr.bf16.mxu0 0
    %953 = vmatpush2.bf16.xpose.msra.mxu0 0
    %954 = vmatprep.subr.bf16.mxu0 0
    %955 = vmatpush2.bf16.xpose.msra.mxu0 0
    %956 = vmatprep.subr.bf16.mxu0 0
    %957 = vmatpush2.bf16.xpose.msra.mxu0 0
    %958 = vmatprep.mubr.bf16.mxu0 0
    %959 = vmatmul.mubr.bf16.gmra.mxu0 %v921
    %v960 = vpop.f32.mrf.mxu0
    %v961 = vadd.f32 %v427, %v960
    %v962 = vpop.f32.mrf.mxu0
    %v963 = vpop.f32.mrf.mxu0
    %v964 = vpop.f32.mrf.mxu0
    %965 = vdwg.mxu0
    %v966 = vsel %vm428, %v911, -inf
    %967 = vmax.xlane.f32.xlu0 %v966
    %v968 = vpop.xlane.xlu0 %967
    %v969 = vsel %vm428, %v961, -inf
    %970 = vmax.xlane.f32.xlu0 %v969
    %v971 = vpop.xlane.xlu0 %970
    %v972 = vsub.f32 %v911, %v968
    %v973 = vsub.f32 %v961, %v971
    %v974 = vmul.f32 %v972, 1.442695
    %v975 = vpow.pop %v974
    %v976 = vmul.f32 %v973, 1.442695
    %v977 = vpow.pop %v976
    %v978 = vsel %vm428, %v975, 0.0
    %979 = vadd.xlane.f32.xlu0 %v978
    %v980 = vpop.xlane.xlu0 %979
    %v981 = vsel %vm428, %v977, 0.0
    %982 = vadd.xlane.f32.xlu0 %v981
    %v983 = vpop.xlane.xlu0 %982
    %v984 = vrcp.pop %v980
    %v985 = vrcp.pop %v983
    %v986 = vmul.f32 %v975, %v984
    %v987 = vmul.f32 %v977, %v985
    %v988 = vpack.c.bf16 %v986, %v986
    %v989 = vpack.c.bf16 %v987, %v987
    %990 = vrot.lane.b32.xlu0 %v424, 80
    %v991 = vpop.permute.xlu0 %990
    %v993 = vsel %vm428, %v988, 0
    %v996 = vsel %vm550, %v991, 0
    %998 = vmatprep.subr.bf16.mxu0 0
    %999 = vmatpush1.bf16.msra.mxu0 0
    %1000 = vmatprep.subr.bf16.mxu0 0
    %1001 = vmatpush1.bf16.msra.mxu0 0
    %1002 = vmatprep.subr.bf16.mxu0 0
    %1003 = vmatpush1.bf16.msra.mxu0 0
    %1004 = vmatprep.subr.bf16.mxu0 0
    %1005 = vmatpush1.bf16.msra.mxu0 0
    %1006 = vmatprep.subr.bf16.mxu0 0
    %1007 = vmatpush1.bf16.msra.mxu0 0
    %1008 = vmatprep.subr.bf16.mxu0 0
    %1009 = vmatpush1.bf16.msra.mxu0 0
    %1010 = vmatprep.subr.bf16.mxu0 0
    %1011 = vmatpush1.bf16.msra.mxu0 0
    %1012 = vmatprep.subr.bf16.mxu0 0
    %1013 = vmatpush1.bf16.msra.mxu0 %v996
    %1014 = vmatprep.subr.bf16.mxu0 0
    %1015 = vmatpush2.bf16.msra.mxu0 0
    %1016 = vmatprep.subr.bf16.mxu0 0
    %1017 = vmatpush2.bf16.msra.mxu0 0
    %1018 = vmatprep.subr.bf16.mxu0 0
    %1019 = vmatpush2.bf16.msra.mxu0 0
    %1020 = vmatprep.subr.bf16.mxu0 0
    %1021 = vmatpush2.bf16.msra.mxu0 0
    %1022 = vmatprep.subr.bf16.mxu0 0
    %1023 = vmatpush2.bf16.msra.mxu0 0
    %1024 = vmatprep.subr.bf16.mxu0 0
    %1025 = vmatpush2.bf16.msra.mxu0 0
    %1026 = vmatprep.subr.bf16.mxu0 0
    %1027 = vmatpush2.bf16.msra.mxu0 0
    %1028 = vmatprep.subr.bf16.mxu0 0
    %1029 = vmatpush2.bf16.msra.mxu0 0
    %1030 = vmatprep.mubr.bf16.mxu0 0
    %1031 = vmatmul.mubr.bf16.gmra.mxu0 %v993
    %v1032 = vpop.f32.mrf.mxu0
    %v1033 = vadd.f32 0.0, %v1032
    %v1034 = vpop.f32.mrf.mxu0
    %v1035 = vpop.f32.mrf.mxu0
    %v1036 = vpop.f32.mrf.mxu0
    %1037 = vdwg.mxu0
    %1038 = vrot.lane.b32.xlu0 %v425, 80
    %v1039 = vpop.permute.xlu0 %1038
    %v1041 = vsel %vm428, %v989, 0
    %v1044 = vsel %vm550, %v1039, 0
    %1046 = vmatprep.subr.bf16.mxu0 0
    %1047 = vmatpush1.bf16.msra.mxu0 0
    %1048 = vmatprep.subr.bf16.mxu0 0
    %1049 = vmatpush1.bf16.msra.mxu0 0
    %1050 = vmatprep.subr.bf16.mxu0 0
    %1051 = vmatpush1.bf16.msra.mxu0 0
    %1052 = vmatprep.subr.bf16.mxu0 0
    %1053 = vmatpush1.bf16.msra.mxu0 0
    %1054 = vmatprep.subr.bf16.mxu0 0
    %1055 = vmatpush1.bf16.msra.mxu0 0
    %1056 = vmatprep.subr.bf16.mxu0 0
    %1057 = vmatpush1.bf16.msra.mxu0 0
    %1058 = vmatprep.subr.bf16.mxu0 0
    %1059 = vmatpush1.bf16.msra.mxu0 0
    %1060 = vmatprep.subr.bf16.mxu0 0
    %1061 = vmatpush1.bf16.msra.mxu0 %v1044
    %1062 = vmatprep.subr.bf16.mxu0 0
    %1063 = vmatpush2.bf16.msra.mxu0 0
    %1064 = vmatprep.subr.bf16.mxu0 0
    %1065 = vmatpush2.bf16.msra.mxu0 0
    %1066 = vmatprep.subr.bf16.mxu0 0
    %1067 = vmatpush2.bf16.msra.mxu0 0
    %1068 = vmatprep.subr.bf16.mxu0 0
    %1069 = vmatpush2.bf16.msra.mxu0 0
    %1070 = vmatprep.subr.bf16.mxu0 0
    %1071 = vmatpush2.bf16.msra.mxu0 0
    %1072 = vmatprep.subr.bf16.mxu0 0
    %1073 = vmatpush2.bf16.msra.mxu0 0
    %1074 = vmatprep.subr.bf16.mxu0 0
    %1075 = vmatpush2.bf16.msra.mxu0 0
    %1076 = vmatprep.subr.bf16.mxu0 0
    %1077 = vmatpush2.bf16.msra.mxu0 0
    %1078 = vmatprep.mubr.bf16.mxu0 0
    %1079 = vmatmul.mubr.bf16.gmra.mxu0 %v1041
    %v1080 = vpop.f32.mrf.mxu0
    %v1081 = vadd.f32 0.0, %v1080
    %v1082 = vpop.f32.mrf.mxu0
    %v1083 = vpop.f32.mrf.mxu0
    %v1084 = vpop.f32.mrf.mxu0
    %1085 = vdwg.mxu0
    %v1086 = vpack.c.bf16 %v1033, %v1033
    %v1087 = vpack.c.bf16 %v1081, %v1081
    %1088 = vrot.lane.b32.xlu0 %v419, 104
    %v1089 = vpop.permute.xlu0 %1088
    %1090 = vrot.lane.b32.xlu0 %v424, 104
    %v1091 = vpop.permute.xlu0 %1090
    %v1093 = vsel %vm428, %v1089, 0
    %v1096 = vsel %vm428, %v1091, 0
    %1098 = vmatprep.subr.bf16.mxu0 0
    %1099 = vmatpush1.bf16.xpose.msra.mxu0 0
    %1100 = vmatprep.subr.bf16.mxu0 0
    %1101 = vmatpush1.bf16.xpose.msra.mxu0 0
    %1102 = vmatprep.subr.bf16.mxu0 0
    %1103 = vmatpush1.bf16.xpose.msra.mxu0 0
    %1104 = vmatprep.subr.bf16.mxu0 0
    %1105 = vmatpush1.bf16.xpose.msra.mxu0 0
    %1106 = vmatprep.subr.bf16.mxu0 0
    %1107 = vmatpush1.bf16.xpose.msra.mxu0 0
    %1108 = vmatprep.subr.bf16.mxu0 0
    %1109 = vmatpush1.bf16.xpose.msra.mxu0 0
    %1110 = vmatprep.subr.bf16.mxu0 0
    %1111 = vmatpush1.bf16.xpose.msra.mxu0 0
    %1112 = vmatprep.subr.bf16.mxu0 0
    %1113 = vmatpush1.bf16.xpose.msra.mxu0 %v1096
    %1114 = vmatprep.subr.bf16.mxu0 0
    %1115 = vmatpush2.bf16.xpose.msra.mxu0 0
    %1116 = vmatprep.subr.bf16.mxu0 0
    %1117 = vmatpush2.bf16.xpose.msra.mxu0 0
    %1118 = vmatprep.subr.bf16.mxu0 0
    %1119 = vmatpush2.bf16.xpose.msra.mxu0 0
    %1120 = vmatprep.subr.bf16.mxu0 0
    %1121 = vmatpush2.bf16.xpose.msra.mxu0 0
    %1122 = vmatprep.subr.bf16.mxu0 0
    %1123 = vmatpush2.bf16.xpose.msra.mxu0 0
    %1124 = vmatprep.subr.bf16.mxu0 0
    %1125 = vmatpush2.bf16.xpose.msra.mxu0 0
    %1126 = vmatprep.subr.bf16.mxu0 0
    %1127 = vmatpush2.bf16.xpose.msra.mxu0 0
    %1128 = vmatprep.subr.bf16.mxu0 0
    %1129 = vmatpush2.bf16.xpose.msra.mxu0 0
    %1130 = vmatprep.mubr.bf16.mxu0 0
    %1131 = vmatmul.mubr.bf16.gmra.mxu0 %v1093
    %v1132 = vpop.f32.mrf.mxu0
    %v1133 = vadd.f32 %v427, %v1132
    %v1134 = vpop.f32.mrf.mxu0
    %v1135 = vpop.f32.mrf.mxu0
    %v1136 = vpop.f32.mrf.mxu0
    %1137 = vdwg.mxu0
    %1138 = vrot.lane.b32.xlu0 %v420, 104
    %v1139 = vpop.permute.xlu0 %1138
    %1140 = vrot.lane.b32.xlu0 %v425, 104
    %v1141 = vpop.permute.xlu0 %1140
    %v1143 = vsel %vm428, %v1139, 0
    %v1146 = vsel %vm428, %v1141, 0
    %1148 = vmatprep.subr.bf16.mxu0 0
    %1149 = vmatpush1.bf16.xpose.msra.mxu0 0
    %1150 = vmatprep.subr.bf16.mxu0 0
    %1151 = vmatpush1.bf16.xpose.msra.mxu0 0
    %1152 = vmatprep.subr.bf16.mxu0 0
    %1153 = vmatpush1.bf16.xpose.msra.mxu0 0
    %1154 = vmatprep.subr.bf16.mxu0 0
    %1155 = vmatpush1.bf16.xpose.msra.mxu0 0
    %1156 = vmatprep.subr.bf16.mxu0 0
    %1157 = vmatpush1.bf16.xpose.msra.mxu0 0
    %1158 = vmatprep.subr.bf16.mxu0 0
    %1159 = vmatpush1.bf16.xpose.msra.mxu0 0
    %1160 = vmatprep.subr.bf16.mxu0 0
    %1161 = vmatpush1.bf16.xpose.msra.mxu0 0
    %1162 = vmatprep.subr.bf16.mxu0 0
    %1163 = vmatpush1.bf16.xpose.msra.mxu0 %v1146
    %1164 = vmatprep.subr.bf16.mxu0 0
    %1165 = vmatpush2.bf16.xpose.msra.mxu0 0
    %1166 = vmatprep.subr.bf16.mxu0 0
    %1167 = vmatpush2.bf16.xpose.msra.mxu0 0
    %1168 = vmatprep.subr.bf16.mxu0 0
    %1169 = vmatpush2.bf16.xpose.msra.mxu0 0
    %1170 = vmatprep.subr.bf16.mxu0 0
    %1171 = vmatpush2.bf16.xpose.msra.mxu0 0
    %1172 = vmatprep.subr.bf16.mxu0 0
    %1173 = vmatpush2.bf16.xpose.msra.mxu0 0
    %1174 = vmatprep.subr.bf16.mxu0 0
    %1175 = vmatpush2.bf16.xpose.msra.mxu0 0
    %1176 = vmatprep.subr.bf16.mxu0 0
    %1177 = vmatpush2.bf16.xpose.msra.mxu0 0
    %1178 = vmatprep.subr.bf16.mxu0 0
    %1179 = vmatpush2.bf16.xpose.msra.mxu0 0
    %1180 = vmatprep.mubr.bf16.mxu0 0
    %1181 = vmatmul.mubr.bf16.gmra.mxu0 %v1143
    %v1182 = vpop.f32.mrf.mxu0
    %v1183 = vadd.f32 %v427, %v1182
    %v1184 = vpop.f32.mrf.mxu0
    %v1185 = vpop.f32.mrf.mxu0
    %v1186 = vpop.f32.mrf.mxu0
    %1187 = vdwg.mxu0
    %v1188 = vsel %vm428, %v1133, -inf
    %1189 = vmax.xlane.f32.xlu0 %v1188
    %v1190 = vpop.xlane.xlu0 %1189
    %v1191 = vsel %vm428, %v1183, -inf
    %1192 = vmax.xlane.f32.xlu0 %v1191
    %v1193 = vpop.xlane.xlu0 %1192
    %v1194 = vsub.f32 %v1133, %v1190
    %v1195 = vsub.f32 %v1183, %v1193
    %v1196 = vmul.f32 %v1194, 1.442695
    %v1197 = vpow.pop %v1196
    %v1198 = vmul.f32 %v1195, 1.442695
    %v1199 = vpow.pop %v1198
    %v1200 = vsel %vm428, %v1197, 0.0
    %1201 = vadd.xlane.f32.xlu0 %v1200
    %v1202 = vpop.xlane.xlu0 %1201
    %v1203 = vsel %vm428, %v1199, 0.0
    %1204 = vadd.xlane.f32.xlu0 %v1203
    %v1205 = vpop.xlane.xlu0 %1204
    %v1206 = vrcp.pop %v1202
    %v1207 = vrcp.pop %v1205
    %v1208 = vmul.f32 %v1197, %v1206
    %v1209 = vmul.f32 %v1199, %v1207
    %v1210 = vpack.c.bf16 %v1208, %v1208
    %v1211 = vpack.c.bf16 %v1209, %v1209
    %1212 = vrot.lane.b32.xlu0 %v424, 72
    %v1213 = vpop.permute.xlu0 %1212
    %v1215 = vsel %vm428, %v1210, 0
    %v1218 = vsel %vm550, %v1213, 0
    %1220 = vmatprep.subr.bf16.mxu0 0
    %1221 = vmatpush1.bf16.msra.mxu0 0
    %1222 = vmatprep.subr.bf16.mxu0 0
    %1223 = vmatpush1.bf16.msra.mxu0 0
    %1224 = vmatprep.subr.bf16.mxu0 0
    %1225 = vmatpush1.bf16.msra.mxu0 0
    %1226 = vmatprep.subr.bf16.mxu0 0
    %1227 = vmatpush1.bf16.msra.mxu0 0
    %1228 = vmatprep.subr.bf16.mxu0 0
    %1229 = vmatpush1.bf16.msra.mxu0 0
    %1230 = vmatprep.subr.bf16.mxu0 0
    %1231 = vmatpush1.bf16.msra.mxu0 0
    %1232 = vmatprep.subr.bf16.mxu0 0
    %1233 = vmatpush1.bf16.msra.mxu0 0
    %1234 = vmatprep.subr.bf16.mxu0 0
    %1235 = vmatpush1.bf16.msra.mxu0 %v1218
    %1236 = vmatprep.subr.bf16.mxu0 0
    %1237 = vmatpush2.bf16.msra.mxu0 0
    %1238 = vmatprep.subr.bf16.mxu0 0
    %1239 = vmatpush2.bf16.msra.mxu0 0
    %1240 = vmatprep.subr.bf16.mxu0 0
    %1241 = vmatpush2.bf16.msra.mxu0 0
    %1242 = vmatprep.subr.bf16.mxu0 0
    %1243 = vmatpush2.bf16.msra.mxu0 0
    %1244 = vmatprep.subr.bf16.mxu0 0
    %1245 = vmatpush2.bf16.msra.mxu0 0
    %1246 = vmatprep.subr.bf16.mxu0 0
    %1247 = vmatpush2.bf16.msra.mxu0 0
    %1248 = vmatprep.subr.bf16.mxu0 0
    %1249 = vmatpush2.bf16.msra.mxu0 0
    %1250 = vmatprep.subr.bf16.mxu0 0
    %1251 = vmatpush2.bf16.msra.mxu0 0
    %1252 = vmatprep.mubr.bf16.mxu0 0
    %1253 = vmatmul.mubr.bf16.gmra.mxu0 %v1215
    %v1254 = vpop.f32.mrf.mxu0
    %v1255 = vadd.f32 0.0, %v1254
    %v1256 = vpop.f32.mrf.mxu0
    %v1257 = vpop.f32.mrf.mxu0
    %v1258 = vpop.f32.mrf.mxu0
    %1259 = vdwg.mxu0
    %1260 = vrot.lane.b32.xlu0 %v425, 72
    %v1261 = vpop.permute.xlu0 %1260
    %v1263 = vsel %vm428, %v1211, 0
    %v1266 = vsel %vm550, %v1261, 0
    %1268 = vmatprep.subr.bf16.mxu0 0
    %1269 = vmatpush1.bf16.msra.mxu0 0
    %1270 = vmatprep.subr.bf16.mxu0 0
    %1271 = vmatpush1.bf16.msra.mxu0 0
    %1272 = vmatprep.subr.bf16.mxu0 0
    %1273 = vmatpush1.bf16.msra.mxu0 0
    %1274 = vmatprep.subr.bf16.mxu0 0
    %1275 = vmatpush1.bf16.msra.mxu0 0
    %1276 = vmatprep.subr.bf16.mxu0 0
    %1277 = vmatpush1.bf16.msra.mxu0 0
    %1278 = vmatprep.subr.bf16.mxu0 0
    %1279 = vmatpush1.bf16.msra.mxu0 0
    %1280 = vmatprep.subr.bf16.mxu0 0
    %1281 = vmatpush1.bf16.msra.mxu0 0
    %1282 = vmatprep.subr.bf16.mxu0 0
    %1283 = vmatpush1.bf16.msra.mxu0 %v1266
    %1284 = vmatprep.subr.bf16.mxu0 0
    %1285 = vmatpush2.bf16.msra.mxu0 0
    %1286 = vmatprep.subr.bf16.mxu0 0
    %1287 = vmatpush2.bf16.msra.mxu0 0
    %1288 = vmatprep.subr.bf16.mxu0 0
    %1289 = vmatpush2.bf16.msra.mxu0 0
    %1290 = vmatprep.subr.bf16.mxu0 0
    %1291 = vmatpush2.bf16.msra.mxu0 0
    %1292 = vmatprep.subr.bf16.mxu0 0
    %1293 = vmatpush2.bf16.msra.mxu0 0
    %1294 = vmatprep.subr.bf16.mxu0 0
    %1295 = vmatpush2.bf16.msra.mxu0 0
    %1296 = vmatprep.subr.bf16.mxu0 0
    %1297 = vmatpush2.bf16.msra.mxu0 0
    %1298 = vmatprep.subr.bf16.mxu0 0
    %1299 = vmatpush2.bf16.msra.mxu0 0
    %1300 = vmatprep.mubr.bf16.mxu0 0
    %1301 = vmatmul.mubr.bf16.gmra.mxu0 %v1263
    %v1302 = vpop.f32.mrf.mxu0
    %v1303 = vadd.f32 0.0, %v1302
    %v1304 = vpop.f32.mrf.mxu0
    %v1305 = vpop.f32.mrf.mxu0
    %v1306 = vpop.f32.mrf.mxu0
    %1307 = vdwg.mxu0
    %v1308 = vpack.c.bf16 %v1255, %v1255
    %v1309 = vpack.c.bf16 %v1303, %v1303
    %1312 = vrot.lane.b32.xlu0 %v864, 8
    %v1313 = vpop.permute.xlu0 %1312
    %1314 = vrot.lane.b32.xlu0 %v865, 8
    %v1315 = vpop.permute.xlu0 %1314
    %1318 = vrot.lane.b32.xlu0 %v1086, 16
    %v1319 = vpop.permute.xlu0 %1318
    %1320 = vrot.lane.b32.xlu0 %v1087, 16
    %v1321 = vpop.permute.xlu0 %1320
    %1324 = vrot.lane.b32.xlu0 %v1308, 24
    %v1325 = vpop.permute.xlu0 %1324
    %1326 = vrot.lane.b32.xlu0 %v1309, 24
    %v1327 = vpop.permute.xlu0 %1326
    %v1330 = vsel %vm428, %v642, %v1313
    %v1333 = vsel %vm428, %v643, %v1315
    %vm1334 = vcmask 130048
    %v1336 = vsel %vm1334, %v1330, %v1319
    %v1338 = vsel %vm1334, %v1333, %v1321
    %vm1339 = vcmask 195584
    %v1341 = vsel %vm1339, %v1336, %v1325
    %v1343 = vsel %vm1339, %v1338, %v1327
    %v1344 = vld [vmem:[%s8] sm:$0xf]
    %v1345 = vld [vmem:[%s8 + $0x4] sm:$0xf]
    %v1346 = vld [vmem:[%s8 + $0x8] sm:$0xf]
    %v1347 = vld [vmem:[%s8 + $0xc] sm:$0xf]
    %v1348 = vld [vmem:[%s9] sm:$0x1]
    %v1350 = vlaneseq
    %v1351 = vshrl.u32 %v1350, 7
    %v1352 = vsub.s32 0, %v1351
    %v1353 = vrot.slane %v1348, %v1352
    %v1357 = vunpack.c.l.b16 %v1341
    %v1358 = vunpack.c.l.b16 %v1343
    %v1359 = vpack.c.b16 %v1358, %v1357
    %v1364 = vunpack.c.l.b16 %v1344
    %v1365 = vunpack.c.l.b16 %v1345
    %v1366 = vunpack.c.l.b16 %v1346
    %v1367 = vunpack.c.l.b16 %v1347
    %v1368 = vpack.c.b16 %v1365, %v1364
    %v1369 = vpack.c.b16 %v1367, %v1366
    %v1373 = vsel %vm229, %v1359, 0
    %1375 = vmatprep.subr.bf16.mxu0 0
    %1376 = vmatpush1.bf16.msra.mxu0 0
    %1377 = vmatprep.subr.bf16.mxu0 0
    %1378 = vmatpush1.bf16.msra.mxu0 0
    %1379 = vmatprep.subr.bf16.mxu0 0
    %1380 = vmatpush1.bf16.msra.mxu0 0
    %1381 = vmatprep.subr.bf16.mxu0 0
    %1382 = vmatpush1.bf16.msra.mxu0 0
    %1383 = vmatprep.subr.bf16.mxu0 0
    %1384 = vmatpush1.bf16.msra.mxu0 0
    %1385 = vmatprep.subr.bf16.mxu0 0
    %1386 = vmatpush1.bf16.msra.mxu0 0
    %1387 = vmatprep.subr.bf16.mxu0 0
    %1388 = vmatpush1.bf16.msra.mxu0 %v1369
    %1389 = vmatprep.subr.bf16.mxu0 0
    %1390 = vmatpush1.bf16.msra.mxu0 %v1368
    %1391 = vmatprep.subr.bf16.mxu0 0
    %1392 = vmatpush2.bf16.msra.mxu0 0
    %1393 = vmatprep.subr.bf16.mxu0 0
    %1394 = vmatpush2.bf16.msra.mxu0 0
    %1395 = vmatprep.subr.bf16.mxu0 0
    %1396 = vmatpush2.bf16.msra.mxu0 0
    %1397 = vmatprep.subr.bf16.mxu0 0
    %1398 = vmatpush2.bf16.msra.mxu0 0
    %1399 = vmatprep.subr.bf16.mxu0 0
    %1400 = vmatpush2.bf16.msra.mxu0 0
    %1401 = vmatprep.subr.bf16.mxu0 0
    %1402 = vmatpush2.bf16.msra.mxu0 0
    %1403 = vmatprep.subr.bf16.mxu0 0
    %1404 = vmatpush2.bf16.msra.mxu0 0
    %1405 = vmatprep.subr.bf16.mxu0 0
    %1406 = vmatpush2.bf16.msra.mxu0 0
    %1407 = vmatprep.mubr.bf16.mxu0 0
    %1408 = vmatmul.mubr.bf16.gmra.mxu0 %v1373
    %v1409 = vpop.f32.mrf.mxu0
    %v1410 = vadd.f32 %v1353, %v1409
    %v1411 = vpop.f32.mrf.mxu0
    %v1412 = vpop.f32.mrf.mxu0
    %v1413 = vadd.f32 %v1353, %v1412
    %v1414 = vpop.f32.mrf.mxu0
    %1415 = vdwg.mxu0
    %v1416 = vadd.f32 %v268, %v1410
    %v1417 = vadd.f32 %v271, %v1413
    %v1418 = vld [vmem:[%s10] sm:$0x1]
    %v1419 = vld [vmem:[%s11] sm:$0x1]
    %v1420 = vsel %vm229, %v1416, 0.0
    %1421 = vadd.xlane.f32.xlu0 %v1420
    %v1422 = vpop.xlane.xlu0 %1421
    %v1423 = vsel %vm229, %v1417, 0.0
    %1424 = vadd.xlane.f32.xlu0 %v1423
    %v1425 = vpop.xlane.xlu0 %1424
    %v1426 = vrcp.pop 32.0
    %v1427 = vmul.f32 %v1422, %v1426
    %v1428 = vmul.f32 %v1425, %v1426
    %v1429 = vsub.f32 %v1416, %v1427
    %v1430 = vsub.f32 %v1417, %v1428
    %v1431 = vmul.f32 %v1429, %v1429
    %v1432 = vmul.f32 %v1430, %v1430
    %v1433 = vsel %vm229, %v1431, 0.0
    %1434 = vadd.xlane.f32.xlu0 %v1433
    %v1435 = vpop.xlane.xlu0 %1434
    %v1436 = vsel %vm229, %v1432, 0.0
    %1437 = vadd.xlane.f32.xlu0 %v1436
    %v1438 = vpop.xlane.xlu0 %1437
    %v1439 = vmul.f32 %v1435, %v1426
    %v1440 = vmul.f32 %v1438, %v1426
    %v1441 = vadd.f32 %v1439, 1e-05
    %v1442 = vadd.f32 %v1440, 1e-05
    %v1443 = vrsqrt.pop %v1441
    %v1444 = vrsqrt.pop %v1442
    %v1445 = vmul.f32 %v1429, %v1443
    %v1446 = vmul.f32 %v1430, %v1444
    %v1448 = vlaneseq
    %v1449 = vshrl.u32 %v1448, 7
    %v1450 = vsub.s32 0, %v1449
    %v1451 = vrot.slane %v1418, %v1450
    %v1453 = vmul.f32 %v1445, %v1451
    %v1454 = vmul.f32 %v1446, %v1451
    %v1456 = vlaneseq
    %v1457 = vshrl.u32 %v1456, 7
    %v1458 = vsub.s32 0, %v1457
    %v1459 = vrot.slane %v1419, %v1458
    %v1461 = vadd.f32 %v1453, %v1459
    %v1462 = vadd.f32 %v1454, %v1459
    %v1463 = vpack.c.bf16 %v1462, %v1461
    %v1464 = vld [vmem:[#allocation17] sm:$0xf]
    %v1465 = vld [vmem:[#allocation17 + $0x4] sm:$0xf]
    %v1466 = vld [vmem:[#allocation17 + $0x8] sm:$0xf]
    %v1467 = vld [vmem:[#allocation17 + $0xc] sm:$0xf]
    %v1468 = vld [vmem:[%s13] sm:$0x1]
    %v1470 = vlaneseq
    %v1471 = vshrl.u32 %v1470, 7
    %v1472 = vsub.s32 0, %v1471
    %v1473 = vrot.slane %v1468, %v1472
    %v1479 = vunpack.c.l.b16 %v1464
    %v1480 = vunpack.c.l.b16 %v1465
    %v1481 = vunpack.c.l.b16 %v1466
    %v1482 = vunpack.c.l.b16 %v1467
    %v1483 = vpack.c.b16 %v1480, %v1479
    %v1484 = vpack.c.b16 %v1482, %v1481
    %v1488 = vsel %vm229, %v1463, 0
    %1490 = vmatprep.subr.bf16.mxu0 0
    %1491 = vmatpush1.bf16.msra.mxu0 0
    %1492 = vmatprep.subr.bf16.mxu0 0
    %1493 = vmatpush1.bf16.msra.mxu0 0
    %1494 = vmatprep.subr.bf16.mxu0 0
    %1495 = vmatpush1.bf16.msra.mxu0 0
    %1496 = vmatprep.subr.bf16.mxu0 0
    %1497 = vmatpush1.bf16.msra.mxu0 0
    %1498 = vmatprep.subr.bf16.mxu0 0
    %1499 = vmatpush1.bf16.msra.mxu0 0
    %1500 = vmatprep.subr.bf16.mxu0 0
    %1501 = vmatpush1.bf16.msra.mxu0 0
    %1502 = vmatprep.subr.bf16.mxu0 0
    %1503 = vmatpush1.bf16.msra.mxu0 %v1484
    %1504 = vmatprep.subr.bf16.mxu0 0
    %1505 = vmatpush1.bf16.msra.mxu0 %v1483
    %1506 = vmatprep.subr.bf16.mxu0 0
    %1507 = vmatpush2.bf16.msra.mxu0 0
    %1508 = vmatprep.subr.bf16.mxu0 0
    %1509 = vmatpush2.bf16.msra.mxu0 0
    %1510 = vmatprep.subr.bf16.mxu0 0
    %1511 = vmatpush2.bf16.msra.mxu0 0
    %1512 = vmatprep.subr.bf16.mxu0 0
    %1513 = vmatpush2.bf16.msra.mxu0 0
    %1514 = vmatprep.subr.bf16.mxu0 0
    %1515 = vmatpush2.bf16.msra.mxu0 0
    %1516 = vmatprep.subr.bf16.mxu0 0
    %1517 = vmatpush2.bf16.msra.mxu0 0
    %1518 = vmatprep.subr.bf16.mxu0 0
    %1519 = vmatpush2.bf16.msra.mxu0 0
    %1520 = vmatprep.subr.bf16.mxu0 0
    %1521 = vmatpush2.bf16.msra.mxu0 0
    %1522 = vmatprep.mubr.bf16.mxu0 0
    %1523 = vmatmul.mubr.bf16.gmra.mxu0 %v1488
    %v1524 = vpop.f32.mrf.mxu0
    %v1525 = vadd.f32 %v1473, %v1524
    %v1526 = vpop.f32.mrf.mxu0
    %v1527 = vpop.f32.mrf.mxu0
    %v1528 = vadd.f32 %v1473, %v1527
    %v1529 = vpop.f32.mrf.mxu0
    %1530 = vdwg.mxu0
    %v1531 = vmax.f32 %v1525, 0.0
    %v1532 = vmax.f32 %v1528, 0.0
    %v1533 = vpack.c.bf16 %v1532, %v1531
    %v1534 = vld [vmem:[#allocation18] sm:$0xf]
    %v1535 = vld [vmem:[#allocation18 + $0x4] sm:$0xf]
    %v1536 = vld [vmem:[#allocation18 + $0x8] sm:$0xf]
    %v1537 = vld [vmem:[#allocation18 + $0xc] sm:$0xf]
    %v1538 = vld [vmem:[%s15] sm:$0x1]
    %v1540 = vlaneseq
    %v1541 = vshrl.u32 %v1540, 7
    %v1542 = vsub.s32 0, %v1541
    %v1543 = vrot.slane %v1538, %v1542
    %v1549 = vunpack.c.l.b16 %v1534
    %v1550 = vunpack.c.l.b16 %v1535
    %v1551 = vunpack.c.l.b16 %v1536
    %v1552 = vunpack.c.l.b16 %v1537
    %v1553 = vpack.c.b16 %v1550, %v1549
    %v1554 = vpack.c.b16 %v1552, %v1551
    %v1558 = vsel %vm229, %v1533, 0
    %1560 = vmatprep.subr.bf16.mxu0 0
    %1561 = vmatpush1.bf16.msra.mxu0 0
    %1562 = vmatprep.subr.bf16.mxu0 0
    %1563 = vmatpush1.bf16.msra.mxu0 0
    %1564 = vmatprep.subr.bf16.mxu0 0
    %1565 = vmatpush1.bf16.msra.mxu0 0
    %1566 = vmatprep.subr.bf16.mxu0 0
    %1567 = vmatpush1.bf16.msra.mxu0 0
    %1568 = vmatprep.subr.bf16.mxu0 0
    %1569 = vmatpush1.bf16.msra.mxu0 0
    %1570 = vmatprep.subr.bf16.mxu0 0
    %1571 = vmatpush1.bf16.msra.mxu0 0
    %1572 = vmatprep.subr.bf16.mxu0 0
    %1573 = vmatpush1.bf16.msra.mxu0 %v1554
    %1574 = vmatprep.subr.bf16.mxu0 0
    %1575 = vmatpush1.bf16.msra.mxu0 %v1553
    %1576 = vmatprep.subr.bf16.mxu0 0
    %1577 = vmatpush2.bf16.msra.mxu0 0
    %1578 = vmatprep.subr.bf16.mxu0 0
    %1579 = vmatpush2.bf16.msra.mxu0 0
    %1580 = vmatprep.subr.bf16.mxu0 0
    %1581 = vmatpush2.bf16.msra.mxu0 0
    %1582 = vmatprep.subr.bf16.mxu0 0
    %1583 = vmatpush2.bf16.msra.mxu0 0
    %1584 = vmatprep.subr.bf16.mxu0 0
    %1585 = vmatpush2.bf16.msra.mxu0 0
    %1586 = vmatprep.subr.bf16.mxu0 0
    %1587 = vmatpush2.bf16.msra.mxu0 0
    %1588 = vmatprep.subr.bf16.mxu0 0
    %1589 = vmatpush2.bf16.msra.mxu0 0
    %1590 = vmatprep.subr.bf16.mxu0 0
    %1591 = vmatpush2.bf16.msra.mxu0 0
    %1592 = vmatprep.mubr.bf16.mxu0 0
    %1593 = vmatmul.mubr.bf16.gmra.mxu0 %v1558
    %v1594 = vpop.f32.mrf.mxu0
    %v1595 = vadd.f32 %v1543, %v1594
    %v1596 = vpop.f32.mrf.mxu0
    %v1597 = vpop.f32.mrf.mxu0
    %v1598 = vadd.f32 %v1543, %v1597
    %v1599 = vpop.f32.mrf.mxu0
    %1600 = vdwg.mxu0
    %v1601 = vadd.f32 %v1595, %v1461
    %v1602 = vadd.f32 %v1598, %v1462
    %v1603 = vld [vmem:[%s16] sm:$0x1]
    %v1604 = vld [vmem:[%s17] sm:$0x1]
    %v1605 = vsel %vm229, %v1601, 0.0
    %1606 = vadd.xlane.f32.xlu0 %v1605
    %v1607 = vpop.xlane.xlu0 %1606
    %v1608 = vsel %vm229, %v1602, 0.0
    %1609 = vadd.xlane.f32.xlu0 %v1608
    %v1610 = vpop.xlane.xlu0 %1609
    %v1611 = vmul.f32 %v1607, %v1426
    %v1612 = vmul.f32 %v1610, %v1426
    %v1613 = vsub.f32 %v1601, %v1611
    %v1614 = vsub.f32 %v1602, %v1612
    %v1615 = vmul.f32 %v1613, %v1613
    %v1616 = vmul.f32 %v1614, %v1614
    %v1617 = vsel %vm229, %v1615, 0.0
    %1618 = vadd.xlane.f32.xlu0 %v1617
    %v1619 = vpop.xlane.xlu0 %1618
    %v1620 = vsel %vm229, %v1616, 0.0
    %1621 = vadd.xlane.f32.xlu0 %v1620
    %v1622 = vpop.xlane.xlu0 %1621
    %v1623 = vmul.f32 %v1619, %v1426
    %v1624 = vmul.f32 %v1622, %v1426
    %v1625 = vadd.f32 %v1623, 1e-05
    %v1626 = vadd.f32 %v1624, 1e-05
    %v1627 = vrsqrt.pop %v1625
    %v1628 = vrsqrt.pop %v1626
    %v1629 = vmul.f32 %v1613, %v1627
    %v1630 = vmul.f32 %v1614, %v1628
    %v1632 = vlaneseq
    %v1633 = vshrl.u32 %v1632, 7
    %v1634 = vsub.s32 0, %v1633
    %v1635 = vrot.slane %v1603, %v1634
    %v1637 = vmul.f32 %v1629, %v1635
    %v1638 = vmul.f32 %v1630, %v1635
    %v1640 = vlaneseq
    %v1641 = vshrl.u32 %v1640, 7
    %v1642 = vsub.s32 0, %v1641
    %v1643 = vrot.slane %v1604, %v1642
    %v1645 = vadd.f32 %v1637, %v1643
    %v1646 = vadd.f32 %v1638, %v1643
    %v1647 = vld [vmem:[%s18] sm:$0x1]
    %v1648 = vpack.c.bf16 %v1646, %v1645
    %v1649 = vld [vmem:[#allocation2] sm:$0x1]
    %1651 = vset.pattern.permute.xlu0 0
    %1652 = vperm.xlu0 %1651, %v1649
    %v1653 = vpop.permute.xlu0 %1652
    %v1655 = vlaneseq
    %v1656 = vshrl.u32 %v1655, 7
    %v1657 = vsub.s32 0, %v1656
    %v1658 = vrot.slane %v1653, %v1657
    %v1660 = vsel %vm229, %v1647, 0
    %v1663 = vsel %vm229, %v1648, 0
    %1665 = vmatprep.subr.bf16.mxu0 0
    %1666 = vmatpush1.bf16.xpose.msra.mxu0 0
    %1667 = vmatprep.subr.bf16.mxu0 0
    %1668 = vmatpush1.bf16.xpose.msra.mxu0 0
    %1669 = vmatprep.subr.bf16.mxu0 0
    %1670 = vmatpush1.bf16.xpose.msra.mxu0 0
    %1671 = vmatprep.subr.bf16.mxu0 0
    %1672 = vmatpush1.bf16.xpose.msra.mxu0 0
    %1673 = vmatprep.subr.bf16.mxu0 0
    %1674 = vmatpush1.bf16.xpose.msra.mxu0 0
    %1675 = vmatprep.subr.bf16.mxu0 0
    %1676 = vmatpush1.bf16.xpose.msra.mxu0 0
    %1677 = vmatprep.subr.bf16.mxu0 0
    %1678 = vmatpush1.bf16.xpose.msra.mxu0 0
    %1679 = vmatprep.subr.bf16.mxu0 0
    %1680 = vmatpush1.bf16.xpose.msra.mxu0 %v1663
    %1681 = vmatprep.subr.bf16.mxu0 0
    %1682 = vmatpush2.bf16.xpose.msra.mxu0 0
    %1683 = vmatprep.subr.bf16.mxu0 0
    %1684 = vmatpush2.bf16.xpose.msra.mxu0 0
    %1685 = vmatprep.subr.bf16.mxu0 0
    %1686 = vmatpush2.bf16.xpose.msra.mxu0 0
    %1687 = vmatprep.subr.bf16.mxu0 0
    %1688 = vmatpush2.bf16.xpose.msra.mxu0 0
    %1689 = vmatprep.subr.bf16.mxu0 0
    %1690 = vmatpush2.bf16.xpose.msra.mxu0 0
    %1691 = vmatprep.subr.bf16.mxu0 0
    %1692 = vmatpush2.bf16.xpose.msra.mxu0 0
    %1693 = vmatprep.subr.bf16.mxu0 0
    %1694 = vmatpush2.bf16.xpose.msra.mxu0 0
    %1695 = vmatprep.subr.bf16.mxu0 0
    %1696 = vmatpush2.bf16.xpose.msra.mxu0 0
    %1697 = vmatprep.mubr.bf16.mxu0 0
    %1698 = vmatmul.mubr.bf16.gmra.mxu0 %v1660
    %v1699 = vpop.f32.mrf.mxu0
    %v1700 = vadd.f32 %v1658, %v1699
    %v1701 = vpop.f32.mrf.mxu0
    %v1702 = vpop.f32.mrf.mxu0
    %v1703 = vpop.f32.mrf.mxu0
    %1704 = vdwg.mxu0
    %v1705 = vxor.u32 %v1700, 2147483648
    %v1706 = vmul.f32 %v1705, 1.442695
    %v1707 = vpow.pop %v1706
    %v1708 = vadd.f32 %v1707, 1.0
    %v1709 = vrcp.pop %v1708
    %v1710 = vmul.f32 1.0, %v1709
    %vm1711 = vcmask 122880
    %1712 = vst.msk [vmem:[#allocation20] sm:$0x1] %vm1711, %v1710
    // Predicated region
    $region122: #{tpu_custom_call.1} parent=1 // pred_check
      _
    $region123: #{tpu_custom_call.1} parent=1 // pred_check_branch
      %1714 = sbr.rel (0) target = $region125
    $region124: #{tpu_custom_call.1} parent=1 // pred_region
      %s1716 = ssub.s32 16, 16
      %1717 = vsyncadd [#allocation5], %s1716
      %s1719 = sshll.u32 [#allocation20], 4
      %s1720 = int_to_ptr.vmem [resolvable:$true] %s1719
      %1722 = dma.vmem_to_hbm [thread:$0]  %s1720, 16, %s20, [#allocation5]
    $region125: #{tpu_custom_call.1} parent=1 // pred_fallthru
      _
    // Predicated region
    $region126: #{tpu_custom_call.1} parent=1 // pred_check
      _
    $region127: #{tpu_custom_call.1} parent=1 // pred_check_branch
      %1724 = sbr.rel (0) target = $region129
    $region128: #{tpu_custom_call.1} parent=1 // pred_region
      %1725 = dma.done [#allocation5], 16
    $region129: #{tpu_custom_call.1} parent=1 // pred_fallthru
      _
    %1726 = vsyncpa [#allocation4], 1
    %1727 = vsyncpa [#allocation7], 1
    %1728 = vsyncpa [#allocation10], 1
    %1729 = vsyncpa [#allocation13], 1
    %1730 = vsyncpa [#allocation16], 1
    %1731 = vsyncpa [#allocation19], 1
    %1732 = vsyncpa [#allocation5], 1

</llo_original>
